<compile_context>
chip_gen: v7x
topology: tpu7x:2x2x1
jax: 0.10.0
libtpu: 0.0.40
codegen_flags: <defaults>
</compile_context>

<pallas_src>
import functools

import jax
import jax.numpy as jnp
from jax.experimental import pallas as pl
from jax.experimental.pallas import tpu as pltpu

LANE = 128


def _round_up(x, m):
    return (x + m - 1) // m * m


def _choose_batch_tile(b):
    """Largest sublane-aligned batch tile that still yields >= 2 grid steps."""
    for tb in (128, 64, 32, 16, 8):
        if b % tb == 0 and b // tb >= 2:
            return tb
    return b  # tiny batches: one full-batch tile (full-dim exemption on (8,128) rule)


# ----------------------------------------------------------------------------
# Fused kernel: backbone stand-in (conv-as-matmul + ReLU + GAP) ->
# ChannelAttention1D -> MLP head.  One batch tile (TB images) per grid step.
#
#   pg_ref  : (TB*P/G, G*K)  grouped im2col patches for the batch tile (bf16)
#   wblk_ref: (G*K, G*F)     block-diagonal flattened conv weights (bf16)
#   wa1_ref : (F, 128)       attention fc1, bottleneck zero-padded to 128 (bf16)
#   wa2_ref : (128, F)       attention fc2, padded rows are zero (bf16)
#   w1_ref  : (F, 1024)      head linear1 with BN folded in (bf16)
#   b1_ref  : (1, 1024)      head bias1 with BN folded in (f32)
#   w2_ref  : (1024, 128)    head linear2 (bf16)
#   b2_ref  : (1, 128)       head bias2 (f32)
#   w3_ref  : (128, 128)     head linear3, output dim zero-padded to 128 (bf16)
#   b3_ref  : (1, 128)       head bias3, zero-padded (f32)
#   out_ref : (TB, 128)      padded logits (f32); sliced to output_size outside
# ----------------------------------------------------------------------------
def cnn_attention_kernel(pg_ref, wblk_ref, wa1_ref, wa2_ref,
                         w1_ref, b1_ref, w2_ref, b2_ref, w3_ref, b3_ref,
                         out_ref, *, tb, p, group, feat_dim, inv_p):
    gf = group * feat_dim

    # Backbone stand-in: conv as one grouped matmul over the batch tile, ReLU,
    # then per-image global average pool (leading-axis-split reshape + sum, plus
    # a fold of the G lane groups — no selection matmul, no extra VMEM stream).
    conv = jnp.dot(pg_ref[...], wblk_ref[...],
                   preferred_element_type=jnp.float32)            # (TB*P/G, G*F)
    conv = jnp.maximum(conv, 0.0)                                 # ReLU
    pooled = jnp.sum(conv.reshape(tb, p // group, gf), axis=1)    # (TB, G*F)
    feat = pooled[:, 0:feat_dim]
    for g in range(1, group):                                     # fold lane groups
        feat = feat + pooled[:, g * feat_dim:(g + 1) * feat_dim]
    feat = feat * inv_p                                           # (TB, F) GAP, f32

    # ChannelAttention1D: Linear(F->F/r, no bias) -> ReLU -> Linear(F/r->F) -> Sigmoid
    # (bottleneck padded to 128 lanes; exact because ReLU(0)=0, padded wa2 rows = 0).
    a = jnp.maximum(
        jnp.dot(feat.astype(jnp.bfloat16), wa1_ref[...],
                preferred_element_type=jnp.float32), 0.0)         # (TB, 128)
    gate = jax.nn.sigmoid(
        jnp.dot(a.astype(jnp.bfloat16), wa2_ref[...],
                preferred_element_type=jnp.float32))              # (TB, F)
    attended = feat * gate                                        # x * fc(x), f32

    # Head: Flatten (no-op) -> Linear(F,1024) [BatchNorm1d(eval) folded] -> ReLU
    h = jnp.dot(attended.astype(jnp.bfloat16), w1_ref[...],
                preferred_element_type=jnp.float32) + b1_ref[...]
    h = jnp.maximum(h, 0.0)
    # Dropout(0.5): identity in eval mode.
    # Linear(1024,128) -> ReLU
    h = jnp.maximum(
        jnp.dot(h.astype(jnp.bfloat16), w2_ref[...],
                preferred_element_type=jnp.float32) + b2_ref[...], 0.0)
    # Linear(128, output_size), padded to 128 lanes for an unmasked store.
    out_ref[...] = jnp.dot(h.astype(jnp.bfloat16), w3_ref[...],
                           preferred_element_type=jnp.float32) + b3_ref[...]


# ----------------------------------------------------------------------------
# Wrapper
# ----------------------------------------------------------------------------
def cnn_attention_forward(params, x_nchw, *, batch_tile=None):
    # TODO(synk): pretrained EfficientNet-b3 backbone is not translatable; it is
    #             replaced by a deterministic 3x3-conv + ReLU + GAP stand-in.
    x = jnp.transpose(x_nchw, (0, 2, 3, 1))                       # NCHW -> NHWC
    B, H, W, C = x.shape
    conv_w = params["conv_w"]
    KH, KW, _, F = conv_w.shape
    Ho, Wo = H - KH + 1, W - KW + 1
    P = Ho * Wo
    K = KH * KW * C

    # im2col (plain JAX glue): (B*P, K).
    cols = []
    for i in range(KH):
        for j in range(KW):
            cols.append(x[:, i:i + Ho, j:j + Wo, :])
    patches = jnp.stack(cols, axis=3).reshape(B * P, K)

    # Pack G adjacent patches per matmul row so the contraction depth grows from
    # K=27 towards 128 and the patch stream's VMEM lane padding shrinks.  Exact:
    # the conv weight becomes block-diagonal with zeros elsewhere.
    G = max(1, LANE // K)
    while G > 1 and P % G != 0:
        G -= 1
    pg = patches.reshape(B * P // G, G * K).astype(jnp.bfloat16)
    wflat = conv_w.reshape(K, F)
    wblk = jnp.zeros((G * K, G * F), jnp.float32)
    for g in range(G):
        wblk = wblk.at[g * K:(g + 1) * K, g * F:(g + 1) * F].set(wflat)
    wblk = wblk.astype(jnp.bfloat16)

    # Batch tiling: sublane-aligned, >= 2 grid steps when possible (megacore on v7x).
    TB = batch_tile if batch_tile is not None else _choose_batch_tile(B)
    assert B % TB == 0, "batch must be divisible by the batch tile"
    assert TB == B or TB % 8 == 0, "batch tile must be a multiple of 8 (sublane aligned)"
    n_tiles = B // TB

    # ChannelAttention1D weights, bottleneck padded up to a full 128-lane tile.
    fr = params["wa1"].shape[1]
    FRP = _round_up(fr, LANE)
    wa1p = jnp.zeros((F, FRP), jnp.float32).at[:, :fr].set(params["wa1"]).astype(jnp.bfloat16)
    wa2p = jnp.zeros((FRP, F), jnp.float32).at[:fr, :].set(params["wa2"]).astype(jnp.bfloat16)

    # Fold eval-mode BatchNorm1d(1024) into the first head linear.
    bn_scale = params["bn_gamma"] * jax.lax.rsqrt(params["bn_var"] + 1e-5)
    w1f = (params["w1"] * bn_scale).astype(jnp.bfloat16)
    b1f = (params["b1"] - params["bn_mean"]) * bn_scale + params["bn_beta"]

    # Lane-dense output: pad the final linear to 128 output columns.
    out_size = params["w3"].shape[1]
    n_out = _round_up(out_size, LANE)
    w3p = jnp.zeros((params["w3"].shape[0], n_out), jnp.float32)
    w3p = w3p.at[:, :out_size].set(params["w3"]).astype(jnp.bfloat16)
    b3p = jnp.zeros((1, n_out), jnp.float32).at[:, :out_size].set(params["b3"])

    w2 = params["w2"].astype(jnp.bfloat16)
    b2 = params["b2"]
    H1 = w1f.shape[1]
    H2 = w2.shape[1]

    def const_spec(shape):
        # Constant-index weights stay resident; single-buffer them (their block index
        # never changes, so double-buffering would only double their VMEM footprint).
        return pl.BlockSpec(shape, lambda i: (0, 0), pipeline_mode=pl.Buffered(1))

    kernel = functools.partial(cnn_attention_kernel, tb=TB, p=P, group=G,
                               feat_dim=F, inv_p=1.0 / float(P))

    out_padded = pl.pallas_call(
        kernel,
        out_shape=jax.ShapeDtypeStruct((B, n_out), jnp.float32),
        grid=(n_tiles,),
        in_specs=[
            pl.BlockSpec((TB * P // G, G * K), lambda i: (i, 0)),  # patches (batch-tiled)
            const_spec((G * K, G * F)),      # block-diag conv weights
            const_spec((F, FRP)),            # attention fc1 (padded bottleneck)
            const_spec((FRP, F)),            # attention fc2 (padded bottleneck)
            const_spec((F, H1)),             # head w1 (BN folded)
            const_spec((1, H1)),             # head b1 (BN folded)
            const_spec((H1, H2)),            # head w2
            const_spec((1, H2)),             # head b2
            const_spec((H2, n_out)),         # head w3 (padded)
            const_spec((1, n_out)),          # head b3 (padded)
        ],
        out_specs=pl.BlockSpec((TB, n_out), lambda i: (i, 0)),
        compiler_params=pltpu.CompilerParams(
            dimension_semantics=("parallel",),
            # <= ~48 MiB: fits v7x's 64 MiB VMEM with headroom for the double-buffered
            # patch stream; v5e/v6e (128 MiB) can raise this with a larger batch_tile.
            vmem_limit_bytes=48 * 1024 * 1024,
        ),
    )(pg, wblk, wa1p, wa2p, w1f, b1f, w2, b2, w3p, b3p)

    return out_padded[:, :out_size]


# ----------------------------------------------------------------------------
# Pure-JAX reference (f32) for a correctness check.
# ----------------------------------------------------------------------------
def reference_forward(params, x_nchw):
    x = jnp.transpose(x_nchw, (0, 2, 3, 1))
    B, H, W, C = x.shape
    KH, KW, _, F = params["conv_w"].shape
    Ho, Wo = H - KH + 1, W - KW + 1
    cols = []
    for i in range(KH):
        for j in range(KW):
            cols.append(x[:, i:i + Ho, j:j + Wo, :])
    patches = jnp.stack(cols, axis=3).reshape(B, Ho * Wo, KH * KW * C)
    conv = jnp.maximum(patches @ params["conv_w"].reshape(KH * KW * C, F), 0.0)
    feat = conv.mean(axis=1)
    a = jnp.maximum(feat @ params["wa1"], 0.0)
    gate = jax.nn.sigmoid(a @ params["wa2"])
    attended = feat * gate
    h = attended @ params["w1"] + params["b1"]
    h = ((h - params["bn_mean"]) * params["bn_gamma"]
         * jax.lax.rsqrt(params["bn_var"] + 1e-5) + params["bn_beta"])
    h = jnp.maximum(h, 0.0)
    h = jnp.maximum(h @ params["w2"] + params["b2"], 0.0)
    return h @ params["w3"] + params["b3"]


# ----------------------------------------------------------------------------
# Deterministic parameter init (synthetic weights; shapes follow the module,
# with num_features scaled down from 1536 -> 128 to keep the example small but
# lane-dense).
# ----------------------------------------------------------------------------
def init_params(key, cin=3, num_features=128, reduction=16,
                hidden1=1024, hidden2=128, output_size=8):
    ks = jax.random.split(key, 6)

    def init_w(k, shape, fan_in):
        return jax.random.normal(k, shape, jnp.float32) * (1.0 / jnp.sqrt(fan_in))

    fr = num_features // reduction
    return {
        "conv_w":   init_w(ks[0], (3, 3, cin, num_features), 3 * 3 * cin),
        # ChannelAttention1D (bias=False linears)
        "wa1":      init_w(ks[1], (num_features, fr), num_features),
        "wa2":      init_w(ks[2], (fr, num_features), fr),
        # Head
        "w1":       init_w(ks[3], (num_features, hidden1), num_features),
        "b1":       jnp.zeros((1, hidden1), jnp.float32),
        "bn_gamma": jnp.ones((1, hidden1), jnp.float32),
        "bn_beta":  jnp.zeros((1, hidden1), jnp.float32),
        "bn_mean":  jnp.zeros((1, hidden1), jnp.float32),
        "bn_var":   jnp.ones((1, hidden1), jnp.float32),
        "w2":       init_w(ks[4], (hidden1, hidden2), hidden1),
        "b2":       jnp.zeros((1, hidden2), jnp.float32),
        "w3":       init_w(ks[5], (hidden2, output_size), hidden2),
        "b3":       jnp.zeros((1, output_size), jnp.float32),
    }


if __name__ == "__main__":
    key = jax.random.PRNGKey(0)
    k_x, k_p = jax.random.split(key)

    # 18x18 inputs -> 16x16 = 256 conv outputs per image (sublane-aligned pooling).
    B, C, H, W = 32, 3, 18, 18
    output_size = 8
    x = jax.random.normal(k_x, (B, C, H, W), jnp.float32)   # NCHW, like the module

    params = init_params(k_p, cin=C, num_features=128, reduction=16,
                         hidden1=1024, hidden2=128, output_size=output_size)

    y = cnn_attention_forward(params, x)                    # TB=16 -> grid=(2,)
    y = jax.block_until_ready(y)

    assert y.shape == (B, output_size), y.shape
    assert bool(jnp.all(jnp.isfinite(y)))

    y_ref = reference_forward(params, x)
    assert bool(jnp.allclose(y, y_ref, rtol=5e-2, atol=5e-2)), (
        float(jnp.max(jnp.abs(y - y_ref))))

    print("KERNEL_OK")
</pallas_src>

<mosaic_0001>
module attributes {stable_mosaic.version = 11 : i64} {
  func.func @cnn_attention_kernel(%arg0: i32, %arg1: memref<1024x108xbf16, #tpu.memory_space<vmem>>, %arg2: memref<108x512xbf16, #tpu.memory_space<vmem>>, %arg3: memref<128x128xbf16, #tpu.memory_space<vmem>>, %arg4: memref<128x128xbf16, #tpu.memory_space<vmem>>, %arg5: memref<128x1024xbf16, #tpu.memory_space<vmem>>, %arg6: memref<1x1024xf32, #tpu.memory_space<vmem>>, %arg7: memref<1024x128xbf16, #tpu.memory_space<vmem>>, %arg8: memref<1x128xf32, #tpu.memory_space<vmem>>, %arg9: memref<128x128xbf16, #tpu.memory_space<vmem>>, %arg10: memref<1x128xf32, #tpu.memory_space<vmem>>, %arg11: memref<16x128xf32, #tpu.memory_space<vmem>>) attributes {dimension_semantics = [#tpu.dimension_semantics<parallel>], iteration_bounds = array<i64: 2>, scalar_prefetch = 0 : i64, scratch_operands = 0 : i64, tpu.core_type = #tpu.core_type<tc>, window_params = [{transform_indices = @transform_0, window_bounds = array<i64: 1024, 108>}, {pipeline_mode = #tpu.pipeline_mode<synchronous>, transform_indices = @transform_1, window_bounds = array<i64: 108, 512>}, {pipeline_mode = #tpu.pipeline_mode<synchronous>, transform_indices = @transform_2, window_bounds = array<i64: 128, 128>}, {pipeline_mode = #tpu.pipeline_mode<synchronous>, transform_indices = @transform_3, window_bounds = array<i64: 128, 128>}, {pipeline_mode = #tpu.pipeline_mode<synchronous>, transform_indices = @transform_4, window_bounds = array<i64: 128, 1024>}, {pipeline_mode = #tpu.pipeline_mode<synchronous>, transform_indices = @transform_5, window_bounds = array<i64: 1, 1024>}, {pipeline_mode = #tpu.pipeline_mode<synchronous>, transform_indices = @transform_6, window_bounds = array<i64: 1024, 128>}, {pipeline_mode = #tpu.pipeline_mode<synchronous>, transform_indices = @transform_7, window_bounds = array<i64: 1, 128>}, {pipeline_mode = #tpu.pipeline_mode<synchronous>, transform_indices = @transform_8, window_bounds = array<i64: 128, 128>}, {pipeline_mode = #tpu.pipeline_mode<synchronous>, transform_indices = @transform_9, window_bounds = array<i64: 1, 128>}, {transform_indices = @transform_10, window_bounds = array<i64: 16, 128>}]} {
    %c0 = arith.constant 0 : index
    %c0_0 = arith.constant 0 : index
    %0 = vector.load %arg1[%c0, %c0_0] : memref<1024x108xbf16, #tpu.memory_space<vmem>>, vector<1024x108xbf16>
    %c0_1 = arith.constant 0 : index
    %c0_2 = arith.constant 0 : index
    %1 = vector.load %arg2[%c0_1, %c0_2] : memref<108x512xbf16, #tpu.memory_space<vmem>>, vector<108x512xbf16>
    %cst = arith.constant dense<0.000000e+00> : vector<1024x512xf32>
    %2 = tpu.matmul %0, %1, %cst {dimension_numbers = #tpu.dot_dimension_numbers<[1], [0], [0], [1], [0, 0, 1, 1], [], []>} : vector<1024x108xbf16>, vector<108x512xbf16>, vector<1024x512xf32> -> vector<1024x512xf32>
    %cst_3 = arith.constant 0.000000e+00 : f32
    %3 = vector.broadcast %cst_3 : f32 to vector<1024x512xf32>
    %4 = arith.maximumf %2, %3 : vector<1024x512xf32>
    %5 = vector.shape_cast %4 : vector<1024x512xf32> to vector<16x64x512xf32>
    %cst_4 = arith.constant dense<0.000000e+00> : vector<16x512xf32>
    %6 = vector.multi_reduction <add>, %5, %cst_4 [1] : vector<16x64x512xf32> to vector<16x512xf32>
    %7 = vector.extract_strided_slice %6 {offsets = [0, 0], sizes = [16, 128], strides = [1, 1]} : vector<16x512xf32> to vector<16x128xf32>
    %8 = vector.extract_strided_slice %6 {offsets = [0, 128], sizes = [16, 128], strides = [1, 1]} : vector<16x512xf32> to vector<16x128xf32>
    %9 = arith.addf %7, %8 : vector<16x128xf32>
    %10 = vector.extract_strided_slice %6 {offsets = [0, 256], sizes = [16, 128], strides = [1, 1]} : vector<16x512xf32> to vector<16x128xf32>
    %11 = arith.addf %9, %10 : vector<16x128xf32>
    %12 = vector.extract_strided_slice %6 {offsets = [0, 384], sizes = [16, 128], strides = [1, 1]} : vector<16x512xf32> to vector<16x128xf32>
    %13 = arith.addf %11, %12 : vector<16x128xf32>
    %cst_5 = arith.constant 3.906250e-03 : f32
    %14 = vector.broadcast %cst_5 : f32 to vector<16x128xf32>
    %15 = arith.mulf %13, %14 : vector<16x128xf32>
    %16 = arith.truncf %15 : vector<16x128xf32> to vector<16x128xbf16>
    %c0_6 = arith.constant 0 : index
    %c0_7 = arith.constant 0 : index
    %17 = vector.load %arg3[%c0_6, %c0_7] : memref<128x128xbf16, #tpu.memory_space<vmem>>, vector<128x128xbf16>
    %cst_8 = arith.constant dense<0.000000e+00> : vector<16x128xf32>
    %18 = tpu.matmul %16, %17, %cst_8 {dimension_numbers = #tpu.dot_dimension_numbers<[1], [0], [0], [1], [0, 0, 1, 1], [], []>} : vector<16x128xbf16>, vector<128x128xbf16>, vector<16x128xf32> -> vector<16x128xf32>
    %cst_9 = arith.constant 0.000000e+00 : f32
    %19 = vector.broadcast %cst_9 : f32 to vector<16x128xf32>
    %20 = arith.maximumf %18, %19 : vector<16x128xf32>
    %21 = arith.truncf %20 : vector<16x128xf32> to vector<16x128xbf16>
    %c0_10 = arith.constant 0 : index
    %c0_11 = arith.constant 0 : index
    %22 = vector.load %arg4[%c0_10, %c0_11] : memref<128x128xbf16, #tpu.memory_space<vmem>>, vector<128x128xbf16>
    %cst_12 = arith.constant dense<0.000000e+00> : vector<16x128xf32>
    %23 = tpu.matmul %21, %22, %cst_12 {dimension_numbers = #tpu.dot_dimension_numbers<[1], [0], [0], [1], [0, 0, 1, 1], [], []>} : vector<16x128xbf16>, vector<128x128xbf16>, vector<16x128xf32> -> vector<16x128xf32>
    %24 = arith.negf %23 : vector<16x128xf32>
    %25 = math.exp %24 : vector<16x128xf32>
    %cst_13 = arith.constant 1.000000e+00 : f32
    %26 = vector.broadcast %cst_13 : f32 to vector<16x128xf32>
    %27 = arith.addf %26, %25 : vector<16x128xf32>
    %28 = arith.divf %26, %27 : vector<16x128xf32>
    %29 = arith.mulf %15, %28 : vector<16x128xf32>
    %30 = arith.truncf %29 : vector<16x128xf32> to vector<16x128xbf16>
    %c0_14 = arith.constant 0 : index
    %c0_15 = arith.constant 0 : index
    %31 = vector.load %arg5[%c0_14, %c0_15] : memref<128x1024xbf16, #tpu.memory_space<vmem>>, vector<128x1024xbf16>
    %cst_16 = arith.constant dense<0.000000e+00> : vector<16x1024xf32>
    %32 = tpu.matmul %30, %31, %cst_16 {dimension_numbers = #tpu.dot_dimension_numbers<[1], [0], [0], [1], [0, 0, 1, 1], [], []>} : vector<16x128xbf16>, vector<128x1024xbf16>, vector<16x1024xf32> -> vector<16x1024xf32>
    %c0_17 = arith.constant 0 : index
    %c0_18 = arith.constant 0 : index
    %33 = vector.load %arg6[%c0_17, %c0_18] : memref<1x1024xf32, #tpu.memory_space<vmem>>, vector<1x1024xf32>
    %34 = vector.broadcast %33 : vector<1x1024xf32> to vector<16x1024xf32>
    %35 = arith.addf %32, %34 : vector<16x1024xf32>
    %cst_19 = arith.constant 0.000000e+00 : f32
    %36 = vector.broadcast %cst_19 : f32 to vector<16x1024xf32>
    %37 = arith.maximumf %35, %36 : vector<16x1024xf32>
    %38 = arith.truncf %37 : vector<16x1024xf32> to vector<16x1024xbf16>
    %c0_20 = arith.constant 0 : index
    %c0_21 = arith.constant 0 : index
    %39 = vector.load %arg7[%c0_20, %c0_21] : memref<1024x128xbf16, #tpu.memory_space<vmem>>, vector<1024x128xbf16>
    %cst_22 = arith.constant dense<0.000000e+00> : vector<16x128xf32>
    %40 = tpu.matmul %38, %39, %cst_22 {dimension_numbers = #tpu.dot_dimension_numbers<[1], [0], [0], [1], [0, 0, 1, 1], [], []>} : vector<16x1024xbf16>, vector<1024x128xbf16>, vector<16x128xf32> -> vector<16x128xf32>
    %c0_23 = arith.constant 0 : index
    %c0_24 = arith.constant 0 : index
    %41 = vector.load %arg8[%c0_23, %c0_24] : memref<1x128xf32, #tpu.memory_space<vmem>>, vector<1x128xf32>
    %42 = vector.broadcast %41 : vector<1x128xf32> to vector<16x128xf32>
    %43 = arith.addf %40, %42 : vector<16x128xf32>
    %cst_25 = arith.constant 0.000000e+00 : f32
    %44 = vector.broadcast %cst_25 : f32 to vector<16x128xf32>
    %45 = arith.maximumf %43, %44 : vector<16x128xf32>
    %46 = arith.truncf %45 : vector<16x128xf32> to vector<16x128xbf16>
    %c0_26 = arith.constant 0 : index
    %c0_27 = arith.constant 0 : index
    %47 = vector.load %arg9[%c0_26, %c0_27] : memref<128x128xbf16, #tpu.memory_space<vmem>>, vector<128x128xbf16>
    %cst_28 = arith.constant dense<0.000000e+00> : vector<16x128xf32>
    %48 = tpu.matmul %46, %47, %cst_28 {dimension_numbers = #tpu.dot_dimension_numbers<[1], [0], [0], [1], [0, 0, 1, 1], [], []>} : vector<16x128xbf16>, vector<128x128xbf16>, vector<16x128xf32> -> vector<16x128xf32>
    %c0_29 = arith.constant 0 : index
    %c0_30 = arith.constant 0 : index
    %49 = vector.load %arg10[%c0_29, %c0_30] : memref<1x128xf32, #tpu.memory_space<vmem>>, vector<1x128xf32>
    %50 = vector.broadcast %49 : vector<1x128xf32> to vector<16x128xf32>
    %51 = arith.addf %48, %50 : vector<16x128xf32>
    %c0_31 = arith.constant 0 : index
    %c0_32 = arith.constant 0 : index
    %52 = vector.load %arg11[%c0_31, %c0_32] : memref<16x128xf32, #tpu.memory_space<vmem>>, vector<16x128xf32>
    tpu.vector_store %arg11[%c0_31, %c0_32], %51 {strides = array<i32>} : memref<16x128xf32, #tpu.memory_space<vmem>>, vector<16x128xf32>,
    return
  }
  func.func @transform_0(%arg0: i32) -> (i32, i32) {
    %c0_i32 = arith.constant 0 : i32
    %c0_i32_0 = arith.constant 0 : i32
    return %arg0, %c0_i32 : i32, i32
  }
  func.func @transform_1(%arg0: i32) -> (i32, i32) {
    %c0_i32 = arith.constant 0 : i32
    %c0_i32_0 = arith.constant 0 : i32
    %c0_i32_1 = arith.constant 0 : i32
    return %c0_i32, %c0_i32_0 : i32, i32
  }
  func.func @transform_2(%arg0: i32) -> (i32, i32) {
    %c0_i32 = arith.constant 0 : i32
    %c0_i32_0 = arith.constant 0 : i32
    %c0_i32_1 = arith.constant 0 : i32
    return %c0_i32, %c0_i32_0 : i32, i32
  }
  func.func @transform_3(%arg0: i32) -> (i32, i32) {
    %c0_i32 = arith.constant 0 : i32
    %c0_i32_0 = arith.constant 0 : i32
    %c0_i32_1 = arith.constant 0 : i32
    return %c0_i32, %c0_i32_0 : i32, i32
  }
  func.func @transform_4(%arg0: i32) -> (i32, i32) {
    %c0_i32 = arith.constant 0 : i32
    %c0_i32_0 = arith.constant 0 : i32
    %c0_i32_1 = arith.constant 0 : i32
    return %c0_i32, %c0_i32_0 : i32, i32
  }
  func.func @transform_5(%arg0: i32) -> (i32, i32) {
    %c0_i32 = arith.constant 0 : i32
    %c0_i32_0 = arith.constant 0 : i32
    %c0_i32_1 = arith.constant 0 : i32
    return %c0_i32, %c0_i32_0 : i32, i32
  }
  func.func @transform_6(%arg0: i32) -> (i32, i32) {
    %c0_i32 = arith.constant 0 : i32
    %c0_i32_0 = arith.constant 0 : i32
    %c0_i32_1 = arith.constant 0 : i32
    return %c0_i32, %c0_i32_0 : i32, i32
  }
  func.func @transform_7(%arg0: i32) -> (i32, i32) {
    %c0_i32 = arith.constant 0 : i32
    %c0_i32_0 = arith.constant 0 : i32
    %c0_i32_1 = arith.constant 0 : i32
    return %c0_i32, %c0_i32_0 : i32, i32
  }
  func.func @transform_8(%arg0: i32) -> (i32, i32) {
    %c0_i32 = arith.constant 0 : i32
    %c0_i32_0 = arith.constant 0 : i32
    %c0_i32_1 = arith.constant 0 : i32
    return %c0_i32, %c0_i32_0 : i32, i32
  }
  func.func @transform_9(%arg0: i32) -> (i32, i32) {
    %c0_i32 = arith.constant 0 : i32
    %c0_i32_0 = arith.constant 0 : i32
    %c0_i32_1 = arith.constant 0 : i32
    return %c0_i32, %c0_i32_0 : i32, i32
  }
  func.func @transform_10(%arg0: i32) -> (i32, i32) {
    %c0_i32 = arith.constant 0 : i32
    %c0_i32_0 = arith.constant 0 : i32
    return %arg0, %c0_i32 : i32, i32
  }
}

</mosaic_0001>

<llo_original>
// kernel: tpu_custom_call.1
$region0: #{tpu_custom_call.1}
  #allocation0 [shape = 'u32[]', space=smem, size = 0x4, offset = 0x4, fixed_abs, tag = 'smem constant byte address 0x4 - core index']
  #allocation1 [shape = 'u32[144,128]{1,0:T(1,128)}', space=vmem, size = 0x12000, scoped, tag = 'internal scratch']
  %s0 = inlined_call_operand.vmem [shape: bf16[2048,108], index: 0, kind: input, shape index: {}]
  %s1 = inlined_call_operand.vmem [shape: bf16[108,512], index: 1, kind: input, shape index: {}]
  %s2 = inlined_call_operand.vmem [shape: bf16[128,128], index: 2, kind: input, shape index: {}]
  %s3 = inlined_call_operand.vmem [shape: bf16[128,128], index: 3, kind: input, shape index: {}]
  %s4 = inlined_call_operand.vmem [shape: bf16[128,1024], index: 4, kind: input, shape index: {}]
  %s5 = inlined_call_operand.vmem [shape: f32[1,1024], index: 5, kind: input, shape index: {}]
  %s6 = inlined_call_operand.vmem [shape: bf16[1024,128], index: 6, kind: input, shape index: {}]
  %s7 = inlined_call_operand.vmem [shape: f32[1,128], index: 7, kind: input, shape index: {}]
  %s8 = inlined_call_operand.vmem [shape: bf16[128,128], index: 8, kind: input, shape index: {}]
  %s9 = inlined_call_operand.vmem [shape: f32[1,128], index: 9, kind: input, shape index: {}]
  %s10 = inlined_call_operand.hbm [shape: f32[32,128], index: 10, kind: output, shape index: {}]
  %s11 = sld [smem:[#allocation0]]
  $region73: #{tpu_custom_call.1} parent=0
    _
  %s13 = ssub.s32 1, %s11
  %s14 = scalar_select 0, %s13, %s11
  $region1: #{tpu_custom_call.1} parent=0
    #allocation2 [shape = 'u8[16384]{0}', space=vmem, size = 0x4000, scoped, tag = 'output window, operand 0']
    #allocation3 [shape = 's32[2]{0}', space=sflag, size = 0x8, scoped, tag = 'scoped memory for tpu_custom_call.1']
    %15 = vsyncpa [#allocation3], 0
    %s16 = scalar_lea.sflag [#allocation3], 1
    %17 = vsyncpa %s16, 0
    loop: start=0, step=1, limit=4
    $region2: #{tpu_custom_call.1} parent=1 // loop_pre_header
      _
    $region3: #{tpu_custom_call.1} parent=1 // loop_header
      %s19 = sphi 0, %s23
      %p20 = scmp.ge.s32.totalorder %s19, 4
      %s29 = sphi 0, %s31
      %s32 = sphi 0, %s29
      %s33 = sphi 0, %s32
      %s49 = sphi 0, %s33
      %s53 = sphi 0, %s53
      %s55 = sphi 0, %s53
      %s56 = sphi 0, %s55
      %s70 = sphi 0, %s56
      %s74 = sphi 0, %s74
      %s76 = sphi 0, %s74
      %s77 = sphi 0, %s76
      %s91 = sphi 0, %s77
      %s95 = sphi 0, %s95
      %s97 = sphi 0, %s95
      %s98 = sphi 0, %s97
      %s112 = sphi 0, %s98
      %s116 = sphi 0, %s116
      %s118 = sphi 0, %s116
      %s119 = sphi 0, %s118
      %s133 = sphi 0, %s119
      %s137 = sphi 0, %s137
      %s139 = sphi 0, %s137
      %s140 = sphi 0, %s139
      %s154 = sphi 0, %s140
      %s158 = sphi 0, %s158
      %s160 = sphi 0, %s158
      %s161 = sphi 0, %s160
      %s175 = sphi 0, %s161
      %s179 = sphi 0, %s179
      %s181 = sphi 0, %s179
      %s182 = sphi 0, %s181
      %s196 = sphi 0, %s182
      %s200 = sphi 0, %s200
      %s202 = sphi 0, %s200
      %s203 = sphi 0, %s202
      %s217 = sphi 0, %s203
      %s221 = sphi 0, %s221
      %s223 = sphi 0, %s221
      %s224 = sphi 0, %s223
      %s238 = sphi 0, %s224
      %s244 = sphi 0, %s246
      %s247 = sphi 0, %s244
      %s248 = sphi 0, %s247
      %s264 = sphi 0, %s248
    $region4: #{tpu_custom_call.1} parent=1 // loop_header_branch
      %22 = sbr.rel (%p20) target = $region8
    $region5: #{tpu_custom_call.1} parent=1 // loop_body
      %s24 = ssub.s32 %s19, 1
      %s25 = ssub.s32 %s19, 2
      %s26 = sadd.s32 %s19, 1
      %s27 = ssub.s32 %s19, %s26
      %p28 = scmp.eq.s32.totalorder %s27, 0
      %s30 = sadd.s32 %s29, 1
      %s31 = scalar_select %p28, %s29, %s30
      %p34 = pneg %p28
      %p35 = scmp.eq.s32.totalorder %s19, 1
      %p36 = por %p34, %p35
      %p37 = scmp.ne.s32.totalorder %s29, %s32
      %p38 = scmp.eq.s32.totalorder %s19, 0
      %p39 = por %p37, %p38
      %p40 = scmp.ne.s32.totalorder %s29, %s32
      %p41 = scmp.eq.s32.totalorder %s24, 1
      %p42 = por %p40, %p41
      %p43 = scmp.ne.s32.totalorder %s32, %s33
      %p44 = scmp.eq.s32.totalorder %s24, 0
      %p45 = por %p43, %p44
      %p46 = scmp.ne.s32.totalorder %s32, %s33
      %p47 = scmp.eq.s32.totalorder %s25, 1
      %p48 = por %p46, %p47
      %p50 = scmp.ne.s32.totalorder %s33, %s49
      %p51 = scmp.eq.s32.totalorder %s25, 0
      %p52 = por %p50, %p51
      %s54 = sadd.s32 %s53, 1
      %p57 = scmp.eq.s32.totalorder %s19, 1
      %p58 = scmp.ne.s32.totalorder %s53, %s55
      %p59 = scmp.eq.s32.totalorder %s19, 0
      %p60 = por %p58, %p59
      %p61 = scmp.ne.s32.totalorder %s53, %s55
      %p62 = scmp.eq.s32.totalorder %s24, 1
      %p63 = por %p61, %p62
      %p64 = scmp.ne.s32.totalorder %s55, %s56
      %p65 = scmp.eq.s32.totalorder %s24, 0
      %p66 = por %p64, %p65
      %p67 = scmp.ne.s32.totalorder %s55, %s56
      %p68 = scmp.eq.s32.totalorder %s25, 1
      %p69 = por %p67, %p68
      %p71 = scmp.ne.s32.totalorder %s56, %s70
      %p72 = scmp.eq.s32.totalorder %s25, 0
      %p73 = por %p71, %p72
      %s75 = sadd.s32 %s74, 1
      %p78 = scmp.eq.s32.totalorder %s19, 1
      %p79 = scmp.ne.s32.totalorder %s74, %s76
      %p80 = scmp.eq.s32.totalorder %s19, 0
      %p81 = por %p79, %p80
      %p82 = scmp.ne.s32.totalorder %s74, %s76
      %p83 = scmp.eq.s32.totalorder %s24, 1
      %p84 = por %p82, %p83
      %p85 = scmp.ne.s32.totalorder %s76, %s77
      %p86 = scmp.eq.s32.totalorder %s24, 0
      %p87 = por %p85, %p86
      %p88 = scmp.ne.s32.totalorder %s76, %s77
      %p89 = scmp.eq.s32.totalorder %s25, 1
      %p90 = por %p88, %p89
      %p92 = scmp.ne.s32.totalorder %s77, %s91
      %p93 = scmp.eq.s32.totalorder %s25, 0
      %p94 = por %p92, %p93
      %s96 = sadd.s32 %s95, 1
      %p99 = scmp.eq.s32.totalorder %s19, 1
      %p100 = scmp.ne.s32.totalorder %s95, %s97
      %p101 = scmp.eq.s32.totalorder %s19, 0
      %p102 = por %p100, %p101
      %p103 = scmp.ne.s32.totalorder %s95, %s97
      %p104 = scmp.eq.s32.totalorder %s24, 1
      %p105 = por %p103, %p104
      %p106 = scmp.ne.s32.totalorder %s97, %s98
      %p107 = scmp.eq.s32.totalorder %s24, 0
      %p108 = por %p106, %p107
      %p109 = scmp.ne.s32.totalorder %s97, %s98
      %p110 = scmp.eq.s32.totalorder %s25, 1
      %p111 = por %p109, %p110
      %p113 = scmp.ne.s32.totalorder %s98, %s112
      %p114 = scmp.eq.s32.totalorder %s25, 0
      %p115 = por %p113, %p114
      %s117 = sadd.s32 %s116, 1
      %p120 = scmp.eq.s32.totalorder %s19, 1
      %p121 = scmp.ne.s32.totalorder %s116, %s118
      %p122 = scmp.eq.s32.totalorder %s19, 0
      %p123 = por %p121, %p122
      %p124 = scmp.ne.s32.totalorder %s116, %s118
      %p125 = scmp.eq.s32.totalorder %s24, 1
      %p126 = por %p124, %p125
      %p127 = scmp.ne.s32.totalorder %s118, %s119
      %p128 = scmp.eq.s32.totalorder %s24, 0
      %p129 = por %p127, %p128
      %p130 = scmp.ne.s32.totalorder %s118, %s119
      %p131 = scmp.eq.s32.totalorder %s25, 1
      %p132 = por %p130, %p131
      %p134 = scmp.ne.s32.totalorder %s119, %s133
      %p135 = scmp.eq.s32.totalorder %s25, 0
      %p136 = por %p134, %p135
      %s138 = sadd.s32 %s137, 1
      %p141 = scmp.eq.s32.totalorder %s19, 1
      %p142 = scmp.ne.s32.totalorder %s137, %s139
      %p143 = scmp.eq.s32.totalorder %s19, 0
      %p144 = por %p142, %p143
      %p145 = scmp.ne.s32.totalorder %s137, %s139
      %p146 = scmp.eq.s32.totalorder %s24, 1
      %p147 = por %p145, %p146
      %p148 = scmp.ne.s32.totalorder %s139, %s140
      %p149 = scmp.eq.s32.totalorder %s24, 0
      %p150 = por %p148, %p149
      %p151 = scmp.ne.s32.totalorder %s139, %s140
      %p152 = scmp.eq.s32.totalorder %s25, 1
      %p153 = por %p151, %p152
      %p155 = scmp.ne.s32.totalorder %s140, %s154
      %p156 = scmp.eq.s32.totalorder %s25, 0
      %p157 = por %p155, %p156
      %s159 = sadd.s32 %s158, 1
      %p162 = scmp.eq.s32.totalorder %s19, 1
      %p163 = scmp.ne.s32.totalorder %s158, %s160
      %p164 = scmp.eq.s32.totalorder %s19, 0
      %p165 = por %p163, %p164
      %p166 = scmp.ne.s32.totalorder %s158, %s160
      %p167 = scmp.eq.s32.totalorder %s24, 1
      %p168 = por %p166, %p167
      %p169 = scmp.ne.s32.totalorder %s160, %s161
      %p170 = scmp.eq.s32.totalorder %s24, 0
      %p171 = por %p169, %p170
      %p172 = scmp.ne.s32.totalorder %s160, %s161
      %p173 = scmp.eq.s32.totalorder %s25, 1
      %p174 = por %p172, %p173
      %p176 = scmp.ne.s32.totalorder %s161, %s175
      %p177 = scmp.eq.s32.totalorder %s25, 0
      %p178 = por %p176, %p177
      %s180 = sadd.s32 %s179, 1
      %p183 = scmp.eq.s32.totalorder %s19, 1
      %p184 = scmp.ne.s32.totalorder %s179, %s181
      %p185 = scmp.eq.s32.totalorder %s19, 0
      %p186 = por %p184, %p185
      %p187 = scmp.ne.s32.totalorder %s179, %s181
      %p188 = scmp.eq.s32.totalorder %s24, 1
      %p189 = por %p187, %p188
      %p190 = scmp.ne.s32.totalorder %s181, %s182
      %p191 = scmp.eq.s32.totalorder %s24, 0
      %p192 = por %p190, %p191
      %p193 = scmp.ne.s32.totalorder %s181, %s182
      %p194 = scmp.eq.s32.totalorder %s25, 1
      %p195 = por %p193, %p194
      %p197 = scmp.ne.s32.totalorder %s182, %s196
      %p198 = scmp.eq.s32.totalorder %s25, 0
      %p199 = por %p197, %p198
      %s201 = sadd.s32 %s200, 1
      %p204 = scmp.eq.s32.totalorder %s19, 1
      %p205 = scmp.ne.s32.totalorder %s200, %s202
      %p206 = scmp.eq.s32.totalorder %s19, 0
      %p207 = por %p205, %p206
      %p208 = scmp.ne.s32.totalorder %s200, %s202
      %p209 = scmp.eq.s32.totalorder %s24, 1
      %p210 = por %p208, %p209
      %p211 = scmp.ne.s32.totalorder %s202, %s203
      %p212 = scmp.eq.s32.totalorder %s24, 0
      %p213 = por %p211, %p212
      %p214 = scmp.ne.s32.totalorder %s202, %s203
      %p215 = scmp.eq.s32.totalorder %s25, 1
      %p216 = por %p214, %p215
      %p218 = scmp.ne.s32.totalorder %s203, %s217
      %p219 = scmp.eq.s32.totalorder %s25, 0
      %p220 = por %p218, %p219
      %s222 = sadd.s32 %s221, 1
      %p225 = scmp.eq.s32.totalorder %s19, 1
      %p226 = scmp.ne.s32.totalorder %s221, %s223
      %p227 = scmp.eq.s32.totalorder %s19, 0
      %p228 = por %p226, %p227
      %p229 = scmp.ne.s32.totalorder %s221, %s223
      %p230 = scmp.eq.s32.totalorder %s24, 1
      %p231 = por %p229, %p230
      %p232 = scmp.ne.s32.totalorder %s223, %s224
      %p233 = scmp.eq.s32.totalorder %s24, 0
      %p234 = por %p232, %p233
      %p235 = scmp.ne.s32.totalorder %s223, %s224
      %p236 = scmp.eq.s32.totalorder %s25, 1
      %p237 = por %p235, %p236
      %p239 = scmp.ne.s32.totalorder %s224, %s238
      %p240 = scmp.eq.s32.totalorder %s25, 0
      %p241 = por %p239, %p240
      %s242 = ssub.s32 %s19, %s26
      %p243 = scmp.eq.s32.totalorder %s242, 0
      %s245 = sadd.s32 %s244, 1
      %s246 = scalar_select %p243, %s244, %s245
      %p249 = pneg %p243
      %p250 = scmp.eq.s32.totalorder %s19, 1
      %p251 = por %p249, %p250
      %p252 = scmp.ne.s32.totalorder %s244, %s247
      %p253 = scmp.eq.s32.totalorder %s19, 0
      %p254 = por %p252, %p253
      %p255 = scmp.ne.s32.totalorder %s244, %s247
      %p256 = scmp.eq.s32.totalorder %s24, 1
      %p257 = por %p255, %p256
      %p258 = scmp.ne.s32.totalorder %s247, %s248
      %p259 = scmp.eq.s32.totalorder %s24, 0
      %p260 = por %p258, %p259
      %p261 = scmp.ne.s32.totalorder %s247, %s248
      %p262 = scmp.eq.s32.totalorder %s25, 1
      %p263 = por %p261, %p262
      %p265 = scmp.ne.s32.totalorder %s248, %s264
      %p266 = scmp.eq.s32.totalorder %s25, 0
      %p267 = por %p265, %p266
      %p268 = scmp.le.s32.totalorder 1, %s19
      %p269 = scmp.lt.s32.totalorder %s19, 3
      %p270 = pnand %p268, %p269
      %p271 = pneg %p270
      // Predicated region
      $region9: #{tpu_custom_call.1} parent=5 // pred_check
        _
      $region10: #{tpu_custom_call.1} parent=5 // pred_check_branch
        %273 = sbr.rel (%p270) target = $region12
      $region11: #{tpu_custom_call.1} parent=5 // pred_region
        %s274 = ssub.s32 %s19, 1
        // Predicated region
        $region13: #{tpu_custom_call.1} parent=11 // pred_check
          %p275 = pneg %p66
        $region14: #{tpu_custom_call.1} parent=11 // pred_check_branch
          %277 = sbr.rel (%p275) target = $region16
        $region15: #{tpu_custom_call.1} parent=11 // pred_region
          _
        $region16: #{tpu_custom_call.1} parent=11 // pred_fallthru
          _
        // Predicated region
        $region17: #{tpu_custom_call.1} parent=11 // pred_check
          %p278 = pneg %p87
        $region18: #{tpu_custom_call.1} parent=11 // pred_check_branch
          %280 = sbr.rel (%p278) target = $region20
        $region19: #{tpu_custom_call.1} parent=11 // pred_region
          _
        $region20: #{tpu_custom_call.1} parent=11 // pred_fallthru
          _
        // Predicated region
        $region21: #{tpu_custom_call.1} parent=11 // pred_check
          %p281 = pneg %p108
        $region22: #{tpu_custom_call.1} parent=11 // pred_check_branch
          %283 = sbr.rel (%p281) target = $region24
        $region23: #{tpu_custom_call.1} parent=11 // pred_region
          _
        $region24: #{tpu_custom_call.1} parent=11 // pred_fallthru
          _
        // Predicated region
        $region25: #{tpu_custom_call.1} parent=11 // pred_check
          %p284 = pneg %p129
        $region26: #{tpu_custom_call.1} parent=11 // pred_check_branch
          %286 = sbr.rel (%p284) target = $region28
        $region27: #{tpu_custom_call.1} parent=11 // pred_region
          _
        $region28: #{tpu_custom_call.1} parent=11 // pred_fallthru
          _
        // Predicated region
        $region29: #{tpu_custom_call.1} parent=11 // pred_check
          %p287 = pneg %p150
        $region30: #{tpu_custom_call.1} parent=11 // pred_check_branch
          %289 = sbr.rel (%p287) target = $region32
        $region31: #{tpu_custom_call.1} parent=11 // pred_region
          _
        $region32: #{tpu_custom_call.1} parent=11 // pred_fallthru
          _
        // Predicated region
        $region33: #{tpu_custom_call.1} parent=11 // pred_check
          %p290 = pneg %p171
        $region34: #{tpu_custom_call.1} parent=11 // pred_check_branch
          %292 = sbr.rel (%p290) target = $region36
        $region35: #{tpu_custom_call.1} parent=11 // pred_region
          _
        $region36: #{tpu_custom_call.1} parent=11 // pred_fallthru
          _
        // Predicated region
        $region37: #{tpu_custom_call.1} parent=11 // pred_check
          %p293 = pneg %p192
        $region38: #{tpu_custom_call.1} parent=11 // pred_check_branch
          %295 = sbr.rel (%p293) target = $region40
        $region39: #{tpu_custom_call.1} parent=11 // pred_region
          _
        $region40: #{tpu_custom_call.1} parent=11 // pred_fallthru
          _
        // Predicated region
        $region41: #{tpu_custom_call.1} parent=11 // pred_check
          %p296 = pneg %p213
        $region42: #{tpu_custom_call.1} parent=11 // pred_check_branch
          %298 = sbr.rel (%p296) target = $region44
        $region43: #{tpu_custom_call.1} parent=11 // pred_region
          _
        $region44: #{tpu_custom_call.1} parent=11 // pred_fallthru
          _
        // Predicated region
        $region45: #{tpu_custom_call.1} parent=11 // pred_check
          %p299 = pneg %p234
        $region46: #{tpu_custom_call.1} parent=11 // pred_check_branch
          %301 = sbr.rel (%p299) target = $region48
        $region47: #{tpu_custom_call.1} parent=11 // pred_region
          _
        $region48: #{tpu_custom_call.1} parent=11 // pred_fallthru
          _
      $region12: #{tpu_custom_call.1} parent=5 // pred_fallthru
        _
      %p302 = scmp.lt.s32.totalorder %s19, 2
      // Predicated region
      $region49: #{tpu_custom_call.1} parent=5 // pred_check
        %p303 = pneg %p302
      $region50: #{tpu_custom_call.1} parent=5 // pred_check_branch
        %305 = sbr.rel (%p303) target = $region52
      $region51: #{tpu_custom_call.1} parent=5 // pred_region
        // Predicated region
        $region53: #{tpu_custom_call.1} parent=51 // pred_check
          %p306 = pneg %p39
        $region54: #{tpu_custom_call.1} parent=51 // pred_check_branch
          %308 = sbr.rel (%p306) target = $region56
        $region55: #{tpu_custom_call.1} parent=51 // pred_region
          %s309 = smul.u32 128, %s19
          %p310 = scmp.lt.s32.totalorder %s309, 255
          %s311 = scalar_select %p310, %s309, 255
          %s312 = smul.addr %s311, 4
          %s313 = scalar_lea.vmem %s0, %s312
          %s314 = smul.u32 128, %s19
        $region56: #{tpu_custom_call.1} parent=51 // pred_fallthru
          _
      $region52: #{tpu_custom_call.1} parent=5 // pred_fallthru
        _
      %p315 = scmp.le.s32.totalorder 1, %s19
      %p316 = scmp.lt.s32.totalorder %s19, 3
      %p317 = pnand %p315, %p316
      %p318 = pneg %p317
      // Predicated region
      $region57: #{tpu_custom_call.1} parent=5 // pred_check
        _
      $region58: #{tpu_custom_call.1} parent=5 // pred_check_branch
        %320 = sbr.rel (%p317) target = $region60
      $region59: #{tpu_custom_call.1} parent=5 // pred_region
        %s321 = ssub.s32 %s19, 1
        %s322 = smul.u32 128, %s24
        %p323 = scmp.lt.s32.totalorder %s322, 255
        %s324 = scalar_select %p323, %s322, 255
        %s325 = smul.addr %s324, 4
        %s326 = scalar_lea.vmem %s0, %s325
        %p327 = pneg %p45
        %p328 = pneg %p42
        %p329 = pneg %p66
        %p330 = pneg %p63
        %p331 = pneg %p87
        %p332 = pneg %p84
        %p333 = pneg %p108
        %p334 = pneg %p105
        %p335 = pneg %p129
        %p336 = pneg %p126
        %p337 = pneg %p150
        %p338 = pneg %p147
        %p339 = pneg %p171
        %p340 = pneg %p168
        %p341 = pneg %p192
        %p342 = pneg %p189
        %p343 = pneg %p213
        %p344 = pneg %p210
        %p345 = pneg %p234
        %p346 = pneg %p231
        %p347 = pneg %p260
        %p348 = pneg %p257
        %s349 = sand.u32 %s247, 1
        %s350 = scalar_lea.sflag [#allocation3], %s349
        %s351 = sand.u32 %s247, 1
        %s352 = smul.addr %s351, 16
        %s353 = scalar_lea.vmem [#allocation2], %s352
        %s354 = smul.u32 128, %s24
        %p355 = scmp.lt.s32.totalorder %s354, 255
        %s356 = scalar_select %p355, %s354, 255
        %s357 = smul.addr %s356, 4
        %s358 = scalar_lea.vmem %s0, %s357
        %s359 = smul.u32 128, %s24
        %s360 = smul.u32 2, %s24
        %v362 = vld [vmem:[%s358] sm:$0xf]
        %v363 = vld [vmem:[%s358 + $0x4] sm:$0xf]
        %v364 = vld [vmem:[%s358 + $0x8] sm:$0xf]
        %v365 = vld [vmem:[%s358 + $0xc] sm:$0xf]
        %v366 = vld [vmem:[%s358 + $0x10] sm:$0xf]
        %v367 = vld [vmem:[%s358 + $0x14] sm:$0xf]
        %v368 = vld [vmem:[%s358 + $0x18] sm:$0xf]
        %v369 = vld [vmem:[%s358 + $0x1c] sm:$0xf]
        %v370 = vld [vmem:[%s358 + $0x20] sm:$0xf]
        %v371 = vld [vmem:[%s358 + $0x24] sm:$0xf]
        %v372 = vld [vmem:[%s358 + $0x28] sm:$0xf]
        %v373 = vld [vmem:[%s358 + $0x2c] sm:$0xf]
        %v374 = vld [vmem:[%s358 + $0x30] sm:$0xf]
        %v375 = vld [vmem:[%s358 + $0x34] sm:$0xf]
        %v376 = vld [vmem:[%s358 + $0x38] sm:$0xf]
        %v377 = vld [vmem:[%s358 + $0x3c] sm:$0xf]
        %v378 = vld [vmem:[%s358 + $0x40] sm:$0xf]
        %v379 = vld [vmem:[%s358 + $0x44] sm:$0xf]
        %v380 = vld [vmem:[%s358 + $0x48] sm:$0xf]
        %v381 = vld [vmem:[%s358 + $0x4c] sm:$0xf]
        %v382 = vld [vmem:[%s358 + $0x50] sm:$0xf]
        %v383 = vld [vmem:[%s358 + $0x54] sm:$0xf]
        %v384 = vld [vmem:[%s358 + $0x58] sm:$0xf]
        %v385 = vld [vmem:[%s358 + $0x5c] sm:$0xf]
        %v386 = vld [vmem:[%s358 + $0x60] sm:$0xf]
        %v387 = vld [vmem:[%s358 + $0x64] sm:$0xf]
        %v388 = vld [vmem:[%s358 + $0x68] sm:$0xf]
        %v389 = vld [vmem:[%s358 + $0x6c] sm:$0xf]
        %v390 = vld [vmem:[%s358 + $0x70] sm:$0xf]
        %v391 = vld [vmem:[%s358 + $0x74] sm:$0xf]
        %v392 = vld [vmem:[%s358 + $0x78] sm:$0xf]
        %v393 = vld [vmem:[%s358 + $0x7c] sm:$0xf]
        %v394 = vld [vmem:[%s358 + $0x80] sm:$0xf]
        %v395 = vld [vmem:[%s358 + $0x84] sm:$0xf]
        %v396 = vld [vmem:[%s358 + $0x88] sm:$0xf]
        %v397 = vld [vmem:[%s358 + $0x8c] sm:$0xf]
        %v398 = vld [vmem:[%s358 + $0x90] sm:$0xf]
        %v399 = vld [vmem:[%s358 + $0x94] sm:$0xf]
        %v400 = vld [vmem:[%s358 + $0x98] sm:$0xf]
        %v401 = vld [vmem:[%s358 + $0x9c] sm:$0xf]
        %v402 = vld [vmem:[%s358 + $0xa0] sm:$0xf]
        %v403 = vld [vmem:[%s358 + $0xa4] sm:$0xf]
        %v404 = vld [vmem:[%s358 + $0xa8] sm:$0xf]
        %v405 = vld [vmem:[%s358 + $0xac] sm:$0xf]
        %v406 = vld [vmem:[%s358 + $0xb0] sm:$0xf]
        %v407 = vld [vmem:[%s358 + $0xb4] sm:$0xf]
        %v408 = vld [vmem:[%s358 + $0xb8] sm:$0xf]
        %v409 = vld [vmem:[%s358 + $0xbc] sm:$0xf]
        %v410 = vld [vmem:[%s358 + $0xc0] sm:$0xf]
        %v411 = vld [vmem:[%s358 + $0xc4] sm:$0xf]
        %v412 = vld [vmem:[%s358 + $0xc8] sm:$0xf]
        %v413 = vld [vmem:[%s358 + $0xcc] sm:$0xf]
        %v414 = vld [vmem:[%s358 + $0xd0] sm:$0xf]
        %v415 = vld [vmem:[%s358 + $0xd4] sm:$0xf]
        %v416 = vld [vmem:[%s358 + $0xd8] sm:$0xf]
        %v417 = vld [vmem:[%s358 + $0xdc] sm:$0xf]
        %v418 = vld [vmem:[%s358 + $0xe0] sm:$0xf]
        %v419 = vld [vmem:[%s358 + $0xe4] sm:$0xf]
        %v420 = vld [vmem:[%s358 + $0xe8] sm:$0xf]
        %v421 = vld [vmem:[%s358 + $0xec] sm:$0xf]
        %v422 = vld [vmem:[%s358 + $0xf0] sm:$0xf]
        %v423 = vld [vmem:[%s358 + $0xf4] sm:$0xf]
        %v424 = vld [vmem:[%s358 + $0xf8] sm:$0xf]
        %v425 = vld [vmem:[%s358 + $0xfc] sm:$0xf]
        %v426 = vld [vmem:[%s358 + $0x100] sm:$0xf]
        %v427 = vld [vmem:[%s358 + $0x104] sm:$0xf]
        %v428 = vld [vmem:[%s358 + $0x108] sm:$0xf]
        %v429 = vld [vmem:[%s358 + $0x10c] sm:$0xf]
        %v430 = vld [vmem:[%s358 + $0x110] sm:$0xf]
        %v431 = vld [vmem:[%s358 + $0x114] sm:$0xf]
        %v432 = vld [vmem:[%s358 + $0x118] sm:$0xf]
        %v433 = vld [vmem:[%s358 + $0x11c] sm:$0xf]
        %v434 = vld [vmem:[%s358 + $0x120] sm:$0xf]
        %v435 = vld [vmem:[%s358 + $0x124] sm:$0xf]
        %v436 = vld [vmem:[%s358 + $0x128] sm:$0xf]
        %v437 = vld [vmem:[%s358 + $0x12c] sm:$0xf]
        %v438 = vld [vmem:[%s358 + $0x130] sm:$0xf]
        %v439 = vld [vmem:[%s358 + $0x134] sm:$0xf]
        %v440 = vld [vmem:[%s358 + $0x138] sm:$0xf]
        %v441 = vld [vmem:[%s358 + $0x13c] sm:$0xf]
        %v442 = vld [vmem:[%s358 + $0x140] sm:$0xf]
        %v443 = vld [vmem:[%s358 + $0x144] sm:$0xf]
        %v444 = vld [vmem:[%s358 + $0x148] sm:$0xf]
        %v445 = vld [vmem:[%s358 + $0x14c] sm:$0xf]
        %v446 = vld [vmem:[%s358 + $0x150] sm:$0xf]
        %v447 = vld [vmem:[%s358 + $0x154] sm:$0xf]
        %v448 = vld [vmem:[%s358 + $0x158] sm:$0xf]
        %v449 = vld [vmem:[%s358 + $0x15c] sm:$0xf]
        %v450 = vld [vmem:[%s358 + $0x160] sm:$0xf]
        %v451 = vld [vmem:[%s358 + $0x164] sm:$0xf]
        %v452 = vld [vmem:[%s358 + $0x168] sm:$0xf]
        %v453 = vld [vmem:[%s358 + $0x16c] sm:$0xf]
        %v454 = vld [vmem:[%s358 + $0x170] sm:$0xf]
        %v455 = vld [vmem:[%s358 + $0x174] sm:$0xf]
        %v456 = vld [vmem:[%s358 + $0x178] sm:$0xf]
        %v457 = vld [vmem:[%s358 + $0x17c] sm:$0xf]
        %v458 = vld [vmem:[%s358 + $0x180] sm:$0xf]
        %v459 = vld [vmem:[%s358 + $0x184] sm:$0xf]
        %v460 = vld [vmem:[%s358 + $0x188] sm:$0xf]
        %v461 = vld [vmem:[%s358 + $0x18c] sm:$0xf]
        %v462 = vld [vmem:[%s358 + $0x190] sm:$0xf]
        %v463 = vld [vmem:[%s358 + $0x194] sm:$0xf]
        %v464 = vld [vmem:[%s358 + $0x198] sm:$0xf]
        %v465 = vld [vmem:[%s358 + $0x19c] sm:$0xf]
        %v466 = vld [vmem:[%s358 + $0x1a0] sm:$0xf]
        %v467 = vld [vmem:[%s358 + $0x1a4] sm:$0xf]
        %v468 = vld [vmem:[%s358 + $0x1a8] sm:$0xf]
        %v469 = vld [vmem:[%s358 + $0x1ac] sm:$0xf]
        %v470 = vld [vmem:[%s358 + $0x1b0] sm:$0xf]
        %v471 = vld [vmem:[%s358 + $0x1b4] sm:$0xf]
        %v472 = vld [vmem:[%s358 + $0x1b8] sm:$0xf]
        %v473 = vld [vmem:[%s358 + $0x1bc] sm:$0xf]
        %v474 = vld [vmem:[%s358 + $0x1c0] sm:$0xf]
        %v475 = vld [vmem:[%s358 + $0x1c4] sm:$0xf]
        %v476 = vld [vmem:[%s358 + $0x1c8] sm:$0xf]
        %v477 = vld [vmem:[%s358 + $0x1cc] sm:$0xf]
        %v478 = vld [vmem:[%s358 + $0x1d0] sm:$0xf]
        %v479 = vld [vmem:[%s358 + $0x1d4] sm:$0xf]
        %v480 = vld [vmem:[%s358 + $0x1d8] sm:$0xf]
        %v481 = vld [vmem:[%s358 + $0x1dc] sm:$0xf]
        %v482 = vld [vmem:[%s358 + $0x1e0] sm:$0xf]
        %v483 = vld [vmem:[%s358 + $0x1e4] sm:$0xf]
        %v484 = vld [vmem:[%s358 + $0x1e8] sm:$0xf]
        %v485 = vld [vmem:[%s358 + $0x1ec] sm:$0xf]
        %v486 = vld [vmem:[%s358 + $0x1f0] sm:$0xf]
        %v487 = vld [vmem:[%s358 + $0x1f4] sm:$0xf]
        %v488 = vld [vmem:[%s358 + $0x1f8] sm:$0xf]
        %v489 = vld [vmem:[%s358 + $0x1fc] sm:$0xf]
        %v490 = vld [vmem:[%s1] sm:$0xff]
        %v491 = vld [vmem:[%s1 + $0x8] sm:$0xff]
        %v492 = vld [vmem:[%s1 + $0x10] sm:$0xff]
        %v493 = vld [vmem:[%s1 + $0x18] sm:$0xff]
        %v494 = vld [vmem:[%s1 + $0x20] sm:$0xff]
        %v495 = vld [vmem:[%s1 + $0x28] sm:$0xff]
        %v496 = vld [vmem:[%s1 + $0x30] sm:$0xff]
        %v497 = vld [vmem:[%s1 + $0x38] sm:$0xff]
        %v498 = vld [vmem:[%s1 + $0x40] sm:$0xff]
        %v499 = vld [vmem:[%s1 + $0x48] sm:$0xff]
        %v500 = vld [vmem:[%s1 + $0x50] sm:$0xff]
        %v501 = vld [vmem:[%s1 + $0x58] sm:$0xff]
        %v502 = vld [vmem:[%s1 + $0x60] sm:$0xff]
        %v503 = vld [vmem:[%s1 + $0x68] sm:$0xff]
        %v504 = vld [vmem:[%s1 + $0x70] sm:$0xff]
        %v505 = vld [vmem:[%s1 + $0x78] sm:$0xff]
        %v506 = vld [vmem:[%s1 + $0x80] sm:$0xff]
        %v507 = vld [vmem:[%s1 + $0x88] sm:$0xff]
        %v508 = vld [vmem:[%s1 + $0x90] sm:$0xff]
        %v509 = vld [vmem:[%s1 + $0x98] sm:$0xff]
        %v510 = vld [vmem:[%s1 + $0xa0] sm:$0xff]
        %v511 = vld [vmem:[%s1 + $0xa8] sm:$0xff]
        %v512 = vld [vmem:[%s1 + $0xb0] sm:$0xff]
        %v513 = vld [vmem:[%s1 + $0xb8] sm:$0xff]
        %v514 = vld [vmem:[%s1 + $0xc0] sm:$0xff]
        %v515 = vld [vmem:[%s1 + $0xc8] sm:$0xff]
        %v516 = vld [vmem:[%s1 + $0xd0] sm:$0x33]
        %v517 = vld [vmem:[%s1 + $0xd8] sm:$0x33]
        %v646 = vunpack.c.l.b16 %v362
        %v647 = vunpack.c.l.b16 %v363
        %v648 = vunpack.c.l.b16 %v364
        %v649 = vunpack.c.l.b16 %v365
        %v650 = vunpack.c.l.b16 %v366
        %v651 = vunpack.c.l.b16 %v367
        %v652 = vunpack.c.l.b16 %v368
        %v653 = vunpack.c.l.b16 %v369
        %v654 = vunpack.c.l.b16 %v370
        %v655 = vunpack.c.l.b16 %v371
        %v656 = vunpack.c.l.b16 %v372
        %v657 = vunpack.c.l.b16 %v373
        %v658 = vunpack.c.l.b16 %v374
        %v659 = vunpack.c.l.b16 %v375
        %v660 = vunpack.c.l.b16 %v376
        %v661 = vunpack.c.l.b16 %v377
        %v662 = vunpack.c.l.b16 %v378
        %v663 = vunpack.c.l.b16 %v379
        %v664 = vunpack.c.l.b16 %v380
        %v665 = vunpack.c.l.b16 %v381
        %v666 = vunpack.c.l.b16 %v382
        %v667 = vunpack.c.l.b16 %v383
        %v668 = vunpack.c.l.b16 %v384
        %v669 = vunpack.c.l.b16 %v385
        %v670 = vunpack.c.l.b16 %v386
        %v671 = vunpack.c.l.b16 %v387
        %v672 = vunpack.c.l.b16 %v388
        %v673 = vunpack.c.l.b16 %v389
        %v674 = vunpack.c.l.b16 %v390
        %v675 = vunpack.c.l.b16 %v391
        %v676 = vunpack.c.l.b16 %v392
        %v677 = vunpack.c.l.b16 %v393
        %v678 = vunpack.c.l.b16 %v394
        %v679 = vunpack.c.l.b16 %v395
        %v680 = vunpack.c.l.b16 %v396
        %v681 = vunpack.c.l.b16 %v397
        %v682 = vunpack.c.l.b16 %v398
        %v683 = vunpack.c.l.b16 %v399
        %v684 = vunpack.c.l.b16 %v400
        %v685 = vunpack.c.l.b16 %v401
        %v686 = vunpack.c.l.b16 %v402
        %v687 = vunpack.c.l.b16 %v403
        %v688 = vunpack.c.l.b16 %v404
        %v689 = vunpack.c.l.b16 %v405
        %v690 = vunpack.c.l.b16 %v406
        %v691 = vunpack.c.l.b16 %v407
        %v692 = vunpack.c.l.b16 %v408
        %v693 = vunpack.c.l.b16 %v409
        %v694 = vunpack.c.l.b16 %v410
        %v695 = vunpack.c.l.b16 %v411
        %v696 = vunpack.c.l.b16 %v412
        %v697 = vunpack.c.l.b16 %v413
        %v698 = vunpack.c.l.b16 %v414
        %v699 = vunpack.c.l.b16 %v415
        %v700 = vunpack.c.l.b16 %v416
        %v701 = vunpack.c.l.b16 %v417
        %v702 = vunpack.c.l.b16 %v418
        %v703 = vunpack.c.l.b16 %v419
        %v704 = vunpack.c.l.b16 %v420
        %v705 = vunpack.c.l.b16 %v421
        %v706 = vunpack.c.l.b16 %v422
        %v707 = vunpack.c.l.b16 %v423
        %v708 = vunpack.c.l.b16 %v424
        %v709 = vunpack.c.l.b16 %v425
        %v710 = vunpack.c.l.b16 %v426
        %v711 = vunpack.c.l.b16 %v427
        %v712 = vunpack.c.l.b16 %v428
        %v713 = vunpack.c.l.b16 %v429
        %v714 = vunpack.c.l.b16 %v430
        %v715 = vunpack.c.l.b16 %v431
        %v716 = vunpack.c.l.b16 %v432
        %v717 = vunpack.c.l.b16 %v433
        %v718 = vunpack.c.l.b16 %v434
        %v719 = vunpack.c.l.b16 %v435
        %v720 = vunpack.c.l.b16 %v436
        %v721 = vunpack.c.l.b16 %v437
        %v722 = vunpack.c.l.b16 %v438
        %v723 = vunpack.c.l.b16 %v439
        %v724 = vunpack.c.l.b16 %v440
        %v725 = vunpack.c.l.b16 %v441
        %v726 = vunpack.c.l.b16 %v442
        %v727 = vunpack.c.l.b16 %v443
        %v728 = vunpack.c.l.b16 %v444
        %v729 = vunpack.c.l.b16 %v445
        %v730 = vunpack.c.l.b16 %v446
        %v731 = vunpack.c.l.b16 %v447
        %v732 = vunpack.c.l.b16 %v448
        %v733 = vunpack.c.l.b16 %v449
        %v734 = vunpack.c.l.b16 %v450
        %v735 = vunpack.c.l.b16 %v451
        %v736 = vunpack.c.l.b16 %v452
        %v737 = vunpack.c.l.b16 %v453
        %v738 = vunpack.c.l.b16 %v454
        %v739 = vunpack.c.l.b16 %v455
        %v740 = vunpack.c.l.b16 %v456
        %v741 = vunpack.c.l.b16 %v457
        %v742 = vunpack.c.l.b16 %v458
        %v743 = vunpack.c.l.b16 %v459
        %v744 = vunpack.c.l.b16 %v460
        %v745 = vunpack.c.l.b16 %v461
        %v746 = vunpack.c.l.b16 %v462
        %v747 = vunpack.c.l.b16 %v463
        %v748 = vunpack.c.l.b16 %v464
        %v749 = vunpack.c.l.b16 %v465
        %v750 = vunpack.c.l.b16 %v466
        %v751 = vunpack.c.l.b16 %v467
        %v752 = vunpack.c.l.b16 %v468
        %v753 = vunpack.c.l.b16 %v469
        %v754 = vunpack.c.l.b16 %v470
        %v755 = vunpack.c.l.b16 %v471
        %v756 = vunpack.c.l.b16 %v472
        %v757 = vunpack.c.l.b16 %v473
        %v758 = vunpack.c.l.b16 %v474
        %v759 = vunpack.c.l.b16 %v475
        %v760 = vunpack.c.l.b16 %v476
        %v761 = vunpack.c.l.b16 %v477
        %v762 = vunpack.c.l.b16 %v478
        %v763 = vunpack.c.l.b16 %v479
        %v764 = vunpack.c.l.b16 %v480
        %v765 = vunpack.c.l.b16 %v481
        %v766 = vunpack.c.l.b16 %v482
        %v767 = vunpack.c.l.b16 %v483
        %v768 = vunpack.c.l.b16 %v484
        %v769 = vunpack.c.l.b16 %v485
        %v770 = vunpack.c.l.b16 %v486
        %v771 = vunpack.c.l.b16 %v487
        %v772 = vunpack.c.l.b16 %v488
        %v773 = vunpack.c.l.b16 %v489
        %v774 = vpack.c.b16 %v647, %v646
        %v775 = vpack.c.b16 %v649, %v648
        %v776 = vpack.c.b16 %v651, %v650
        %v777 = vpack.c.b16 %v653, %v652
        %v778 = vpack.c.b16 %v655, %v654
        %v779 = vpack.c.b16 %v657, %v656
        %v780 = vpack.c.b16 %v659, %v658
        %v781 = vpack.c.b16 %v661, %v660
        %v782 = vpack.c.b16 %v663, %v662
        %v783 = vpack.c.b16 %v665, %v664
        %v784 = vpack.c.b16 %v667, %v666
        %v785 = vpack.c.b16 %v669, %v668
        %v786 = vpack.c.b16 %v671, %v670
        %v787 = vpack.c.b16 %v673, %v672
        %v788 = vpack.c.b16 %v675, %v674
        %v789 = vpack.c.b16 %v677, %v676
        %v790 = vpack.c.b16 %v679, %v678
        %v791 = vpack.c.b16 %v681, %v680
        %v792 = vpack.c.b16 %v683, %v682
        %v793 = vpack.c.b16 %v685, %v684
        %v794 = vpack.c.b16 %v687, %v686
        %v795 = vpack.c.b16 %v689, %v688
        %v796 = vpack.c.b16 %v691, %v690
        %v797 = vpack.c.b16 %v693, %v692
        %v798 = vpack.c.b16 %v695, %v694
        %v799 = vpack.c.b16 %v697, %v696
        %v800 = vpack.c.b16 %v699, %v698
        %v801 = vpack.c.b16 %v701, %v700
        %v802 = vpack.c.b16 %v703, %v702
        %v803 = vpack.c.b16 %v705, %v704
        %v804 = vpack.c.b16 %v707, %v706
        %v805 = vpack.c.b16 %v709, %v708
        %v806 = vpack.c.b16 %v711, %v710
        %v807 = vpack.c.b16 %v713, %v712
        %v808 = vpack.c.b16 %v715, %v714
        %v809 = vpack.c.b16 %v717, %v716
        %v810 = vpack.c.b16 %v719, %v718
        %v811 = vpack.c.b16 %v721, %v720
        %v812 = vpack.c.b16 %v723, %v722
        %v813 = vpack.c.b16 %v725, %v724
        %v814 = vpack.c.b16 %v727, %v726
        %v815 = vpack.c.b16 %v729, %v728
        %v816 = vpack.c.b16 %v731, %v730
        %v817 = vpack.c.b16 %v733, %v732
        %v818 = vpack.c.b16 %v735, %v734
        %v819 = vpack.c.b16 %v737, %v736
        %v820 = vpack.c.b16 %v739, %v738
        %v821 = vpack.c.b16 %v741, %v740
        %v822 = vpack.c.b16 %v743, %v742
        %v823 = vpack.c.b16 %v745, %v744
        %v824 = vpack.c.b16 %v747, %v746
        %v825 = vpack.c.b16 %v749, %v748
        %v826 = vpack.c.b16 %v751, %v750
        %v827 = vpack.c.b16 %v753, %v752
        %v828 = vpack.c.b16 %v755, %v754
        %v829 = vpack.c.b16 %v757, %v756
        %v830 = vpack.c.b16 %v759, %v758
        %v831 = vpack.c.b16 %v761, %v760
        %v832 = vpack.c.b16 %v763, %v762
        %v833 = vpack.c.b16 %v765, %v764
        %v834 = vpack.c.b16 %v767, %v766
        %v835 = vpack.c.b16 %v769, %v768
        %v836 = vpack.c.b16 %v771, %v770
        %v837 = vpack.c.b16 %v773, %v772
        %v866 = vunpack.c.l.b16 %v490
        %v867 = vunpack.c.h.b16 %v490
        %v868 = vunpack.c.l.b16 %v491
        %v869 = vunpack.c.h.b16 %v491
        %v870 = vunpack.c.l.b16 %v492
        %v871 = vunpack.c.h.b16 %v492
        %v872 = vunpack.c.l.b16 %v493
        %v873 = vunpack.c.h.b16 %v493
        %v874 = vunpack.c.l.b16 %v494
        %v875 = vunpack.c.h.b16 %v494
        %v876 = vunpack.c.l.b16 %v495
        %v877 = vunpack.c.h.b16 %v495
        %v878 = vunpack.c.l.b16 %v496
        %v879 = vunpack.c.h.b16 %v496
        %v880 = vunpack.c.l.b16 %v497
        %v881 = vunpack.c.h.b16 %v497
        %v882 = vunpack.c.l.b16 %v498
        %v883 = vunpack.c.h.b16 %v498
        %v884 = vunpack.c.l.b16 %v499
        %v885 = vunpack.c.h.b16 %v499
        %v886 = vunpack.c.l.b16 %v500
        %v887 = vunpack.c.h.b16 %v500
        %v888 = vunpack.c.l.b16 %v501
        %v889 = vunpack.c.h.b16 %v501
        %v890 = vunpack.c.l.b16 %v502
        %v891 = vunpack.c.h.b16 %v502
        %v892 = vunpack.c.l.b16 %v503
        %v893 = vunpack.c.h.b16 %v503
        %v894 = vunpack.c.l.b16 %v504
        %v895 = vunpack.c.h.b16 %v504
        %v896 = vunpack.c.l.b16 %v505
        %v897 = vunpack.c.h.b16 %v505
        %v898 = vunpack.c.l.b16 %v506
        %v899 = vunpack.c.h.b16 %v506
        %v900 = vunpack.c.l.b16 %v507
        %v901 = vunpack.c.h.b16 %v507
        %v902 = vunpack.c.l.b16 %v508
        %v903 = vunpack.c.h.b16 %v508
        %v904 = vunpack.c.l.b16 %v509
        %v905 = vunpack.c.h.b16 %v509
        %v906 = vunpack.c.l.b16 %v510
        %v907 = vunpack.c.h.b16 %v510
        %v908 = vunpack.c.l.b16 %v511
        %v909 = vunpack.c.h.b16 %v511
        %v910 = vunpack.c.l.b16 %v512
        %v911 = vunpack.c.h.b16 %v512
        %v912 = vunpack.c.l.b16 %v513
        %v913 = vunpack.c.h.b16 %v513
        %v914 = vunpack.c.l.b16 %v514
        %v915 = vunpack.c.h.b16 %v514
        %v916 = vunpack.c.l.b16 %v515
        %v917 = vunpack.c.h.b16 %v515
        %v918 = vunpack.c.l.b16 %v516
        %v919 = vunpack.c.h.b16 %v516
        %v920 = vunpack.c.l.b16 %v517
        %v921 = vunpack.c.h.b16 %v517
        %v922 = vpack.c.b16 %v870, %v866
        %v923 = vpack.c.b16 %v871, %v867
        %v924 = vpack.c.b16 %v872, %v868
        %v925 = vpack.c.b16 %v873, %v869
        %v926 = vpack.c.b16 %v878, %v874
        %v927 = vpack.c.b16 %v879, %v875
        %v928 = vpack.c.b16 %v880, %v876
        %v929 = vpack.c.b16 %v881, %v877
        %v930 = vpack.c.b16 %v886, %v882
        %v931 = vpack.c.b16 %v887, %v883
        %v932 = vpack.c.b16 %v888, %v884
        %v933 = vpack.c.b16 %v889, %v885
        %v934 = vpack.c.b16 %v894, %v890
        %v935 = vpack.c.b16 %v895, %v891
        %v936 = vpack.c.b16 %v896, %v892
        %v937 = vpack.c.b16 %v897, %v893
        %v938 = vpack.c.b16 %v902, %v898
        %v939 = vpack.c.b16 %v903, %v899
        %v940 = vpack.c.b16 %v904, %v900
        %v941 = vpack.c.b16 %v905, %v901
        %v942 = vpack.c.b16 %v910, %v906
        %v943 = vpack.c.b16 %v911, %v907
        %v944 = vpack.c.b16 %v912, %v908
        %v945 = vpack.c.b16 %v913, %v909
        %v946 = vpack.c.b16 %v918, %v914
        %v947 = vpack.c.b16 %v919, %v915
        %v948 = vpack.c.b16 %v920, %v916
        %v949 = vpack.c.b16 %v921, %v917
        %vm974 = vcmask 883712
        %v976 = vsel %vm974, %v774, 0
        %v979 = vsel %vm974, %v775, 0
        %v982 = vsel %vm974, %v776, 0
        %v985 = vsel %vm974, %v777, 0
        %v988 = vsel %vm974, %v778, 0
        %v991 = vsel %vm974, %v779, 0
        %v994 = vsel %vm974, %v780, 0
        %v997 = vsel %vm974, %v781, 0
        %v1000 = vsel %vm974, %v782, 0
        %v1003 = vsel %vm974, %v783, 0
        %v1006 = vsel %vm974, %v784, 0
        %v1009 = vsel %vm974, %v785, 0
        %v1012 = vsel %vm974, %v786, 0
        %v1015 = vsel %vm974, %v787, 0
        %v1018 = vsel %vm974, %v788, 0
        %v1021 = vsel %vm974, %v789, 0
        %v1024 = vsel %vm974, %v790, 0
        %v1027 = vsel %vm974, %v791, 0
        %v1030 = vsel %vm974, %v792, 0
        %v1033 = vsel %vm974, %v793, 0
        %v1036 = vsel %vm974, %v794, 0
        %v1039 = vsel %vm974, %v795, 0
        %v1042 = vsel %vm974, %v796, 0
        %v1045 = vsel %vm974, %v797, 0
        %v1048 = vsel %vm974, %v798, 0
        %v1051 = vsel %vm974, %v799, 0
        %v1054 = vsel %vm974, %v800, 0
        %v1057 = vsel %vm974, %v801, 0
        %v1060 = vsel %vm974, %v802, 0
        %v1063 = vsel %vm974, %v803, 0
        %v1066 = vsel %vm974, %v804, 0
        %v1069 = vsel %vm974, %v805, 0
        %v1072 = vsel %vm974, %v806, 0
        %v1075 = vsel %vm974, %v807, 0
        %v1078 = vsel %vm974, %v808, 0
        %v1081 = vsel %vm974, %v809, 0
        %v1084 = vsel %vm974, %v810, 0
        %v1087 = vsel %vm974, %v811, 0
        %v1090 = vsel %vm974, %v812, 0
        %v1093 = vsel %vm974, %v813, 0
        %v1096 = vsel %vm974, %v814, 0
        %v1099 = vsel %vm974, %v815, 0
        %v1102 = vsel %vm974, %v816, 0
        %v1105 = vsel %vm974, %v817, 0
        %v1108 = vsel %vm974, %v818, 0
        %v1111 = vsel %vm974, %v819, 0
        %v1114 = vsel %vm974, %v820, 0
        %v1117 = vsel %vm974, %v821, 0
        %v1120 = vsel %vm974, %v822, 0
        %v1123 = vsel %vm974, %v823, 0
        %v1126 = vsel %vm974, %v824, 0
        %v1129 = vsel %vm974, %v825, 0
        %v1132 = vsel %vm974, %v826, 0
        %v1135 = vsel %vm974, %v827, 0
        %v1138 = vsel %vm974, %v828, 0
        %v1141 = vsel %vm974, %v829, 0
        %v1144 = vsel %vm974, %v830, 0
        %v1147 = vsel %vm974, %v831, 0
        %v1150 = vsel %vm974, %v832, 0
        %v1153 = vsel %vm974, %v833, 0
        %v1156 = vsel %vm974, %v834, 0
        %v1159 = vsel %vm974, %v835, 0
        %v1162 = vsel %vm974, %v836, 0
        %v1165 = vsel %vm974, %v837, 0
        %vm1167 = vcmask 1045504
        %v1169 = vsel %vm1167, %v946, 0
        %v1172 = vsel %vm1167, %v947, 0
        %v1175 = vsel %vm1167, %v948, 0
        %v1178 = vsel %vm1167, %v949, 0
        %1180 = vmatprep.subr.bf16.mxu0 %v923
        %1181 = vmatpush1.bf16.msra.mxu0 %v922
        %1182 = vmatprep.subr.bf16.mxu0 %v927
        %1183 = vmatpush1.bf16.msra.mxu0 %v926
        %1184 = vmatprep.subr.bf16.mxu0 %v931
        %1185 = vmatpush1.bf16.msra.mxu0 %v930
        %1186 = vmatprep.subr.bf16.mxu0 %v935
        %1187 = vmatpush1.bf16.msra.mxu0 %v934
        %1188 = vmatprep.subr.bf16.mxu0 %v939
        %1189 = vmatpush1.bf16.msra.mxu0 %v938
        %1190 = vmatprep.subr.bf16.mxu0 %v943
        %1191 = vmatpush1.bf16.msra.mxu0 %v942
        %1192 = vmatprep.subr.bf16.mxu0 %v1172
        %1193 = vmatpush1.bf16.msra.mxu0 %v1169
        %1194 = vmatprep.subr.bf16.mxu0 0
        %1195 = vmatpush1.bf16.msra.mxu0 0
        %1196 = vmatprep.subr.bf16.mxu0 0
        %1197 = vmatpush1.bf16.msra.mxu0 0
        %1198 = vmatprep.subr.bf16.mxu0 0
        %1199 = vmatpush1.bf16.msra.mxu0 0
        %1200 = vmatprep.subr.bf16.mxu0 0
        %1201 = vmatpush1.bf16.msra.mxu0 0
        %1202 = vmatprep.subr.bf16.mxu0 0
        %1203 = vmatpush1.bf16.msra.mxu0 0
        %1204 = vmatprep.subr.bf16.mxu0 0
        %1205 = vmatpush1.bf16.msra.mxu0 0
        %1206 = vmatprep.subr.bf16.mxu0 0
        %1207 = vmatpush1.bf16.msra.mxu0 0
        %1208 = vmatprep.subr.bf16.mxu0 0
        %1209 = vmatpush1.bf16.msra.mxu0 0
        %1210 = vmatprep.subr.bf16.mxu0 0
        %1211 = vmatpush1.bf16.msra.mxu0 0
        %1212 = vmatprep.mubr.bf16.mxu0 0
        %1213 = vmatmul.mubr.bf16.gmra.mrb[0].mxu0 %v976
        %v1214 = vpop.f32.mrb[0].mxu0
        %v1215 = vadd.f32 0.0, %v1214
        %v1216 = vpop.f32.mrb[0].mxu0
        %v1217 = vadd.f32 0.0, %v1216
        %v1218 = vpop.f32.mrb[0].mxu0
        %v1219 = vadd.f32 0.0, %v1218
        %v1220 = vpop.f32.mrb[0].mxu0
        %v1221 = vadd.f32 0.0, %v1220
        %1222 = vmatprep.mubr.bf16.mxu0 0
        %1223 = vmatmul.mubr.bf16.gmra.mrb[0].mxu0 %v979
        %v1224 = vpop.f32.mrb[0].mxu0
        %v1225 = vadd.f32 0.0, %v1224
        %v1226 = vpop.f32.mrb[0].mxu0
        %v1227 = vadd.f32 0.0, %v1226
        %v1228 = vpop.f32.mrb[0].mxu0
        %v1229 = vadd.f32 0.0, %v1228
        %v1230 = vpop.f32.mrb[0].mxu0
        %v1231 = vadd.f32 0.0, %v1230
        %1232 = vmatprep.mubr.bf16.mxu0 0
        %1233 = vmatmul.mubr.bf16.gmra.mrb[0].mxu0 %v982
        %v1234 = vpop.f32.mrb[0].mxu0
        %v1235 = vadd.f32 0.0, %v1234
        %v1236 = vpop.f32.mrb[0].mxu0
        %v1237 = vadd.f32 0.0, %v1236
        %v1238 = vpop.f32.mrb[0].mxu0
        %v1239 = vadd.f32 0.0, %v1238
        %v1240 = vpop.f32.mrb[0].mxu0
        %v1241 = vadd.f32 0.0, %v1240
        %1242 = vmatprep.mubr.bf16.mxu0 0
        %1243 = vmatmul.mubr.bf16.gmra.mrb[0].mxu0 %v985
        %v1244 = vpop.f32.mrb[0].mxu0
        %v1245 = vadd.f32 0.0, %v1244
        %v1246 = vpop.f32.mrb[0].mxu0
        %v1247 = vadd.f32 0.0, %v1246
        %v1248 = vpop.f32.mrb[0].mxu0
        %v1249 = vadd.f32 0.0, %v1248
        %v1250 = vpop.f32.mrb[0].mxu0
        %v1251 = vadd.f32 0.0, %v1250
        %1252 = vmatprep.mubr.bf16.mxu0 0
        %1253 = vmatmul.mubr.bf16.gmra.mrb[0].mxu0 %v988
        %v1254 = vpop.f32.mrb[0].mxu0
        %v1255 = vadd.f32 0.0, %v1254
        %v1256 = vpop.f32.mrb[0].mxu0
        %v1257 = vadd.f32 0.0, %v1256
        %v1258 = vpop.f32.mrb[0].mxu0
        %v1259 = vadd.f32 0.0, %v1258
        %v1260 = vpop.f32.mrb[0].mxu0
        %v1261 = vadd.f32 0.0, %v1260
        %1262 = vmatprep.mubr.bf16.mxu0 0
        %1263 = vmatmul.mubr.bf16.gmra.mrb[0].mxu0 %v991
        %v1264 = vpop.f32.mrb[0].mxu0
        %v1265 = vadd.f32 0.0, %v1264
        %v1266 = vpop.f32.mrb[0].mxu0
        %v1267 = vadd.f32 0.0, %v1266
        %v1268 = vpop.f32.mrb[0].mxu0
        %v1269 = vadd.f32 0.0, %v1268
        %v1270 = vpop.f32.mrb[0].mxu0
        %v1271 = vadd.f32 0.0, %v1270
        %1272 = vmatprep.mubr.bf16.mxu0 0
        %1273 = vmatmul.mubr.bf16.gmra.mrb[0].mxu0 %v994
        %v1274 = vpop.f32.mrb[0].mxu0
        %v1275 = vadd.f32 0.0, %v1274
        %v1276 = vpop.f32.mrb[0].mxu0
        %v1277 = vadd.f32 0.0, %v1276
        %v1278 = vpop.f32.mrb[0].mxu0
        %v1279 = vadd.f32 0.0, %v1278
        %v1280 = vpop.f32.mrb[0].mxu0
        %v1281 = vadd.f32 0.0, %v1280
        %1282 = vmatprep.mubr.bf16.mxu0 0
        %1283 = vmatmul.mubr.bf16.gmra.mrb[0].mxu0 %v997
        %v1284 = vpop.f32.mrb[0].mxu0
        %v1285 = vadd.f32 0.0, %v1284
        %v1286 = vpop.f32.mrb[0].mxu0
        %v1287 = vadd.f32 0.0, %v1286
        %v1288 = vpop.f32.mrb[0].mxu0
        %v1289 = vadd.f32 0.0, %v1288
        %v1290 = vpop.f32.mrb[0].mxu0
        %v1291 = vadd.f32 0.0, %v1290
        %1292 = vmatprep.mubr.bf16.mxu0 0
        %1293 = vmatmul.mubr.bf16.gmra.mrb[0].mxu0 %v1000
        %v1294 = vpop.f32.mrb[0].mxu0
        %v1295 = vadd.f32 0.0, %v1294
        %v1296 = vpop.f32.mrb[0].mxu0
        %v1297 = vadd.f32 0.0, %v1296
        %v1298 = vpop.f32.mrb[0].mxu0
        %v1299 = vadd.f32 0.0, %v1298
        %v1300 = vpop.f32.mrb[0].mxu0
        %v1301 = vadd.f32 0.0, %v1300
        %1302 = vmatprep.mubr.bf16.mxu0 0
        %1303 = vmatmul.mubr.bf16.gmra.mrb[0].mxu0 %v1003
        %v1304 = vpop.f32.mrb[0].mxu0
        %v1305 = vadd.f32 0.0, %v1304
        %v1306 = vpop.f32.mrb[0].mxu0
        %v1307 = vadd.f32 0.0, %v1306
        %v1308 = vpop.f32.mrb[0].mxu0
        %v1309 = vadd.f32 0.0, %v1308
        %v1310 = vpop.f32.mrb[0].mxu0
        %v1311 = vadd.f32 0.0, %v1310
        %1312 = vmatprep.mubr.bf16.mxu0 0
        %1313 = vmatmul.mubr.bf16.gmra.mrb[0].mxu0 %v1006
        %v1314 = vpop.f32.mrb[0].mxu0
        %v1315 = vadd.f32 0.0, %v1314
        %v1316 = vpop.f32.mrb[0].mxu0
        %v1317 = vadd.f32 0.0, %v1316
        %v1318 = vpop.f32.mrb[0].mxu0
        %v1319 = vadd.f32 0.0, %v1318
        %v1320 = vpop.f32.mrb[0].mxu0
        %v1321 = vadd.f32 0.0, %v1320
        %1322 = vmatprep.mubr.bf16.mxu0 0
        %1323 = vmatmul.mubr.bf16.gmra.mrb[0].mxu0 %v1009
        %v1324 = vpop.f32.mrb[0].mxu0
        %v1325 = vadd.f32 0.0, %v1324
        %v1326 = vpop.f32.mrb[0].mxu0
        %v1327 = vadd.f32 0.0, %v1326
        %v1328 = vpop.f32.mrb[0].mxu0
        %v1329 = vadd.f32 0.0, %v1328
        %v1330 = vpop.f32.mrb[0].mxu0
        %v1331 = vadd.f32 0.0, %v1330
        %1332 = vmatprep.mubr.bf16.mxu0 0
        %1333 = vmatmul.mubr.bf16.gmra.mrb[0].mxu0 %v1012
        %v1334 = vpop.f32.mrb[0].mxu0
        %v1335 = vadd.f32 0.0, %v1334
        %v1336 = vpop.f32.mrb[0].mxu0
        %v1337 = vadd.f32 0.0, %v1336
        %v1338 = vpop.f32.mrb[0].mxu0
        %v1339 = vadd.f32 0.0, %v1338
        %v1340 = vpop.f32.mrb[0].mxu0
        %v1341 = vadd.f32 0.0, %v1340
        %1342 = vmatprep.mubr.bf16.mxu0 0
        %1343 = vmatmul.mubr.bf16.gmra.mrb[0].mxu0 %v1015
        %v1344 = vpop.f32.mrb[0].mxu0
        %v1345 = vadd.f32 0.0, %v1344
        %v1346 = vpop.f32.mrb[0].mxu0
        %v1347 = vadd.f32 0.0, %v1346
        %v1348 = vpop.f32.mrb[0].mxu0
        %v1349 = vadd.f32 0.0, %v1348
        %v1350 = vpop.f32.mrb[0].mxu0
        %v1351 = vadd.f32 0.0, %v1350
        %1352 = vmatprep.mubr.bf16.mxu0 0
        %1353 = vmatmul.mubr.bf16.gmra.mrb[0].mxu0 %v1018
        %v1354 = vpop.f32.mrb[0].mxu0
        %v1355 = vadd.f32 0.0, %v1354
        %v1356 = vpop.f32.mrb[0].mxu0
        %v1357 = vadd.f32 0.0, %v1356
        %v1358 = vpop.f32.mrb[0].mxu0
        %v1359 = vadd.f32 0.0, %v1358
        %v1360 = vpop.f32.mrb[0].mxu0
        %v1361 = vadd.f32 0.0, %v1360
        %1362 = vmatprep.mubr.bf16.mxu0 0
        %1363 = vmatmul.mubr.bf16.gmra.mrb[0].mxu0 %v1021
        %v1364 = vpop.f32.mrb[0].mxu0
        %v1365 = vadd.f32 0.0, %v1364
        %v1366 = vpop.f32.mrb[0].mxu0
        %v1367 = vadd.f32 0.0, %v1366
        %v1368 = vpop.f32.mrb[0].mxu0
        %v1369 = vadd.f32 0.0, %v1368
        %v1370 = vpop.f32.mrb[0].mxu0
        %v1371 = vadd.f32 0.0, %v1370
        %1372 = vmatprep.mubr.bf16.mxu0 0
        %1373 = vmatmul.mubr.bf16.gmra.mrb[0].mxu0 %v1024
        %v1374 = vpop.f32.mrb[0].mxu0
        %v1375 = vadd.f32 0.0, %v1374
        %v1376 = vpop.f32.mrb[0].mxu0
        %v1377 = vadd.f32 0.0, %v1376
        %v1378 = vpop.f32.mrb[0].mxu0
        %v1379 = vadd.f32 0.0, %v1378
        %v1380 = vpop.f32.mrb[0].mxu0
        %v1381 = vadd.f32 0.0, %v1380
        %1382 = vmatprep.mubr.bf16.mxu0 0
        %1383 = vmatmul.mubr.bf16.gmra.mrb[0].mxu0 %v1027
        %v1384 = vpop.f32.mrb[0].mxu0
        %v1385 = vadd.f32 0.0, %v1384
        %v1386 = vpop.f32.mrb[0].mxu0
        %v1387 = vadd.f32 0.0, %v1386
        %v1388 = vpop.f32.mrb[0].mxu0
        %v1389 = vadd.f32 0.0, %v1388
        %v1390 = vpop.f32.mrb[0].mxu0
        %v1391 = vadd.f32 0.0, %v1390
        %1392 = vmatprep.mubr.bf16.mxu0 0
        %1393 = vmatmul.mubr.bf16.gmra.mrb[0].mxu0 %v1030
        %v1394 = vpop.f32.mrb[0].mxu0
        %v1395 = vadd.f32 0.0, %v1394
        %v1396 = vpop.f32.mrb[0].mxu0
        %v1397 = vadd.f32 0.0, %v1396
        %v1398 = vpop.f32.mrb[0].mxu0
        %v1399 = vadd.f32 0.0, %v1398
        %v1400 = vpop.f32.mrb[0].mxu0
        %v1401 = vadd.f32 0.0, %v1400
        %1402 = vmatprep.mubr.bf16.mxu0 0
        %1403 = vmatmul.mubr.bf16.gmra.mrb[0].mxu0 %v1033
        %v1404 = vpop.f32.mrb[0].mxu0
        %v1405 = vadd.f32 0.0, %v1404
        %v1406 = vpop.f32.mrb[0].mxu0
        %v1407 = vadd.f32 0.0, %v1406
        %v1408 = vpop.f32.mrb[0].mxu0
        %v1409 = vadd.f32 0.0, %v1408
        %v1410 = vpop.f32.mrb[0].mxu0
        %v1411 = vadd.f32 0.0, %v1410
        %1412 = vmatprep.mubr.bf16.mxu0 0
        %1413 = vmatmul.mubr.bf16.gmra.mrb[0].mxu0 %v1036
        %v1414 = vpop.f32.mrb[0].mxu0
        %v1415 = vadd.f32 0.0, %v1414
        %v1416 = vpop.f32.mrb[0].mxu0
        %v1417 = vadd.f32 0.0, %v1416
        %v1418 = vpop.f32.mrb[0].mxu0
        %v1419 = vadd.f32 0.0, %v1418
        %v1420 = vpop.f32.mrb[0].mxu0
        %v1421 = vadd.f32 0.0, %v1420
        %1422 = vmatprep.mubr.bf16.mxu0 0
        %1423 = vmatmul.mubr.bf16.gmra.mrb[0].mxu0 %v1039
        %v1424 = vpop.f32.mrb[0].mxu0
        %v1425 = vadd.f32 0.0, %v1424
        %v1426 = vpop.f32.mrb[0].mxu0
        %v1427 = vadd.f32 0.0, %v1426
        %v1428 = vpop.f32.mrb[0].mxu0
        %v1429 = vadd.f32 0.0, %v1428
        %v1430 = vpop.f32.mrb[0].mxu0
        %v1431 = vadd.f32 0.0, %v1430
        %1432 = vmatprep.mubr.bf16.mxu0 0
        %1433 = vmatmul.mubr.bf16.gmra.mrb[0].mxu0 %v1042
        %v1434 = vpop.f32.mrb[0].mxu0
        %v1435 = vadd.f32 0.0, %v1434
        %v1436 = vpop.f32.mrb[0].mxu0
        %v1437 = vadd.f32 0.0, %v1436
        %v1438 = vpop.f32.mrb[0].mxu0
        %v1439 = vadd.f32 0.0, %v1438
        %v1440 = vpop.f32.mrb[0].mxu0
        %v1441 = vadd.f32 0.0, %v1440
        %1442 = vmatprep.mubr.bf16.mxu0 0
        %1443 = vmatmul.mubr.bf16.gmra.mrb[0].mxu0 %v1045
        %v1444 = vpop.f32.mrb[0].mxu0
        %v1445 = vadd.f32 0.0, %v1444
        %v1446 = vpop.f32.mrb[0].mxu0
        %v1447 = vadd.f32 0.0, %v1446
        %v1448 = vpop.f32.mrb[0].mxu0
        %v1449 = vadd.f32 0.0, %v1448
        %v1450 = vpop.f32.mrb[0].mxu0
        %v1451 = vadd.f32 0.0, %v1450
        %1452 = vmatprep.mubr.bf16.mxu0 0
        %1453 = vmatmul.mubr.bf16.gmra.mrb[0].mxu0 %v1048
        %v1454 = vpop.f32.mrb[0].mxu0
        %v1455 = vadd.f32 0.0, %v1454
        %v1456 = vpop.f32.mrb[0].mxu0
        %v1457 = vadd.f32 0.0, %v1456
        %v1458 = vpop.f32.mrb[0].mxu0
        %v1459 = vadd.f32 0.0, %v1458
        %v1460 = vpop.f32.mrb[0].mxu0
        %v1461 = vadd.f32 0.0, %v1460
        %1462 = vmatprep.mubr.bf16.mxu0 0
        %1463 = vmatmul.mubr.bf16.gmra.mrb[0].mxu0 %v1051
        %v1464 = vpop.f32.mrb[0].mxu0
        %v1465 = vadd.f32 0.0, %v1464
        %v1466 = vpop.f32.mrb[0].mxu0
        %v1467 = vadd.f32 0.0, %v1466
        %v1468 = vpop.f32.mrb[0].mxu0
        %v1469 = vadd.f32 0.0, %v1468
        %v1470 = vpop.f32.mrb[0].mxu0
        %v1471 = vadd.f32 0.0, %v1470
        %1472 = vmatprep.mubr.bf16.mxu0 0
        %1473 = vmatmul.mubr.bf16.gmra.mrb[0].mxu0 %v1054
        %v1474 = vpop.f32.mrb[0].mxu0
        %v1475 = vadd.f32 0.0, %v1474
        %v1476 = vpop.f32.mrb[0].mxu0
        %v1477 = vadd.f32 0.0, %v1476
        %v1478 = vpop.f32.mrb[0].mxu0
        %v1479 = vadd.f32 0.0, %v1478
        %v1480 = vpop.f32.mrb[0].mxu0
        %v1481 = vadd.f32 0.0, %v1480
        %1482 = vmatprep.mubr.bf16.mxu0 0
        %1483 = vmatmul.mubr.bf16.gmra.mrb[0].mxu0 %v1057
        %v1484 = vpop.f32.mrb[0].mxu0
        %v1485 = vadd.f32 0.0, %v1484
        %v1486 = vpop.f32.mrb[0].mxu0
        %v1487 = vadd.f32 0.0, %v1486
        %v1488 = vpop.f32.mrb[0].mxu0
        %v1489 = vadd.f32 0.0, %v1488
        %v1490 = vpop.f32.mrb[0].mxu0
        %v1491 = vadd.f32 0.0, %v1490
        %1492 = vmatprep.mubr.bf16.mxu0 0
        %1493 = vmatmul.mubr.bf16.gmra.mrb[0].mxu0 %v1060
        %v1494 = vpop.f32.mrb[0].mxu0
        %v1495 = vadd.f32 0.0, %v1494
        %v1496 = vpop.f32.mrb[0].mxu0
        %v1497 = vadd.f32 0.0, %v1496
        %v1498 = vpop.f32.mrb[0].mxu0
        %v1499 = vadd.f32 0.0, %v1498
        %v1500 = vpop.f32.mrb[0].mxu0
        %v1501 = vadd.f32 0.0, %v1500
        %1502 = vmatprep.mubr.bf16.mxu0 0
        %1503 = vmatmul.mubr.bf16.gmra.mrb[0].mxu0 %v1063
        %v1504 = vpop.f32.mrb[0].mxu0
        %v1505 = vadd.f32 0.0, %v1504
        %v1506 = vpop.f32.mrb[0].mxu0
        %v1507 = vadd.f32 0.0, %v1506
        %v1508 = vpop.f32.mrb[0].mxu0
        %v1509 = vadd.f32 0.0, %v1508
        %v1510 = vpop.f32.mrb[0].mxu0
        %v1511 = vadd.f32 0.0, %v1510
        %1512 = vmatprep.mubr.bf16.mxu0 0
        %1513 = vmatmul.mubr.bf16.gmra.mrb[0].mxu0 %v1066
        %v1514 = vpop.f32.mrb[0].mxu0
        %v1515 = vadd.f32 0.0, %v1514
        %v1516 = vpop.f32.mrb[0].mxu0
        %v1517 = vadd.f32 0.0, %v1516
        %v1518 = vpop.f32.mrb[0].mxu0
        %v1519 = vadd.f32 0.0, %v1518
        %v1520 = vpop.f32.mrb[0].mxu0
        %v1521 = vadd.f32 0.0, %v1520
        %1522 = vmatprep.mubr.bf16.mxu0 0
        %1523 = vmatmul.mubr.bf16.gmra.mrb[0].mxu0 %v1069
        %v1524 = vpop.f32.mrb[0].mxu0
        %v1525 = vadd.f32 0.0, %v1524
        %v1526 = vpop.f32.mrb[0].mxu0
        %v1527 = vadd.f32 0.0, %v1526
        %v1528 = vpop.f32.mrb[0].mxu0
        %v1529 = vadd.f32 0.0, %v1528
        %v1530 = vpop.f32.mrb[0].mxu0
        %v1531 = vadd.f32 0.0, %v1530
        %1532 = vmatprep.mubr.bf16.mxu0 0
        %1533 = vmatmul.mubr.bf16.gmra.mrb[0].mxu0 %v1072
        %v1534 = vpop.f32.mrb[0].mxu0
        %v1535 = vadd.f32 0.0, %v1534
        %v1536 = vpop.f32.mrb[0].mxu0
        %v1537 = vadd.f32 0.0, %v1536
        %v1538 = vpop.f32.mrb[0].mxu0
        %v1539 = vadd.f32 0.0, %v1538
        %v1540 = vpop.f32.mrb[0].mxu0
        %v1541 = vadd.f32 0.0, %v1540
        %1542 = vmatprep.mubr.bf16.mxu0 0
        %1543 = vmatmul.mubr.bf16.gmra.mrb[0].mxu0 %v1075
        %v1544 = vpop.f32.mrb[0].mxu0
        %v1545 = vadd.f32 0.0, %v1544
        %v1546 = vpop.f32.mrb[0].mxu0
        %v1547 = vadd.f32 0.0, %v1546
        %v1548 = vpop.f32.mrb[0].mxu0
        %v1549 = vadd.f32 0.0, %v1548
        %v1550 = vpop.f32.mrb[0].mxu0
        %v1551 = vadd.f32 0.0, %v1550
        %1552 = vmatprep.mubr.bf16.mxu0 0
        %1553 = vmatmul.mubr.bf16.gmra.mrb[0].mxu0 %v1078
        %v1554 = vpop.f32.mrb[0].mxu0
        %v1555 = vadd.f32 0.0, %v1554
        %v1556 = vpop.f32.mrb[0].mxu0
        %v1557 = vadd.f32 0.0, %v1556
        %v1558 = vpop.f32.mrb[0].mxu0
        %v1559 = vadd.f32 0.0, %v1558
        %v1560 = vpop.f32.mrb[0].mxu0
        %v1561 = vadd.f32 0.0, %v1560
        %1562 = vmatprep.mubr.bf16.mxu0 0
        %1563 = vmatmul.mubr.bf16.gmra.mrb[0].mxu0 %v1081
        %v1564 = vpop.f32.mrb[0].mxu0
        %v1565 = vadd.f32 0.0, %v1564
        %v1566 = vpop.f32.mrb[0].mxu0
        %v1567 = vadd.f32 0.0, %v1566
        %v1568 = vpop.f32.mrb[0].mxu0
        %v1569 = vadd.f32 0.0, %v1568
        %v1570 = vpop.f32.mrb[0].mxu0
        %v1571 = vadd.f32 0.0, %v1570
        %1572 = vmatprep.mubr.bf16.mxu0 0
        %1573 = vmatmul.mubr.bf16.gmra.mrb[0].mxu0 %v1084
        %v1574 = vpop.f32.mrb[0].mxu0
        %v1575 = vadd.f32 0.0, %v1574
        %v1576 = vpop.f32.mrb[0].mxu0
        %v1577 = vadd.f32 0.0, %v1576
        %v1578 = vpop.f32.mrb[0].mxu0
        %v1579 = vadd.f32 0.0, %v1578
        %v1580 = vpop.f32.mrb[0].mxu0
        %v1581 = vadd.f32 0.0, %v1580
        %1582 = vmatprep.mubr.bf16.mxu0 0
        %1583 = vmatmul.mubr.bf16.gmra.mrb[0].mxu0 %v1087
        %v1584 = vpop.f32.mrb[0].mxu0
        %v1585 = vadd.f32 0.0, %v1584
        %v1586 = vpop.f32.mrb[0].mxu0
        %v1587 = vadd.f32 0.0, %v1586
        %v1588 = vpop.f32.mrb[0].mxu0
        %v1589 = vadd.f32 0.0, %v1588
        %v1590 = vpop.f32.mrb[0].mxu0
        %v1591 = vadd.f32 0.0, %v1590
        %1592 = vmatprep.mubr.bf16.mxu0 0
        %1593 = vmatmul.mubr.bf16.gmra.mrb[0].mxu0 %v1090
        %v1594 = vpop.f32.mrb[0].mxu0
        %v1595 = vadd.f32 0.0, %v1594
        %v1596 = vpop.f32.mrb[0].mxu0
        %v1597 = vadd.f32 0.0, %v1596
        %v1598 = vpop.f32.mrb[0].mxu0
        %v1599 = vadd.f32 0.0, %v1598
        %v1600 = vpop.f32.mrb[0].mxu0
        %v1601 = vadd.f32 0.0, %v1600
        %1602 = vmatprep.mubr.bf16.mxu0 0
        %1603 = vmatmul.mubr.bf16.gmra.mrb[0].mxu0 %v1093
        %v1604 = vpop.f32.mrb[0].mxu0
        %v1605 = vadd.f32 0.0, %v1604
        %v1606 = vpop.f32.mrb[0].mxu0
        %v1607 = vadd.f32 0.0, %v1606
        %v1608 = vpop.f32.mrb[0].mxu0
        %v1609 = vadd.f32 0.0, %v1608
        %v1610 = vpop.f32.mrb[0].mxu0
        %v1611 = vadd.f32 0.0, %v1610
        %1612 = vmatprep.mubr.bf16.mxu0 0
        %1613 = vmatmul.mubr.bf16.gmra.mrb[0].mxu0 %v1096
        %v1614 = vpop.f32.mrb[0].mxu0
        %v1615 = vadd.f32 0.0, %v1614
        %v1616 = vpop.f32.mrb[0].mxu0
        %v1617 = vadd.f32 0.0, %v1616
        %v1618 = vpop.f32.mrb[0].mxu0
        %v1619 = vadd.f32 0.0, %v1618
        %v1620 = vpop.f32.mrb[0].mxu0
        %v1621 = vadd.f32 0.0, %v1620
        %1622 = vmatprep.mubr.bf16.mxu0 0
        %1623 = vmatmul.mubr.bf16.gmra.mrb[0].mxu0 %v1099
        %v1624 = vpop.f32.mrb[0].mxu0
        %v1625 = vadd.f32 0.0, %v1624
        %v1626 = vpop.f32.mrb[0].mxu0
        %v1627 = vadd.f32 0.0, %v1626
        %v1628 = vpop.f32.mrb[0].mxu0
        %v1629 = vadd.f32 0.0, %v1628
        %v1630 = vpop.f32.mrb[0].mxu0
        %v1631 = vadd.f32 0.0, %v1630
        %1632 = vmatprep.mubr.bf16.mxu0 0
        %1633 = vmatmul.mubr.bf16.gmra.mrb[0].mxu0 %v1102
        %v1634 = vpop.f32.mrb[0].mxu0
        %v1635 = vadd.f32 0.0, %v1634
        %v1636 = vpop.f32.mrb[0].mxu0
        %v1637 = vadd.f32 0.0, %v1636
        %v1638 = vpop.f32.mrb[0].mxu0
        %v1639 = vadd.f32 0.0, %v1638
        %v1640 = vpop.f32.mrb[0].mxu0
        %v1641 = vadd.f32 0.0, %v1640
        %1642 = vmatprep.mubr.bf16.mxu0 0
        %1643 = vmatmul.mubr.bf16.gmra.mrb[0].mxu0 %v1105
        %v1644 = vpop.f32.mrb[0].mxu0
        %v1645 = vadd.f32 0.0, %v1644
        %v1646 = vpop.f32.mrb[0].mxu0
        %v1647 = vadd.f32 0.0, %v1646
        %v1648 = vpop.f32.mrb[0].mxu0
        %v1649 = vadd.f32 0.0, %v1648
        %v1650 = vpop.f32.mrb[0].mxu0
        %v1651 = vadd.f32 0.0, %v1650
        %1652 = vmatprep.mubr.bf16.mxu0 0
        %1653 = vmatmul.mubr.bf16.gmra.mrb[0].mxu0 %v1108
        %v1654 = vpop.f32.mrb[0].mxu0
        %v1655 = vadd.f32 0.0, %v1654
        %v1656 = vpop.f32.mrb[0].mxu0
        %v1657 = vadd.f32 0.0, %v1656
        %v1658 = vpop.f32.mrb[0].mxu0
        %v1659 = vadd.f32 0.0, %v1658
        %v1660 = vpop.f32.mrb[0].mxu0
        %v1661 = vadd.f32 0.0, %v1660
        %1662 = vmatprep.mubr.bf16.mxu0 0
        %1663 = vmatmul.mubr.bf16.gmra.mrb[0].mxu0 %v1111
        %v1664 = vpop.f32.mrb[0].mxu0
        %v1665 = vadd.f32 0.0, %v1664
        %v1666 = vpop.f32.mrb[0].mxu0
        %v1667 = vadd.f32 0.0, %v1666
        %v1668 = vpop.f32.mrb[0].mxu0
        %v1669 = vadd.f32 0.0, %v1668
        %v1670 = vpop.f32.mrb[0].mxu0
        %v1671 = vadd.f32 0.0, %v1670
        %1672 = vmatprep.mubr.bf16.mxu0 0
        %1673 = vmatmul.mubr.bf16.gmra.mrb[0].mxu0 %v1114
        %v1674 = vpop.f32.mrb[0].mxu0
        %v1675 = vadd.f32 0.0, %v1674
        %v1676 = vpop.f32.mrb[0].mxu0
        %v1677 = vadd.f32 0.0, %v1676
        %v1678 = vpop.f32.mrb[0].mxu0
        %v1679 = vadd.f32 0.0, %v1678
        %v1680 = vpop.f32.mrb[0].mxu0
        %v1681 = vadd.f32 0.0, %v1680
        %1682 = vmatprep.mubr.bf16.mxu0 0
        %1683 = vmatmul.mubr.bf16.gmra.mrb[0].mxu0 %v1117
        %v1684 = vpop.f32.mrb[0].mxu0
        %v1685 = vadd.f32 0.0, %v1684
        %v1686 = vpop.f32.mrb[0].mxu0
        %v1687 = vadd.f32 0.0, %v1686
        %v1688 = vpop.f32.mrb[0].mxu0
        %v1689 = vadd.f32 0.0, %v1688
        %v1690 = vpop.f32.mrb[0].mxu0
        %v1691 = vadd.f32 0.0, %v1690
        %1692 = vmatprep.mubr.bf16.mxu0 0
        %1693 = vmatmul.mubr.bf16.gmra.mrb[0].mxu0 %v1120
        %v1694 = vpop.f32.mrb[0].mxu0
        %v1695 = vadd.f32 0.0, %v1694
        %v1696 = vpop.f32.mrb[0].mxu0
        %v1697 = vadd.f32 0.0, %v1696
        %v1698 = vpop.f32.mrb[0].mxu0
        %v1699 = vadd.f32 0.0, %v1698
        %v1700 = vpop.f32.mrb[0].mxu0
        %v1701 = vadd.f32 0.0, %v1700
        %1702 = vmatprep.mubr.bf16.mxu0 0
        %1703 = vmatmul.mubr.bf16.gmra.mrb[0].mxu0 %v1123
        %v1704 = vpop.f32.mrb[0].mxu0
        %v1705 = vadd.f32 0.0, %v1704
        %v1706 = vpop.f32.mrb[0].mxu0
        %v1707 = vadd.f32 0.0, %v1706
        %v1708 = vpop.f32.mrb[0].mxu0
        %v1709 = vadd.f32 0.0, %v1708
        %v1710 = vpop.f32.mrb[0].mxu0
        %v1711 = vadd.f32 0.0, %v1710
        %1712 = vmatprep.mubr.bf16.mxu0 0
        %1713 = vmatmul.mubr.bf16.gmra.mrb[0].mxu0 %v1126
        %v1714 = vpop.f32.mrb[0].mxu0
        %v1715 = vadd.f32 0.0, %v1714
        %v1716 = vpop.f32.mrb[0].mxu0
        %v1717 = vadd.f32 0.0, %v1716
        %v1718 = vpop.f32.mrb[0].mxu0
        %v1719 = vadd.f32 0.0, %v1718
        %v1720 = vpop.f32.mrb[0].mxu0
        %v1721 = vadd.f32 0.0, %v1720
        %1722 = vmatprep.mubr.bf16.mxu0 0
        %1723 = vmatmul.mubr.bf16.gmra.mrb[0].mxu0 %v1129
        %v1724 = vpop.f32.mrb[0].mxu0
        %v1725 = vadd.f32 0.0, %v1724
        %v1726 = vpop.f32.mrb[0].mxu0
        %v1727 = vadd.f32 0.0, %v1726
        %v1728 = vpop.f32.mrb[0].mxu0
        %v1729 = vadd.f32 0.0, %v1728
        %v1730 = vpop.f32.mrb[0].mxu0
        %v1731 = vadd.f32 0.0, %v1730
        %1732 = vmatprep.mubr.bf16.mxu0 0
        %1733 = vmatmul.mubr.bf16.gmra.mrb[0].mxu0 %v1132
        %v1734 = vpop.f32.mrb[0].mxu0
        %v1735 = vadd.f32 0.0, %v1734
        %v1736 = vpop.f32.mrb[0].mxu0
        %v1737 = vadd.f32 0.0, %v1736
        %v1738 = vpop.f32.mrb[0].mxu0
        %v1739 = vadd.f32 0.0, %v1738
        %v1740 = vpop.f32.mrb[0].mxu0
        %v1741 = vadd.f32 0.0, %v1740
        %1742 = vmatprep.mubr.bf16.mxu0 0
        %1743 = vmatmul.mubr.bf16.gmra.mrb[0].mxu0 %v1135
        %v1744 = vpop.f32.mrb[0].mxu0
        %v1745 = vadd.f32 0.0, %v1744
        %v1746 = vpop.f32.mrb[0].mxu0
        %v1747 = vadd.f32 0.0, %v1746
        %v1748 = vpop.f32.mrb[0].mxu0
        %v1749 = vadd.f32 0.0, %v1748
        %v1750 = vpop.f32.mrb[0].mxu0
        %v1751 = vadd.f32 0.0, %v1750
        %1752 = vmatprep.mubr.bf16.mxu0 0
        %1753 = vmatmul.mubr.bf16.gmra.mrb[0].mxu0 %v1138
        %v1754 = vpop.f32.mrb[0].mxu0
        %v1755 = vadd.f32 0.0, %v1754
        %v1756 = vpop.f32.mrb[0].mxu0
        %v1757 = vadd.f32 0.0, %v1756
        %v1758 = vpop.f32.mrb[0].mxu0
        %v1759 = vadd.f32 0.0, %v1758
        %v1760 = vpop.f32.mrb[0].mxu0
        %v1761 = vadd.f32 0.0, %v1760
        %1762 = vmatprep.mubr.bf16.mxu0 0
        %1763 = vmatmul.mubr.bf16.gmra.mrb[0].mxu0 %v1141
        %v1764 = vpop.f32.mrb[0].mxu0
        %v1765 = vadd.f32 0.0, %v1764
        %v1766 = vpop.f32.mrb[0].mxu0
        %v1767 = vadd.f32 0.0, %v1766
        %v1768 = vpop.f32.mrb[0].mxu0
        %v1769 = vadd.f32 0.0, %v1768
        %v1770 = vpop.f32.mrb[0].mxu0
        %v1771 = vadd.f32 0.0, %v1770
        %1772 = vmatprep.mubr.bf16.mxu0 0
        %1773 = vmatmul.mubr.bf16.gmra.mrb[0].mxu0 %v1144
        %v1774 = vpop.f32.mrb[0].mxu0
        %v1775 = vadd.f32 0.0, %v1774
        %v1776 = vpop.f32.mrb[0].mxu0
        %v1777 = vadd.f32 0.0, %v1776
        %v1778 = vpop.f32.mrb[0].mxu0
        %v1779 = vadd.f32 0.0, %v1778
        %v1780 = vpop.f32.mrb[0].mxu0
        %v1781 = vadd.f32 0.0, %v1780
        %1782 = vmatprep.mubr.bf16.mxu0 0
        %1783 = vmatmul.mubr.bf16.gmra.mrb[0].mxu0 %v1147
        %v1784 = vpop.f32.mrb[0].mxu0
        %v1785 = vadd.f32 0.0, %v1784
        %v1786 = vpop.f32.mrb[0].mxu0
        %v1787 = vadd.f32 0.0, %v1786
        %v1788 = vpop.f32.mrb[0].mxu0
        %v1789 = vadd.f32 0.0, %v1788
        %v1790 = vpop.f32.mrb[0].mxu0
        %v1791 = vadd.f32 0.0, %v1790
        %1792 = vmatprep.mubr.bf16.mxu0 0
        %1793 = vmatmul.mubr.bf16.gmra.mrb[0].mxu0 %v1150
        %v1794 = vpop.f32.mrb[0].mxu0
        %v1795 = vadd.f32 0.0, %v1794
        %v1796 = vpop.f32.mrb[0].mxu0
        %v1797 = vadd.f32 0.0, %v1796
        %v1798 = vpop.f32.mrb[0].mxu0
        %v1799 = vadd.f32 0.0, %v1798
        %v1800 = vpop.f32.mrb[0].mxu0
        %v1801 = vadd.f32 0.0, %v1800
        %1802 = vmatprep.mubr.bf16.mxu0 0
        %1803 = vmatmul.mubr.bf16.gmra.mrb[0].mxu0 %v1153
        %v1804 = vpop.f32.mrb[0].mxu0
        %v1805 = vadd.f32 0.0, %v1804
        %v1806 = vpop.f32.mrb[0].mxu0
        %v1807 = vadd.f32 0.0, %v1806
        %v1808 = vpop.f32.mrb[0].mxu0
        %v1809 = vadd.f32 0.0, %v1808
        %v1810 = vpop.f32.mrb[0].mxu0
        %v1811 = vadd.f32 0.0, %v1810
        %1812 = vmatprep.mubr.bf16.mxu0 0
        %1813 = vmatmul.mubr.bf16.gmra.mrb[0].mxu0 %v1156
        %v1814 = vpop.f32.mrb[0].mxu0
        %v1815 = vadd.f32 0.0, %v1814
        %v1816 = vpop.f32.mrb[0].mxu0
        %v1817 = vadd.f32 0.0, %v1816
        %v1818 = vpop.f32.mrb[0].mxu0
        %v1819 = vadd.f32 0.0, %v1818
        %v1820 = vpop.f32.mrb[0].mxu0
        %v1821 = vadd.f32 0.0, %v1820
        %1822 = vmatprep.mubr.bf16.mxu0 0
        %1823 = vmatmul.mubr.bf16.gmra.mrb[0].mxu0 %v1159
        %v1824 = vpop.f32.mrb[0].mxu0
        %v1825 = vadd.f32 0.0, %v1824
        %v1826 = vpop.f32.mrb[0].mxu0
        %v1827 = vadd.f32 0.0, %v1826
        %v1828 = vpop.f32.mrb[0].mxu0
        %v1829 = vadd.f32 0.0, %v1828
        %v1830 = vpop.f32.mrb[0].mxu0
        %v1831 = vadd.f32 0.0, %v1830
        %1832 = vmatprep.mubr.bf16.mxu0 0
        %1833 = vmatmul.mubr.bf16.gmra.mrb[0].mxu0 %v1162
        %v1834 = vpop.f32.mrb[0].mxu0
        %v1835 = vadd.f32 0.0, %v1834
        %v1836 = vpop.f32.mrb[0].mxu0
        %v1837 = vadd.f32 0.0, %v1836
        %v1838 = vpop.f32.mrb[0].mxu0
        %v1839 = vadd.f32 0.0, %v1838
        %v1840 = vpop.f32.mrb[0].mxu0
        %v1841 = vadd.f32 0.0, %v1840
        %1842 = vmatprep.mubr.bf16.mxu0 0
        %1843 = vmatmul.mubr.bf16.gmra.mrb[0].mxu0 %v1165
        %v1844 = vpop.f32.mrb[0].mxu0
        %v1845 = vadd.f32 0.0, %v1844
        %v1846 = vpop.f32.mrb[0].mxu0
        %v1847 = vadd.f32 0.0, %v1846
        %v1848 = vpop.f32.mrb[0].mxu0
        %v1849 = vadd.f32 0.0, %v1848
        %v1850 = vpop.f32.mrb[0].mxu0
        %v1851 = vadd.f32 0.0, %v1850
        %1852 = vdwg.mxu0
        %1853 = vmatprep.subr.bf16.mxu0 %v925
        %1854 = vmatpush1.bf16.msra.mxu0 %v924
        %1855 = vmatprep.subr.bf16.mxu0 %v929
        %1856 = vmatpush1.bf16.msra.mxu0 %v928
        %1857 = vmatprep.subr.bf16.mxu0 %v933
        %1858 = vmatpush1.bf16.msra.mxu0 %v932
        %1859 = vmatprep.subr.bf16.mxu0 %v937
        %1860 = vmatpush1.bf16.msra.mxu0 %v936
        %1861 = vmatprep.subr.bf16.mxu0 %v941
        %1862 = vmatpush1.bf16.msra.mxu0 %v940
        %1863 = vmatprep.subr.bf16.mxu0 %v945
        %1864 = vmatpush1.bf16.msra.mxu0 %v944
        %1865 = vmatprep.subr.bf16.mxu0 %v1178
        %1866 = vmatpush1.bf16.msra.mxu0 %v1175
        %1867 = vmatprep.subr.bf16.mxu0 0
        %1868 = vmatpush1.bf16.msra.mxu0 0
        %1869 = vmatprep.subr.bf16.mxu0 0
        %1870 = vmatpush1.bf16.msra.mxu0 0
        %1871 = vmatprep.subr.bf16.mxu0 0
        %1872 = vmatpush1.bf16.msra.mxu0 0
        %1873 = vmatprep.subr.bf16.mxu0 0
        %1874 = vmatpush1.bf16.msra.mxu0 0
        %1875 = vmatprep.subr.bf16.mxu0 0
        %1876 = vmatpush1.bf16.msra.mxu0 0
        %1877 = vmatprep.subr.bf16.mxu0 0
        %1878 = vmatpush1.bf16.msra.mxu0 0
        %1879 = vmatprep.subr.bf16.mxu0 0
        %1880 = vmatpush1.bf16.msra.mxu0 0
        %1881 = vmatprep.subr.bf16.mxu0 0
        %1882 = vmatpush1.bf16.msra.mxu0 0
        %1883 = vmatprep.subr.bf16.mxu0 0
        %1884 = vmatpush1.bf16.msra.mxu0 0
        %1885 = vmatprep.mubr.bf16.mxu0 0
        %1886 = vmatmul.mubr.bf16.gmra.mrb[0].mxu0 %v976
        %v1887 = vpop.f32.mrb[0].mxu0
        %v1888 = vadd.f32 0.0, %v1887
        %v1889 = vpop.f32.mrb[0].mxu0
        %v1890 = vadd.f32 0.0, %v1889
        %v1891 = vpop.f32.mrb[0].mxu0
        %v1892 = vadd.f32 0.0, %v1891
        %v1893 = vpop.f32.mrb[0].mxu0
        %v1894 = vadd.f32 0.0, %v1893
        %1895 = vmatprep.mubr.bf16.mxu0 0
        %1896 = vmatmul.mubr.bf16.gmra.mrb[0].mxu0 %v979
        %v1897 = vpop.f32.mrb[0].mxu0
        %v1898 = vadd.f32 0.0, %v1897
        %v1899 = vpop.f32.mrb[0].mxu0
        %v1900 = vadd.f32 0.0, %v1899
        %v1901 = vpop.f32.mrb[0].mxu0
        %v1902 = vadd.f32 0.0, %v1901
        %v1903 = vpop.f32.mrb[0].mxu0
        %v1904 = vadd.f32 0.0, %v1903
        %1905 = vmatprep.mubr.bf16.mxu0 0
        %1906 = vmatmul.mubr.bf16.gmra.mrb[0].mxu0 %v982
        %v1907 = vpop.f32.mrb[0].mxu0
        %v1908 = vadd.f32 0.0, %v1907
        %v1909 = vpop.f32.mrb[0].mxu0
        %v1910 = vadd.f32 0.0, %v1909
        %v1911 = vpop.f32.mrb[0].mxu0
        %v1912 = vadd.f32 0.0, %v1911
        %v1913 = vpop.f32.mrb[0].mxu0
        %v1914 = vadd.f32 0.0, %v1913
        %1915 = vmatprep.mubr.bf16.mxu0 0
        %1916 = vmatmul.mubr.bf16.gmra.mrb[0].mxu0 %v985
        %v1917 = vpop.f32.mrb[0].mxu0
        %v1918 = vadd.f32 0.0, %v1917
        %v1919 = vpop.f32.mrb[0].mxu0
        %v1920 = vadd.f32 0.0, %v1919
        %v1921 = vpop.f32.mrb[0].mxu0
        %v1922 = vadd.f32 0.0, %v1921
        %v1923 = vpop.f32.mrb[0].mxu0
        %v1924 = vadd.f32 0.0, %v1923
        %1925 = vmatprep.mubr.bf16.mxu0 0
        %1926 = vmatmul.mubr.bf16.gmra.mrb[0].mxu0 %v988
        %v1927 = vpop.f32.mrb[0].mxu0
        %v1928 = vadd.f32 0.0, %v1927
        %v1929 = vpop.f32.mrb[0].mxu0
        %v1930 = vadd.f32 0.0, %v1929
        %v1931 = vpop.f32.mrb[0].mxu0
        %v1932 = vadd.f32 0.0, %v1931
        %v1933 = vpop.f32.mrb[0].mxu0
        %v1934 = vadd.f32 0.0, %v1933
        %1935 = vmatprep.mubr.bf16.mxu0 0
        %1936 = vmatmul.mubr.bf16.gmra.mrb[0].mxu0 %v991
        %v1937 = vpop.f32.mrb[0].mxu0
        %v1938 = vadd.f32 0.0, %v1937
        %v1939 = vpop.f32.mrb[0].mxu0
        %v1940 = vadd.f32 0.0, %v1939
        %v1941 = vpop.f32.mrb[0].mxu0
        %v1942 = vadd.f32 0.0, %v1941
        %v1943 = vpop.f32.mrb[0].mxu0
        %v1944 = vadd.f32 0.0, %v1943
        %1945 = vmatprep.mubr.bf16.mxu0 0
        %1946 = vmatmul.mubr.bf16.gmra.mrb[0].mxu0 %v994
        %v1947 = vpop.f32.mrb[0].mxu0
        %v1948 = vadd.f32 0.0, %v1947
        %v1949 = vpop.f32.mrb[0].mxu0
        %v1950 = vadd.f32 0.0, %v1949
        %v1951 = vpop.f32.mrb[0].mxu0
        %v1952 = vadd.f32 0.0, %v1951
        %v1953 = vpop.f32.mrb[0].mxu0
        %v1954 = vadd.f32 0.0, %v1953
        %1955 = vmatprep.mubr.bf16.mxu0 0
        %1956 = vmatmul.mubr.bf16.gmra.mrb[0].mxu0 %v997
        %v1957 = vpop.f32.mrb[0].mxu0
        %v1958 = vadd.f32 0.0, %v1957
        %v1959 = vpop.f32.mrb[0].mxu0
        %v1960 = vadd.f32 0.0, %v1959
        %v1961 = vpop.f32.mrb[0].mxu0
        %v1962 = vadd.f32 0.0, %v1961
        %v1963 = vpop.f32.mrb[0].mxu0
        %v1964 = vadd.f32 0.0, %v1963
        %1965 = vmatprep.mubr.bf16.mxu0 0
        %1966 = vmatmul.mubr.bf16.gmra.mrb[0].mxu0 %v1000
        %v1967 = vpop.f32.mrb[0].mxu0
        %v1968 = vadd.f32 0.0, %v1967
        %v1969 = vpop.f32.mrb[0].mxu0
        %v1970 = vadd.f32 0.0, %v1969
        %v1971 = vpop.f32.mrb[0].mxu0
        %v1972 = vadd.f32 0.0, %v1971
        %v1973 = vpop.f32.mrb[0].mxu0
        %v1974 = vadd.f32 0.0, %v1973
        %1975 = vmatprep.mubr.bf16.mxu0 0
        %1976 = vmatmul.mubr.bf16.gmra.mrb[0].mxu0 %v1003
        %v1977 = vpop.f32.mrb[0].mxu0
        %v1978 = vadd.f32 0.0, %v1977
        %v1979 = vpop.f32.mrb[0].mxu0
        %v1980 = vadd.f32 0.0, %v1979
        %v1981 = vpop.f32.mrb[0].mxu0
        %v1982 = vadd.f32 0.0, %v1981
        %v1983 = vpop.f32.mrb[0].mxu0
        %v1984 = vadd.f32 0.0, %v1983
        %1985 = vmatprep.mubr.bf16.mxu0 0
        %1986 = vmatmul.mubr.bf16.gmra.mrb[0].mxu0 %v1006
        %v1987 = vpop.f32.mrb[0].mxu0
        %v1988 = vadd.f32 0.0, %v1987
        %v1989 = vpop.f32.mrb[0].mxu0
        %v1990 = vadd.f32 0.0, %v1989
        %v1991 = vpop.f32.mrb[0].mxu0
        %v1992 = vadd.f32 0.0, %v1991
        %v1993 = vpop.f32.mrb[0].mxu0
        %v1994 = vadd.f32 0.0, %v1993
        %1995 = vmatprep.mubr.bf16.mxu0 0
        %1996 = vmatmul.mubr.bf16.gmra.mrb[0].mxu0 %v1009
        %v1997 = vpop.f32.mrb[0].mxu0
        %v1998 = vadd.f32 0.0, %v1997
        %v1999 = vpop.f32.mrb[0].mxu0
        %v2000 = vadd.f32 0.0, %v1999
        %v2001 = vpop.f32.mrb[0].mxu0
        %v2002 = vadd.f32 0.0, %v2001
        %v2003 = vpop.f32.mrb[0].mxu0
        %v2004 = vadd.f32 0.0, %v2003
        %2005 = vmatprep.mubr.bf16.mxu0 0
        %2006 = vmatmul.mubr.bf16.gmra.mrb[0].mxu0 %v1012
        %v2007 = vpop.f32.mrb[0].mxu0
        %v2008 = vadd.f32 0.0, %v2007
        %v2009 = vpop.f32.mrb[0].mxu0
        %v2010 = vadd.f32 0.0, %v2009
        %v2011 = vpop.f32.mrb[0].mxu0
        %v2012 = vadd.f32 0.0, %v2011
        %v2013 = vpop.f32.mrb[0].mxu0
        %v2014 = vadd.f32 0.0, %v2013
        %2015 = vmatprep.mubr.bf16.mxu0 0
        %2016 = vmatmul.mubr.bf16.gmra.mrb[0].mxu0 %v1015
        %v2017 = vpop.f32.mrb[0].mxu0
        %v2018 = vadd.f32 0.0, %v2017
        %v2019 = vpop.f32.mrb[0].mxu0
        %v2020 = vadd.f32 0.0, %v2019
        %v2021 = vpop.f32.mrb[0].mxu0
        %v2022 = vadd.f32 0.0, %v2021
        %v2023 = vpop.f32.mrb[0].mxu0
        %v2024 = vadd.f32 0.0, %v2023
        %2025 = vmatprep.mubr.bf16.mxu0 0
        %2026 = vmatmul.mubr.bf16.gmra.mrb[0].mxu0 %v1018
        %v2027 = vpop.f32.mrb[0].mxu0
        %v2028 = vadd.f32 0.0, %v2027
        %v2029 = vpop.f32.mrb[0].mxu0
        %v2030 = vadd.f32 0.0, %v2029
        %v2031 = vpop.f32.mrb[0].mxu0
        %v2032 = vadd.f32 0.0, %v2031
        %v2033 = vpop.f32.mrb[0].mxu0
        %v2034 = vadd.f32 0.0, %v2033
        %2035 = vmatprep.mubr.bf16.mxu0 0
        %2036 = vmatmul.mubr.bf16.gmra.mrb[0].mxu0 %v1021
        %v2037 = vpop.f32.mrb[0].mxu0
        %v2038 = vadd.f32 0.0, %v2037
        %v2039 = vpop.f32.mrb[0].mxu0
        %v2040 = vadd.f32 0.0, %v2039
        %v2041 = vpop.f32.mrb[0].mxu0
        %v2042 = vadd.f32 0.0, %v2041
        %v2043 = vpop.f32.mrb[0].mxu0
        %v2044 = vadd.f32 0.0, %v2043
        %2045 = vmatprep.mubr.bf16.mxu0 0
        %2046 = vmatmul.mubr.bf16.gmra.mrb[0].mxu0 %v1024
        %v2047 = vpop.f32.mrb[0].mxu0
        %v2048 = vadd.f32 0.0, %v2047
        %v2049 = vpop.f32.mrb[0].mxu0
        %v2050 = vadd.f32 0.0, %v2049
        %v2051 = vpop.f32.mrb[0].mxu0
        %v2052 = vadd.f32 0.0, %v2051
        %v2053 = vpop.f32.mrb[0].mxu0
        %v2054 = vadd.f32 0.0, %v2053
        %2055 = vmatprep.mubr.bf16.mxu0 0
        %2056 = vmatmul.mubr.bf16.gmra.mrb[0].mxu0 %v1027
        %v2057 = vpop.f32.mrb[0].mxu0
        %v2058 = vadd.f32 0.0, %v2057
        %v2059 = vpop.f32.mrb[0].mxu0
        %v2060 = vadd.f32 0.0, %v2059
        %v2061 = vpop.f32.mrb[0].mxu0
        %v2062 = vadd.f32 0.0, %v2061
        %v2063 = vpop.f32.mrb[0].mxu0
        %v2064 = vadd.f32 0.0, %v2063
        %2065 = vmatprep.mubr.bf16.mxu0 0
        %2066 = vmatmul.mubr.bf16.gmra.mrb[0].mxu0 %v1030
        %v2067 = vpop.f32.mrb[0].mxu0
        %v2068 = vadd.f32 0.0, %v2067
        %v2069 = vpop.f32.mrb[0].mxu0
        %v2070 = vadd.f32 0.0, %v2069
        %v2071 = vpop.f32.mrb[0].mxu0
        %v2072 = vadd.f32 0.0, %v2071
        %v2073 = vpop.f32.mrb[0].mxu0
        %v2074 = vadd.f32 0.0, %v2073
        %2075 = vmatprep.mubr.bf16.mxu0 0
        %2076 = vmatmul.mubr.bf16.gmra.mrb[0].mxu0 %v1033
        %v2077 = vpop.f32.mrb[0].mxu0
        %v2078 = vadd.f32 0.0, %v2077
        %v2079 = vpop.f32.mrb[0].mxu0
        %v2080 = vadd.f32 0.0, %v2079
        %v2081 = vpop.f32.mrb[0].mxu0
        %v2082 = vadd.f32 0.0, %v2081
        %v2083 = vpop.f32.mrb[0].mxu0
        %v2084 = vadd.f32 0.0, %v2083
        %2085 = vmatprep.mubr.bf16.mxu0 0
        %2086 = vmatmul.mubr.bf16.gmra.mrb[0].mxu0 %v1036
        %v2087 = vpop.f32.mrb[0].mxu0
        %v2088 = vadd.f32 0.0, %v2087
        %v2089 = vpop.f32.mrb[0].mxu0
        %v2090 = vadd.f32 0.0, %v2089
        %v2091 = vpop.f32.mrb[0].mxu0
        %v2092 = vadd.f32 0.0, %v2091
        %v2093 = vpop.f32.mrb[0].mxu0
        %v2094 = vadd.f32 0.0, %v2093
        %2095 = vmatprep.mubr.bf16.mxu0 0
        %2096 = vmatmul.mubr.bf16.gmra.mrb[0].mxu0 %v1039
        %v2097 = vpop.f32.mrb[0].mxu0
        %v2098 = vadd.f32 0.0, %v2097
        %v2099 = vpop.f32.mrb[0].mxu0
        %v2100 = vadd.f32 0.0, %v2099
        %v2101 = vpop.f32.mrb[0].mxu0
        %v2102 = vadd.f32 0.0, %v2101
        %v2103 = vpop.f32.mrb[0].mxu0
        %v2104 = vadd.f32 0.0, %v2103
        %2105 = vmatprep.mubr.bf16.mxu0 0
        %2106 = vmatmul.mubr.bf16.gmra.mrb[0].mxu0 %v1042
        %v2107 = vpop.f32.mrb[0].mxu0
        %v2108 = vadd.f32 0.0, %v2107
        %v2109 = vpop.f32.mrb[0].mxu0
        %v2110 = vadd.f32 0.0, %v2109
        %v2111 = vpop.f32.mrb[0].mxu0
        %v2112 = vadd.f32 0.0, %v2111
        %v2113 = vpop.f32.mrb[0].mxu0
        %v2114 = vadd.f32 0.0, %v2113
        %2115 = vmatprep.mubr.bf16.mxu0 0
        %2116 = vmatmul.mubr.bf16.gmra.mrb[0].mxu0 %v1045
        %v2117 = vpop.f32.mrb[0].mxu0
        %v2118 = vadd.f32 0.0, %v2117
        %v2119 = vpop.f32.mrb[0].mxu0
        %v2120 = vadd.f32 0.0, %v2119
        %v2121 = vpop.f32.mrb[0].mxu0
        %v2122 = vadd.f32 0.0, %v2121
        %v2123 = vpop.f32.mrb[0].mxu0
        %v2124 = vadd.f32 0.0, %v2123
        %2125 = vmatprep.mubr.bf16.mxu0 0
        %2126 = vmatmul.mubr.bf16.gmra.mrb[0].mxu0 %v1048
        %v2127 = vpop.f32.mrb[0].mxu0
        %v2128 = vadd.f32 0.0, %v2127
        %v2129 = vpop.f32.mrb[0].mxu0
        %v2130 = vadd.f32 0.0, %v2129
        %v2131 = vpop.f32.mrb[0].mxu0
        %v2132 = vadd.f32 0.0, %v2131
        %v2133 = vpop.f32.mrb[0].mxu0
        %v2134 = vadd.f32 0.0, %v2133
        %2135 = vmatprep.mubr.bf16.mxu0 0
        %2136 = vmatmul.mubr.bf16.gmra.mrb[0].mxu0 %v1051
        %v2137 = vpop.f32.mrb[0].mxu0
        %v2138 = vadd.f32 0.0, %v2137
        %v2139 = vpop.f32.mrb[0].mxu0
        %v2140 = vadd.f32 0.0, %v2139
        %v2141 = vpop.f32.mrb[0].mxu0
        %v2142 = vadd.f32 0.0, %v2141
        %v2143 = vpop.f32.mrb[0].mxu0
        %v2144 = vadd.f32 0.0, %v2143
        %2145 = vmatprep.mubr.bf16.mxu0 0
        %2146 = vmatmul.mubr.bf16.gmra.mrb[0].mxu0 %v1054
        %v2147 = vpop.f32.mrb[0].mxu0
        %v2148 = vadd.f32 0.0, %v2147
        %v2149 = vpop.f32.mrb[0].mxu0
        %v2150 = vadd.f32 0.0, %v2149
        %v2151 = vpop.f32.mrb[0].mxu0
        %v2152 = vadd.f32 0.0, %v2151
        %v2153 = vpop.f32.mrb[0].mxu0
        %v2154 = vadd.f32 0.0, %v2153
        %2155 = vmatprep.mubr.bf16.mxu0 0
        %2156 = vmatmul.mubr.bf16.gmra.mrb[0].mxu0 %v1057
        %v2157 = vpop.f32.mrb[0].mxu0
        %v2158 = vadd.f32 0.0, %v2157
        %v2159 = vpop.f32.mrb[0].mxu0
        %v2160 = vadd.f32 0.0, %v2159
        %v2161 = vpop.f32.mrb[0].mxu0
        %v2162 = vadd.f32 0.0, %v2161
        %v2163 = vpop.f32.mrb[0].mxu0
        %v2164 = vadd.f32 0.0, %v2163
        %2165 = vmatprep.mubr.bf16.mxu0 0
        %2166 = vmatmul.mubr.bf16.gmra.mrb[0].mxu0 %v1060
        %v2167 = vpop.f32.mrb[0].mxu0
        %v2168 = vadd.f32 0.0, %v2167
        %v2169 = vpop.f32.mrb[0].mxu0
        %v2170 = vadd.f32 0.0, %v2169
        %v2171 = vpop.f32.mrb[0].mxu0
        %v2172 = vadd.f32 0.0, %v2171
        %v2173 = vpop.f32.mrb[0].mxu0
        %v2174 = vadd.f32 0.0, %v2173
        %2175 = vmatprep.mubr.bf16.mxu0 0
        %2176 = vmatmul.mubr.bf16.gmra.mrb[0].mxu0 %v1063
        %v2177 = vpop.f32.mrb[0].mxu0
        %v2178 = vadd.f32 0.0, %v2177
        %v2179 = vpop.f32.mrb[0].mxu0
        %v2180 = vadd.f32 0.0, %v2179
        %v2181 = vpop.f32.mrb[0].mxu0
        %v2182 = vadd.f32 0.0, %v2181
        %v2183 = vpop.f32.mrb[0].mxu0
        %v2184 = vadd.f32 0.0, %v2183
        %2185 = vmatprep.mubr.bf16.mxu0 0
        %2186 = vmatmul.mubr.bf16.gmra.mrb[0].mxu0 %v1066
        %v2187 = vpop.f32.mrb[0].mxu0
        %v2188 = vadd.f32 0.0, %v2187
        %v2189 = vpop.f32.mrb[0].mxu0
        %v2190 = vadd.f32 0.0, %v2189
        %v2191 = vpop.f32.mrb[0].mxu0
        %v2192 = vadd.f32 0.0, %v2191
        %v2193 = vpop.f32.mrb[0].mxu0
        %v2194 = vadd.f32 0.0, %v2193
        %2195 = vmatprep.mubr.bf16.mxu0 0
        %2196 = vmatmul.mubr.bf16.gmra.mrb[0].mxu0 %v1069
        %v2197 = vpop.f32.mrb[0].mxu0
        %v2198 = vadd.f32 0.0, %v2197
        %v2199 = vpop.f32.mrb[0].mxu0
        %v2200 = vadd.f32 0.0, %v2199
        %v2201 = vpop.f32.mrb[0].mxu0
        %v2202 = vadd.f32 0.0, %v2201
        %v2203 = vpop.f32.mrb[0].mxu0
        %v2204 = vadd.f32 0.0, %v2203
        %2205 = vmatprep.mubr.bf16.mxu0 0
        %2206 = vmatmul.mubr.bf16.gmra.mrb[0].mxu0 %v1072
        %v2207 = vpop.f32.mrb[0].mxu0
        %v2208 = vadd.f32 0.0, %v2207
        %v2209 = vpop.f32.mrb[0].mxu0
        %v2210 = vadd.f32 0.0, %v2209
        %v2211 = vpop.f32.mrb[0].mxu0
        %v2212 = vadd.f32 0.0, %v2211
        %v2213 = vpop.f32.mrb[0].mxu0
        %v2214 = vadd.f32 0.0, %v2213
        %2215 = vmatprep.mubr.bf16.mxu0 0
        %2216 = vmatmul.mubr.bf16.gmra.mrb[0].mxu0 %v1075
        %v2217 = vpop.f32.mrb[0].mxu0
        %v2218 = vadd.f32 0.0, %v2217
        %v2219 = vpop.f32.mrb[0].mxu0
        %v2220 = vadd.f32 0.0, %v2219
        %v2221 = vpop.f32.mrb[0].mxu0
        %v2222 = vadd.f32 0.0, %v2221
        %v2223 = vpop.f32.mrb[0].mxu0
        %v2224 = vadd.f32 0.0, %v2223
        %2225 = vmatprep.mubr.bf16.mxu0 0
        %2226 = vmatmul.mubr.bf16.gmra.mrb[0].mxu0 %v1078
        %v2227 = vpop.f32.mrb[0].mxu0
        %v2228 = vadd.f32 0.0, %v2227
        %v2229 = vpop.f32.mrb[0].mxu0
        %v2230 = vadd.f32 0.0, %v2229
        %v2231 = vpop.f32.mrb[0].mxu0
        %v2232 = vadd.f32 0.0, %v2231
        %v2233 = vpop.f32.mrb[0].mxu0
        %v2234 = vadd.f32 0.0, %v2233
        %2235 = vmatprep.mubr.bf16.mxu0 0
        %2236 = vmatmul.mubr.bf16.gmra.mrb[0].mxu0 %v1081
        %v2237 = vpop.f32.mrb[0].mxu0
        %v2238 = vadd.f32 0.0, %v2237
        %v2239 = vpop.f32.mrb[0].mxu0
        %v2240 = vadd.f32 0.0, %v2239
        %v2241 = vpop.f32.mrb[0].mxu0
        %v2242 = vadd.f32 0.0, %v2241
        %v2243 = vpop.f32.mrb[0].mxu0
        %v2244 = vadd.f32 0.0, %v2243
        %2245 = vmatprep.mubr.bf16.mxu0 0
        %2246 = vmatmul.mubr.bf16.gmra.mrb[0].mxu0 %v1084
        %v2247 = vpop.f32.mrb[0].mxu0
        %v2248 = vadd.f32 0.0, %v2247
        %v2249 = vpop.f32.mrb[0].mxu0
        %v2250 = vadd.f32 0.0, %v2249
        %v2251 = vpop.f32.mrb[0].mxu0
        %v2252 = vadd.f32 0.0, %v2251
        %v2253 = vpop.f32.mrb[0].mxu0
        %v2254 = vadd.f32 0.0, %v2253
        %2255 = vmatprep.mubr.bf16.mxu0 0
        %2256 = vmatmul.mubr.bf16.gmra.mrb[0].mxu0 %v1087
        %v2257 = vpop.f32.mrb[0].mxu0
        %v2258 = vadd.f32 0.0, %v2257
        %v2259 = vpop.f32.mrb[0].mxu0
        %v2260 = vadd.f32 0.0, %v2259
        %v2261 = vpop.f32.mrb[0].mxu0
        %v2262 = vadd.f32 0.0, %v2261
        %v2263 = vpop.f32.mrb[0].mxu0
        %v2264 = vadd.f32 0.0, %v2263
        %2265 = vmatprep.mubr.bf16.mxu0 0
        %2266 = vmatmul.mubr.bf16.gmra.mrb[0].mxu0 %v1090
        %v2267 = vpop.f32.mrb[0].mxu0
        %v2268 = vadd.f32 0.0, %v2267
        %v2269 = vpop.f32.mrb[0].mxu0
        %v2270 = vadd.f32 0.0, %v2269
        %v2271 = vpop.f32.mrb[0].mxu0
        %v2272 = vadd.f32 0.0, %v2271
        %v2273 = vpop.f32.mrb[0].mxu0
        %v2274 = vadd.f32 0.0, %v2273
        %2275 = vmatprep.mubr.bf16.mxu0 0
        %2276 = vmatmul.mubr.bf16.gmra.mrb[0].mxu0 %v1093
        %v2277 = vpop.f32.mrb[0].mxu0
        %v2278 = vadd.f32 0.0, %v2277
        %v2279 = vpop.f32.mrb[0].mxu0
        %v2280 = vadd.f32 0.0, %v2279
        %v2281 = vpop.f32.mrb[0].mxu0
        %v2282 = vadd.f32 0.0, %v2281
        %v2283 = vpop.f32.mrb[0].mxu0
        %v2284 = vadd.f32 0.0, %v2283
        %2285 = vmatprep.mubr.bf16.mxu0 0
        %2286 = vmatmul.mubr.bf16.gmra.mrb[0].mxu0 %v1096
        %v2287 = vpop.f32.mrb[0].mxu0
        %v2288 = vadd.f32 0.0, %v2287
        %v2289 = vpop.f32.mrb[0].mxu0
        %v2290 = vadd.f32 0.0, %v2289
        %v2291 = vpop.f32.mrb[0].mxu0
        %v2292 = vadd.f32 0.0, %v2291
        %v2293 = vpop.f32.mrb[0].mxu0
        %v2294 = vadd.f32 0.0, %v2293
        %2295 = vmatprep.mubr.bf16.mxu0 0
        %2296 = vmatmul.mubr.bf16.gmra.mrb[0].mxu0 %v1099
        %v2297 = vpop.f32.mrb[0].mxu0
        %v2298 = vadd.f32 0.0, %v2297
        %v2299 = vpop.f32.mrb[0].mxu0
        %v2300 = vadd.f32 0.0, %v2299
        %v2301 = vpop.f32.mrb[0].mxu0
        %v2302 = vadd.f32 0.0, %v2301
        %v2303 = vpop.f32.mrb[0].mxu0
        %v2304 = vadd.f32 0.0, %v2303
        %2305 = vmatprep.mubr.bf16.mxu0 0
        %2306 = vmatmul.mubr.bf16.gmra.mrb[0].mxu0 %v1102
        %v2307 = vpop.f32.mrb[0].mxu0
        %v2308 = vadd.f32 0.0, %v2307
        %v2309 = vpop.f32.mrb[0].mxu0
        %v2310 = vadd.f32 0.0, %v2309
        %v2311 = vpop.f32.mrb[0].mxu0
        %v2312 = vadd.f32 0.0, %v2311
        %v2313 = vpop.f32.mrb[0].mxu0
        %v2314 = vadd.f32 0.0, %v2313
        %2315 = vmatprep.mubr.bf16.mxu0 0
        %2316 = vmatmul.mubr.bf16.gmra.mrb[0].mxu0 %v1105
        %v2317 = vpop.f32.mrb[0].mxu0
        %v2318 = vadd.f32 0.0, %v2317
        %v2319 = vpop.f32.mrb[0].mxu0
        %v2320 = vadd.f32 0.0, %v2319
        %v2321 = vpop.f32.mrb[0].mxu0
        %v2322 = vadd.f32 0.0, %v2321
        %v2323 = vpop.f32.mrb[0].mxu0
        %v2324 = vadd.f32 0.0, %v2323
        %2325 = vmatprep.mubr.bf16.mxu0 0
        %2326 = vmatmul.mubr.bf16.gmra.mrb[0].mxu0 %v1108
        %v2327 = vpop.f32.mrb[0].mxu0
        %v2328 = vadd.f32 0.0, %v2327
        %v2329 = vpop.f32.mrb[0].mxu0
        %v2330 = vadd.f32 0.0, %v2329
        %v2331 = vpop.f32.mrb[0].mxu0
        %v2332 = vadd.f32 0.0, %v2331
        %v2333 = vpop.f32.mrb[0].mxu0
        %v2334 = vadd.f32 0.0, %v2333
        %2335 = vmatprep.mubr.bf16.mxu0 0
        %2336 = vmatmul.mubr.bf16.gmra.mrb[0].mxu0 %v1111
        %v2337 = vpop.f32.mrb[0].mxu0
        %v2338 = vadd.f32 0.0, %v2337
        %v2339 = vpop.f32.mrb[0].mxu0
        %v2340 = vadd.f32 0.0, %v2339
        %v2341 = vpop.f32.mrb[0].mxu0
        %v2342 = vadd.f32 0.0, %v2341
        %v2343 = vpop.f32.mrb[0].mxu0
        %v2344 = vadd.f32 0.0, %v2343
        %2345 = vmatprep.mubr.bf16.mxu0 0
        %2346 = vmatmul.mubr.bf16.gmra.mrb[0].mxu0 %v1114
        %v2347 = vpop.f32.mrb[0].mxu0
        %v2348 = vadd.f32 0.0, %v2347
        %v2349 = vpop.f32.mrb[0].mxu0
        %v2350 = vadd.f32 0.0, %v2349
        %v2351 = vpop.f32.mrb[0].mxu0
        %v2352 = vadd.f32 0.0, %v2351
        %v2353 = vpop.f32.mrb[0].mxu0
        %v2354 = vadd.f32 0.0, %v2353
        %2355 = vmatprep.mubr.bf16.mxu0 0
        %2356 = vmatmul.mubr.bf16.gmra.mrb[0].mxu0 %v1117
        %v2357 = vpop.f32.mrb[0].mxu0
        %v2358 = vadd.f32 0.0, %v2357
        %v2359 = vpop.f32.mrb[0].mxu0
        %v2360 = vadd.f32 0.0, %v2359
        %v2361 = vpop.f32.mrb[0].mxu0
        %v2362 = vadd.f32 0.0, %v2361
        %v2363 = vpop.f32.mrb[0].mxu0
        %v2364 = vadd.f32 0.0, %v2363
        %2365 = vmatprep.mubr.bf16.mxu0 0
        %2366 = vmatmul.mubr.bf16.gmra.mrb[0].mxu0 %v1120
        %v2367 = vpop.f32.mrb[0].mxu0
        %v2368 = vadd.f32 0.0, %v2367
        %v2369 = vpop.f32.mrb[0].mxu0
        %v2370 = vadd.f32 0.0, %v2369
        %v2371 = vpop.f32.mrb[0].mxu0
        %v2372 = vadd.f32 0.0, %v2371
        %v2373 = vpop.f32.mrb[0].mxu0
        %v2374 = vadd.f32 0.0, %v2373
        %2375 = vmatprep.mubr.bf16.mxu0 0
        %2376 = vmatmul.mubr.bf16.gmra.mrb[0].mxu0 %v1123
        %v2377 = vpop.f32.mrb[0].mxu0
        %v2378 = vadd.f32 0.0, %v2377
        %v2379 = vpop.f32.mrb[0].mxu0
        %v2380 = vadd.f32 0.0, %v2379
        %v2381 = vpop.f32.mrb[0].mxu0
        %v2382 = vadd.f32 0.0, %v2381
        %v2383 = vpop.f32.mrb[0].mxu0
        %v2384 = vadd.f32 0.0, %v2383
        %2385 = vmatprep.mubr.bf16.mxu0 0
        %2386 = vmatmul.mubr.bf16.gmra.mrb[0].mxu0 %v1126
        %v2387 = vpop.f32.mrb[0].mxu0
        %v2388 = vadd.f32 0.0, %v2387
        %v2389 = vpop.f32.mrb[0].mxu0
        %v2390 = vadd.f32 0.0, %v2389
        %v2391 = vpop.f32.mrb[0].mxu0
        %v2392 = vadd.f32 0.0, %v2391
        %v2393 = vpop.f32.mrb[0].mxu0
        %v2394 = vadd.f32 0.0, %v2393
        %2395 = vmatprep.mubr.bf16.mxu0 0
        %2396 = vmatmul.mubr.bf16.gmra.mrb[0].mxu0 %v1129
        %v2397 = vpop.f32.mrb[0].mxu0
        %v2398 = vadd.f32 0.0, %v2397
        %v2399 = vpop.f32.mrb[0].mxu0
        %v2400 = vadd.f32 0.0, %v2399
        %v2401 = vpop.f32.mrb[0].mxu0
        %v2402 = vadd.f32 0.0, %v2401
        %v2403 = vpop.f32.mrb[0].mxu0
        %v2404 = vadd.f32 0.0, %v2403
        %2405 = vmatprep.mubr.bf16.mxu0 0
        %2406 = vmatmul.mubr.bf16.gmra.mrb[0].mxu0 %v1132
        %v2407 = vpop.f32.mrb[0].mxu0
        %v2408 = vadd.f32 0.0, %v2407
        %v2409 = vpop.f32.mrb[0].mxu0
        %v2410 = vadd.f32 0.0, %v2409
        %v2411 = vpop.f32.mrb[0].mxu0
        %v2412 = vadd.f32 0.0, %v2411
        %v2413 = vpop.f32.mrb[0].mxu0
        %v2414 = vadd.f32 0.0, %v2413
        %2415 = vmatprep.mubr.bf16.mxu0 0
        %2416 = vmatmul.mubr.bf16.gmra.mrb[0].mxu0 %v1135
        %v2417 = vpop.f32.mrb[0].mxu0
        %v2418 = vadd.f32 0.0, %v2417
        %v2419 = vpop.f32.mrb[0].mxu0
        %v2420 = vadd.f32 0.0, %v2419
        %v2421 = vpop.f32.mrb[0].mxu0
        %v2422 = vadd.f32 0.0, %v2421
        %v2423 = vpop.f32.mrb[0].mxu0
        %v2424 = vadd.f32 0.0, %v2423
        %2425 = vmatprep.mubr.bf16.mxu0 0
        %2426 = vmatmul.mubr.bf16.gmra.mrb[0].mxu0 %v1138
        %v2427 = vpop.f32.mrb[0].mxu0
        %v2428 = vadd.f32 0.0, %v2427
        %v2429 = vpop.f32.mrb[0].mxu0
        %v2430 = vadd.f32 0.0, %v2429
        %v2431 = vpop.f32.mrb[0].mxu0
        %v2432 = vadd.f32 0.0, %v2431
        %v2433 = vpop.f32.mrb[0].mxu0
        %v2434 = vadd.f32 0.0, %v2433
        %2435 = vmatprep.mubr.bf16.mxu0 0
        %2436 = vmatmul.mubr.bf16.gmra.mrb[0].mxu0 %v1141
        %v2437 = vpop.f32.mrb[0].mxu0
        %v2438 = vadd.f32 0.0, %v2437
        %v2439 = vpop.f32.mrb[0].mxu0
        %v2440 = vadd.f32 0.0, %v2439
        %v2441 = vpop.f32.mrb[0].mxu0
        %v2442 = vadd.f32 0.0, %v2441
        %v2443 = vpop.f32.mrb[0].mxu0
        %v2444 = vadd.f32 0.0, %v2443
        %2445 = vmatprep.mubr.bf16.mxu0 0
        %2446 = vmatmul.mubr.bf16.gmra.mrb[0].mxu0 %v1144
        %v2447 = vpop.f32.mrb[0].mxu0
        %v2448 = vadd.f32 0.0, %v2447
        %v2449 = vpop.f32.mrb[0].mxu0
        %v2450 = vadd.f32 0.0, %v2449
        %v2451 = vpop.f32.mrb[0].mxu0
        %v2452 = vadd.f32 0.0, %v2451
        %v2453 = vpop.f32.mrb[0].mxu0
        %v2454 = vadd.f32 0.0, %v2453
        %2455 = vmatprep.mubr.bf16.mxu0 0
        %2456 = vmatmul.mubr.bf16.gmra.mrb[0].mxu0 %v1147
        %v2457 = vpop.f32.mrb[0].mxu0
        %v2458 = vadd.f32 0.0, %v2457
        %v2459 = vpop.f32.mrb[0].mxu0
        %v2460 = vadd.f32 0.0, %v2459
        %v2461 = vpop.f32.mrb[0].mxu0
        %v2462 = vadd.f32 0.0, %v2461
        %v2463 = vpop.f32.mrb[0].mxu0
        %v2464 = vadd.f32 0.0, %v2463
        %2465 = vmatprep.mubr.bf16.mxu0 0
        %2466 = vmatmul.mubr.bf16.gmra.mrb[0].mxu0 %v1150
        %v2467 = vpop.f32.mrb[0].mxu0
        %v2468 = vadd.f32 0.0, %v2467
        %v2469 = vpop.f32.mrb[0].mxu0
        %v2470 = vadd.f32 0.0, %v2469
        %v2471 = vpop.f32.mrb[0].mxu0
        %v2472 = vadd.f32 0.0, %v2471
        %v2473 = vpop.f32.mrb[0].mxu0
        %v2474 = vadd.f32 0.0, %v2473
        %2475 = vmatprep.mubr.bf16.mxu0 0
        %2476 = vmatmul.mubr.bf16.gmra.mrb[0].mxu0 %v1153
        %v2477 = vpop.f32.mrb[0].mxu0
        %v2478 = vadd.f32 0.0, %v2477
        %v2479 = vpop.f32.mrb[0].mxu0
        %v2480 = vadd.f32 0.0, %v2479
        %v2481 = vpop.f32.mrb[0].mxu0
        %v2482 = vadd.f32 0.0, %v2481
        %v2483 = vpop.f32.mrb[0].mxu0
        %v2484 = vadd.f32 0.0, %v2483
        %2485 = vmatprep.mubr.bf16.mxu0 0
        %2486 = vmatmul.mubr.bf16.gmra.mrb[0].mxu0 %v1156
        %v2487 = vpop.f32.mrb[0].mxu0
        %v2488 = vadd.f32 0.0, %v2487
        %v2489 = vpop.f32.mrb[0].mxu0
        %v2490 = vadd.f32 0.0, %v2489
        %v2491 = vpop.f32.mrb[0].mxu0
        %v2492 = vadd.f32 0.0, %v2491
        %v2493 = vpop.f32.mrb[0].mxu0
        %v2494 = vadd.f32 0.0, %v2493
        %2495 = vmatprep.mubr.bf16.mxu0 0
        %2496 = vmatmul.mubr.bf16.gmra.mrb[0].mxu0 %v1159
        %v2497 = vpop.f32.mrb[0].mxu0
        %v2498 = vadd.f32 0.0, %v2497
        %v2499 = vpop.f32.mrb[0].mxu0
        %v2500 = vadd.f32 0.0, %v2499
        %v2501 = vpop.f32.mrb[0].mxu0
        %v2502 = vadd.f32 0.0, %v2501
        %v2503 = vpop.f32.mrb[0].mxu0
        %v2504 = vadd.f32 0.0, %v2503
        %2505 = vmatprep.mubr.bf16.mxu0 0
        %2506 = vmatmul.mubr.bf16.gmra.mrb[0].mxu0 %v1162
        %v2507 = vpop.f32.mrb[0].mxu0
        %v2508 = vadd.f32 0.0, %v2507
        %v2509 = vpop.f32.mrb[0].mxu0
        %v2510 = vadd.f32 0.0, %v2509
        %v2511 = vpop.f32.mrb[0].mxu0
        %v2512 = vadd.f32 0.0, %v2511
        %v2513 = vpop.f32.mrb[0].mxu0
        %v2514 = vadd.f32 0.0, %v2513
        %2515 = vmatprep.mubr.bf16.mxu0 0
        %2516 = vmatmul.mubr.bf16.gmra.mrb[0].mxu0 %v1165
        %v2517 = vpop.f32.mrb[0].mxu0
        %v2518 = vadd.f32 0.0, %v2517
        %v2519 = vpop.f32.mrb[0].mxu0
        %v2520 = vadd.f32 0.0, %v2519
        %v2521 = vpop.f32.mrb[0].mxu0
        %v2522 = vadd.f32 0.0, %v2521
        %v2523 = vpop.f32.mrb[0].mxu0
        %v2524 = vadd.f32 0.0, %v2523
        %2525 = vdwg.mxu0
        %v2526 = vmax.f32 %v1215, 0.0
        %v2527 = vmax.f32 %v1217, 0.0
        %v2528 = vmax.f32 %v1888, 0.0
        %v2529 = vmax.f32 %v1890, 0.0
        %v2530 = vmax.f32 %v1219, 0.0
        %v2531 = vmax.f32 %v1221, 0.0
        %v2532 = vmax.f32 %v1892, 0.0
        %v2533 = vmax.f32 %v1894, 0.0
        %v2534 = vmax.f32 %v1225, 0.0
        %v2535 = vmax.f32 %v1227, 0.0
        %v2536 = vmax.f32 %v1898, 0.0
        %v2537 = vmax.f32 %v1900, 0.0
        %v2538 = vmax.f32 %v1229, 0.0
        %v2539 = vmax.f32 %v1231, 0.0
        %v2540 = vmax.f32 %v1902, 0.0
        %v2541 = vmax.f32 %v1904, 0.0
        %v2542 = vmax.f32 %v1235, 0.0
        %v2543 = vmax.f32 %v1237, 0.0
        %v2544 = vmax.f32 %v1908, 0.0
        %v2545 = vmax.f32 %v1910, 0.0
        %v2546 = vmax.f32 %v1239, 0.0
        %v2547 = vmax.f32 %v1241, 0.0
        %v2548 = vmax.f32 %v1912, 0.0
        %v2549 = vmax.f32 %v1914, 0.0
        %v2550 = vmax.f32 %v1245, 0.0
        %v2551 = vmax.f32 %v1247, 0.0
        %v2552 = vmax.f32 %v1918, 0.0
        %v2553 = vmax.f32 %v1920, 0.0
        %v2554 = vmax.f32 %v1249, 0.0
        %v2555 = vmax.f32 %v1251, 0.0
        %v2556 = vmax.f32 %v1922, 0.0
        %v2557 = vmax.f32 %v1924, 0.0
        %v2558 = vmax.f32 %v1255, 0.0
        %v2559 = vmax.f32 %v1257, 0.0
        %v2560 = vmax.f32 %v1928, 0.0
        %v2561 = vmax.f32 %v1930, 0.0
        %v2562 = vmax.f32 %v1259, 0.0
        %v2563 = vmax.f32 %v1261, 0.0
        %v2564 = vmax.f32 %v1932, 0.0
        %v2565 = vmax.f32 %v1934, 0.0
        %v2566 = vmax.f32 %v1265, 0.0
        %v2567 = vmax.f32 %v1267, 0.0
        %v2568 = vmax.f32 %v1938, 0.0
        %v2569 = vmax.f32 %v1940, 0.0
        %v2570 = vmax.f32 %v1269, 0.0
        %v2571 = vmax.f32 %v1271, 0.0
        %v2572 = vmax.f32 %v1942, 0.0
        %v2573 = vmax.f32 %v1944, 0.0
        %v2574 = vmax.f32 %v1275, 0.0
        %v2575 = vmax.f32 %v1277, 0.0
        %v2576 = vmax.f32 %v1948, 0.0
        %v2577 = vmax.f32 %v1950, 0.0
        %v2578 = vmax.f32 %v1279, 0.0
        %v2579 = vmax.f32 %v1281, 0.0
        %v2580 = vmax.f32 %v1952, 0.0
        %v2581 = vmax.f32 %v1954, 0.0
        %v2582 = vmax.f32 %v1285, 0.0
        %v2583 = vmax.f32 %v1287, 0.0
        %v2584 = vmax.f32 %v1958, 0.0
        %v2585 = vmax.f32 %v1960, 0.0
        %v2586 = vmax.f32 %v1289, 0.0
        %v2587 = vmax.f32 %v1291, 0.0
        %v2588 = vmax.f32 %v1962, 0.0
        %v2589 = vmax.f32 %v1964, 0.0
        %v2590 = vmax.f32 %v1295, 0.0
        %v2591 = vmax.f32 %v1297, 0.0
        %v2592 = vmax.f32 %v1968, 0.0
        %v2593 = vmax.f32 %v1970, 0.0
        %v2594 = vmax.f32 %v1299, 0.0
        %v2595 = vmax.f32 %v1301, 0.0
        %v2596 = vmax.f32 %v1972, 0.0
        %v2597 = vmax.f32 %v1974, 0.0
        %v2598 = vmax.f32 %v1305, 0.0
        %v2599 = vmax.f32 %v1307, 0.0
        %v2600 = vmax.f32 %v1978, 0.0
        %v2601 = vmax.f32 %v1980, 0.0
        %v2602 = vmax.f32 %v1309, 0.0
        %v2603 = vmax.f32 %v1311, 0.0
        %v2604 = vmax.f32 %v1982, 0.0
        %v2605 = vmax.f32 %v1984, 0.0
        %v2606 = vmax.f32 %v1315, 0.0
        %v2607 = vmax.f32 %v1317, 0.0
        %v2608 = vmax.f32 %v1988, 0.0
        %v2609 = vmax.f32 %v1990, 0.0
        %v2610 = vmax.f32 %v1319, 0.0
        %v2611 = vmax.f32 %v1321, 0.0
        %v2612 = vmax.f32 %v1992, 0.0
        %v2613 = vmax.f32 %v1994, 0.0
        %v2614 = vmax.f32 %v1325, 0.0
        %v2615 = vmax.f32 %v1327, 0.0
        %v2616 = vmax.f32 %v1998, 0.0
        %v2617 = vmax.f32 %v2000, 0.0
        %v2618 = vmax.f32 %v1329, 0.0
        %v2619 = vmax.f32 %v1331, 0.0
        %v2620 = vmax.f32 %v2002, 0.0
        %v2621 = vmax.f32 %v2004, 0.0
        %v2622 = vmax.f32 %v1335, 0.0
        %v2623 = vmax.f32 %v1337, 0.0
        %v2624 = vmax.f32 %v2008, 0.0
        %v2625 = vmax.f32 %v2010, 0.0
        %v2626 = vmax.f32 %v1339, 0.0
        %v2627 = vmax.f32 %v1341, 0.0
        %v2628 = vmax.f32 %v2012, 0.0
        %v2629 = vmax.f32 %v2014, 0.0
        %v2630 = vmax.f32 %v1345, 0.0
        %v2631 = vmax.f32 %v1347, 0.0
        %v2632 = vmax.f32 %v2018, 0.0
        %v2633 = vmax.f32 %v2020, 0.0
        %v2634 = vmax.f32 %v1349, 0.0
        %v2635 = vmax.f32 %v1351, 0.0
        %v2636 = vmax.f32 %v2022, 0.0
        %v2637 = vmax.f32 %v2024, 0.0
        %v2638 = vmax.f32 %v1355, 0.0
        %v2639 = vmax.f32 %v1357, 0.0
        %v2640 = vmax.f32 %v2028, 0.0
        %v2641 = vmax.f32 %v2030, 0.0
        %v2642 = vmax.f32 %v1359, 0.0
        %v2643 = vmax.f32 %v1361, 0.0
        %v2644 = vmax.f32 %v2032, 0.0
        %v2645 = vmax.f32 %v2034, 0.0
        %v2646 = vmax.f32 %v1365, 0.0
        %v2647 = vmax.f32 %v1367, 0.0
        %v2648 = vmax.f32 %v2038, 0.0
        %v2649 = vmax.f32 %v2040, 0.0
        %v2650 = vmax.f32 %v1369, 0.0
        %v2651 = vmax.f32 %v1371, 0.0
        %v2652 = vmax.f32 %v2042, 0.0
        %v2653 = vmax.f32 %v2044, 0.0
        %v2654 = vmax.f32 %v1375, 0.0
        %v2655 = vmax.f32 %v1377, 0.0
        %v2656 = vmax.f32 %v2048, 0.0
        %v2657 = vmax.f32 %v2050, 0.0
        %v2658 = vmax.f32 %v1379, 0.0
        %v2659 = vmax.f32 %v1381, 0.0
        %v2660 = vmax.f32 %v2052, 0.0
        %v2661 = vmax.f32 %v2054, 0.0
        %v2662 = vmax.f32 %v1385, 0.0
        %v2663 = vmax.f32 %v1387, 0.0
        %v2664 = vmax.f32 %v2058, 0.0
        %v2665 = vmax.f32 %v2060, 0.0
        %v2666 = vmax.f32 %v1389, 0.0
        %v2667 = vmax.f32 %v1391, 0.0
        %v2668 = vmax.f32 %v2062, 0.0
        %v2669 = vmax.f32 %v2064, 0.0
        %v2670 = vmax.f32 %v1395, 0.0
        %v2671 = vmax.f32 %v1397, 0.0
        %v2672 = vmax.f32 %v2068, 0.0
        %v2673 = vmax.f32 %v2070, 0.0
        %v2674 = vmax.f32 %v1399, 0.0
        %v2675 = vmax.f32 %v1401, 0.0
        %v2676 = vmax.f32 %v2072, 0.0
        %v2677 = vmax.f32 %v2074, 0.0
        %v2678 = vmax.f32 %v1405, 0.0
        %v2679 = vmax.f32 %v1407, 0.0
        %v2680 = vmax.f32 %v2078, 0.0
        %v2681 = vmax.f32 %v2080, 0.0
        %v2682 = vmax.f32 %v1409, 0.0
        %v2683 = vmax.f32 %v1411, 0.0
        %v2684 = vmax.f32 %v2082, 0.0
        %v2685 = vmax.f32 %v2084, 0.0
        %v2686 = vmax.f32 %v1415, 0.0
        %v2687 = vmax.f32 %v1417, 0.0
        %v2688 = vmax.f32 %v2088, 0.0
        %v2689 = vmax.f32 %v2090, 0.0
        %v2690 = vmax.f32 %v1419, 0.0
        %v2691 = vmax.f32 %v1421, 0.0
        %v2692 = vmax.f32 %v2092, 0.0
        %v2693 = vmax.f32 %v2094, 0.0
        %v2694 = vmax.f32 %v1425, 0.0
        %v2695 = vmax.f32 %v1427, 0.0
        %v2696 = vmax.f32 %v2098, 0.0
        %v2697 = vmax.f32 %v2100, 0.0
        %v2698 = vmax.f32 %v1429, 0.0
        %v2699 = vmax.f32 %v1431, 0.0
        %v2700 = vmax.f32 %v2102, 0.0
        %v2701 = vmax.f32 %v2104, 0.0
        %v2702 = vmax.f32 %v1435, 0.0
        %v2703 = vmax.f32 %v1437, 0.0
        %v2704 = vmax.f32 %v2108, 0.0
        %v2705 = vmax.f32 %v2110, 0.0
        %v2706 = vmax.f32 %v1439, 0.0
        %v2707 = vmax.f32 %v1441, 0.0
        %v2708 = vmax.f32 %v2112, 0.0
        %v2709 = vmax.f32 %v2114, 0.0
        %v2710 = vmax.f32 %v1445, 0.0
        %v2711 = vmax.f32 %v1447, 0.0
        %v2712 = vmax.f32 %v2118, 0.0
        %v2713 = vmax.f32 %v2120, 0.0
        %v2714 = vmax.f32 %v1449, 0.0
        %v2715 = vmax.f32 %v1451, 0.0
        %v2716 = vmax.f32 %v2122, 0.0
        %v2717 = vmax.f32 %v2124, 0.0
        %v2718 = vmax.f32 %v1455, 0.0
        %v2719 = vmax.f32 %v1457, 0.0
        %v2720 = vmax.f32 %v2128, 0.0
        %v2721 = vmax.f32 %v2130, 0.0
        %v2722 = vmax.f32 %v1459, 0.0
        %v2723 = vmax.f32 %v1461, 0.0
        %v2724 = vmax.f32 %v2132, 0.0
        %v2725 = vmax.f32 %v2134, 0.0
        %v2726 = vmax.f32 %v1465, 0.0
        %v2727 = vmax.f32 %v1467, 0.0
        %v2728 = vmax.f32 %v2138, 0.0
        %v2729 = vmax.f32 %v2140, 0.0
        %v2730 = vmax.f32 %v1469, 0.0
        %v2731 = vmax.f32 %v1471, 0.0
        %v2732 = vmax.f32 %v2142, 0.0
        %v2733 = vmax.f32 %v2144, 0.0
        %v2734 = vmax.f32 %v1475, 0.0
        %v2735 = vmax.f32 %v1477, 0.0
        %v2736 = vmax.f32 %v2148, 0.0
        %v2737 = vmax.f32 %v2150, 0.0
        %v2738 = vmax.f32 %v1479, 0.0
        %v2739 = vmax.f32 %v1481, 0.0
        %v2740 = vmax.f32 %v2152, 0.0
        %v2741 = vmax.f32 %v2154, 0.0
        %v2742 = vmax.f32 %v1485, 0.0
        %v2743 = vmax.f32 %v1487, 0.0
        %v2744 = vmax.f32 %v2158, 0.0
        %v2745 = vmax.f32 %v2160, 0.0
        %v2746 = vmax.f32 %v1489, 0.0
        %v2747 = vmax.f32 %v1491, 0.0
        %v2748 = vmax.f32 %v2162, 0.0
        %v2749 = vmax.f32 %v2164, 0.0
        %v2750 = vmax.f32 %v1495, 0.0
        %v2751 = vmax.f32 %v1497, 0.0
        %v2752 = vmax.f32 %v2168, 0.0
        %v2753 = vmax.f32 %v2170, 0.0
        %v2754 = vmax.f32 %v1499, 0.0
        %v2755 = vmax.f32 %v1501, 0.0
        %v2756 = vmax.f32 %v2172, 0.0
        %v2757 = vmax.f32 %v2174, 0.0
        %v2758 = vmax.f32 %v1505, 0.0
        %v2759 = vmax.f32 %v1507, 0.0
        %v2760 = vmax.f32 %v2178, 0.0
        %v2761 = vmax.f32 %v2180, 0.0
        %v2762 = vmax.f32 %v1509, 0.0
        %v2763 = vmax.f32 %v1511, 0.0
        %v2764 = vmax.f32 %v2182, 0.0
        %v2765 = vmax.f32 %v2184, 0.0
        %v2766 = vmax.f32 %v1515, 0.0
        %v2767 = vmax.f32 %v1517, 0.0
        %v2768 = vmax.f32 %v2188, 0.0
        %v2769 = vmax.f32 %v2190, 0.0
        %v2770 = vmax.f32 %v1519, 0.0
        %v2771 = vmax.f32 %v1521, 0.0
        %v2772 = vmax.f32 %v2192, 0.0
        %v2773 = vmax.f32 %v2194, 0.0
        %v2774 = vmax.f32 %v1525, 0.0
        %v2775 = vmax.f32 %v1527, 0.0
        %v2776 = vmax.f32 %v2198, 0.0
        %v2777 = vmax.f32 %v2200, 0.0
        %v2778 = vmax.f32 %v1529, 0.0
        %v2779 = vmax.f32 %v1531, 0.0
        %v2780 = vmax.f32 %v2202, 0.0
        %v2781 = vmax.f32 %v2204, 0.0
        %v2782 = vmax.f32 %v1535, 0.0
        %v2783 = vmax.f32 %v1537, 0.0
        %v2784 = vmax.f32 %v2208, 0.0
        %v2785 = vmax.f32 %v2210, 0.0
        %v2786 = vmax.f32 %v1539, 0.0
        %v2787 = vmax.f32 %v1541, 0.0
        %v2788 = vmax.f32 %v2212, 0.0
        %v2789 = vmax.f32 %v2214, 0.0
        %v2790 = vmax.f32 %v1545, 0.0
        %v2791 = vmax.f32 %v1547, 0.0
        %v2792 = vmax.f32 %v2218, 0.0
        %v2793 = vmax.f32 %v2220, 0.0
        %v2794 = vmax.f32 %v1549, 0.0
        %v2795 = vmax.f32 %v1551, 0.0
        %v2796 = vmax.f32 %v2222, 0.0
        %v2797 = vmax.f32 %v2224, 0.0
        %v2798 = vmax.f32 %v1555, 0.0
        %v2799 = vmax.f32 %v1557, 0.0
        %v2800 = vmax.f32 %v2228, 0.0
        %v2801 = vmax.f32 %v2230, 0.0
        %v2802 = vmax.f32 %v1559, 0.0
        %v2803 = vmax.f32 %v1561, 0.0
        %v2804 = vmax.f32 %v2232, 0.0
        %v2805 = vmax.f32 %v2234, 0.0
        %v2806 = vmax.f32 %v1565, 0.0
        %v2807 = vmax.f32 %v1567, 0.0
        %v2808 = vmax.f32 %v2238, 0.0
        %v2809 = vmax.f32 %v2240, 0.0
        %v2810 = vmax.f32 %v1569, 0.0
        %v2811 = vmax.f32 %v1571, 0.0
        %v2812 = vmax.f32 %v2242, 0.0
        %v2813 = vmax.f32 %v2244, 0.0
        %v2814 = vmax.f32 %v1575, 0.0
        %v2815 = vmax.f32 %v1577, 0.0
        %v2816 = vmax.f32 %v2248, 0.0
        %v2817 = vmax.f32 %v2250, 0.0
        %v2818 = vmax.f32 %v1579, 0.0
        %v2819 = vmax.f32 %v1581, 0.0
        %v2820 = vmax.f32 %v2252, 0.0
        %v2821 = vmax.f32 %v2254, 0.0
        %v2822 = vmax.f32 %v1585, 0.0
        %v2823 = vmax.f32 %v1587, 0.0
        %v2824 = vmax.f32 %v2258, 0.0
        %v2825 = vmax.f32 %v2260, 0.0
        %v2826 = vmax.f32 %v1589, 0.0
        %v2827 = vmax.f32 %v1591, 0.0
        %v2828 = vmax.f32 %v2262, 0.0
        %v2829 = vmax.f32 %v2264, 0.0
        %v2830 = vmax.f32 %v1595, 0.0
        %v2831 = vmax.f32 %v1597, 0.0
        %v2832 = vmax.f32 %v2268, 0.0
        %v2833 = vmax.f32 %v2270, 0.0
        %v2834 = vmax.f32 %v1599, 0.0
        %v2835 = vmax.f32 %v1601, 0.0
        %v2836 = vmax.f32 %v2272, 0.0
        %v2837 = vmax.f32 %v2274, 0.0
        %v2838 = vmax.f32 %v1605, 0.0
        %v2839 = vmax.f32 %v1607, 0.0
        %v2840 = vmax.f32 %v2278, 0.0
        %v2841 = vmax.f32 %v2280, 0.0
        %v2842 = vmax.f32 %v1609, 0.0
        %v2843 = vmax.f32 %v1611, 0.0
        %v2844 = vmax.f32 %v2282, 0.0
        %v2845 = vmax.f32 %v2284, 0.0
        %v2846 = vmax.f32 %v1615, 0.0
        %v2847 = vmax.f32 %v1617, 0.0
        %v2848 = vmax.f32 %v2288, 0.0
        %v2849 = vmax.f32 %v2290, 0.0
        %v2850 = vmax.f32 %v1619, 0.0
        %v2851 = vmax.f32 %v1621, 0.0
        %v2852 = vmax.f32 %v2292, 0.0
        %v2853 = vmax.f32 %v2294, 0.0
        %v2854 = vmax.f32 %v1625, 0.0
        %v2855 = vmax.f32 %v1627, 0.0
        %v2856 = vmax.f32 %v2298, 0.0
        %v2857 = vmax.f32 %v2300, 0.0
        %v2858 = vmax.f32 %v1629, 0.0
        %v2859 = vmax.f32 %v1631, 0.0
        %v2860 = vmax.f32 %v2302, 0.0
        %v2861 = vmax.f32 %v2304, 0.0
        %v2862 = vmax.f32 %v1635, 0.0
        %v2863 = vmax.f32 %v1637, 0.0
        %v2864 = vmax.f32 %v2308, 0.0
        %v2865 = vmax.f32 %v2310, 0.0
        %v2866 = vmax.f32 %v1639, 0.0
        %v2867 = vmax.f32 %v1641, 0.0
        %v2868 = vmax.f32 %v2312, 0.0
        %v2869 = vmax.f32 %v2314, 0.0
        %v2870 = vmax.f32 %v1645, 0.0
        %v2871 = vmax.f32 %v1647, 0.0
        %v2872 = vmax.f32 %v2318, 0.0
        %v2873 = vmax.f32 %v2320, 0.0
        %v2874 = vmax.f32 %v1649, 0.0
        %v2875 = vmax.f32 %v1651, 0.0
        %v2876 = vmax.f32 %v2322, 0.0
        %v2877 = vmax.f32 %v2324, 0.0
        %v2878 = vmax.f32 %v1655, 0.0
        %v2879 = vmax.f32 %v1657, 0.0
        %v2880 = vmax.f32 %v2328, 0.0
        %v2881 = vmax.f32 %v2330, 0.0
        %v2882 = vmax.f32 %v1659, 0.0
        %v2883 = vmax.f32 %v1661, 0.0
        %v2884 = vmax.f32 %v2332, 0.0
        %v2885 = vmax.f32 %v2334, 0.0
        %v2886 = vmax.f32 %v1665, 0.0
        %v2887 = vmax.f32 %v1667, 0.0
        %v2888 = vmax.f32 %v2338, 0.0
        %v2889 = vmax.f32 %v2340, 0.0
        %v2890 = vmax.f32 %v1669, 0.0
        %v2891 = vmax.f32 %v1671, 0.0
        %v2892 = vmax.f32 %v2342, 0.0
        %v2893 = vmax.f32 %v2344, 0.0
        %v2894 = vmax.f32 %v1675, 0.0
        %v2895 = vmax.f32 %v1677, 0.0
        %v2896 = vmax.f32 %v2348, 0.0
        %v2897 = vmax.f32 %v2350, 0.0
        %v2898 = vmax.f32 %v1679, 0.0
        %v2899 = vmax.f32 %v1681, 0.0
        %v2900 = vmax.f32 %v2352, 0.0
        %v2901 = vmax.f32 %v2354, 0.0
        %v2902 = vmax.f32 %v1685, 0.0
        %v2903 = vmax.f32 %v1687, 0.0
        %v2904 = vmax.f32 %v2358, 0.0
        %v2905 = vmax.f32 %v2360, 0.0
        %v2906 = vmax.f32 %v1689, 0.0
        %v2907 = vmax.f32 %v1691, 0.0
        %v2908 = vmax.f32 %v2362, 0.0
        %v2909 = vmax.f32 %v2364, 0.0
        %v2910 = vmax.f32 %v1695, 0.0
        %v2911 = vmax.f32 %v1697, 0.0
        %v2912 = vmax.f32 %v2368, 0.0
        %v2913 = vmax.f32 %v2370, 0.0
        %v2914 = vmax.f32 %v1699, 0.0
        %v2915 = vmax.f32 %v1701, 0.0
        %v2916 = vmax.f32 %v2372, 0.0
        %v2917 = vmax.f32 %v2374, 0.0
        %v2918 = vmax.f32 %v1705, 0.0
        %v2919 = vmax.f32 %v1707, 0.0
        %v2920 = vmax.f32 %v2378, 0.0
        %v2921 = vmax.f32 %v2380, 0.0
        %v2922 = vmax.f32 %v1709, 0.0
        %v2923 = vmax.f32 %v1711, 0.0
        %v2924 = vmax.f32 %v2382, 0.0
        %v2925 = vmax.f32 %v2384, 0.0
        %v2926 = vmax.f32 %v1715, 0.0
        %v2927 = vmax.f32 %v1717, 0.0
        %v2928 = vmax.f32 %v2388, 0.0
        %v2929 = vmax.f32 %v2390, 0.0
        %v2930 = vmax.f32 %v1719, 0.0
        %v2931 = vmax.f32 %v1721, 0.0
        %v2932 = vmax.f32 %v2392, 0.0
        %v2933 = vmax.f32 %v2394, 0.0
        %v2934 = vmax.f32 %v1725, 0.0
        %v2935 = vmax.f32 %v1727, 0.0
        %v2936 = vmax.f32 %v2398, 0.0
        %v2937 = vmax.f32 %v2400, 0.0
        %v2938 = vmax.f32 %v1729, 0.0
        %v2939 = vmax.f32 %v1731, 0.0
        %v2940 = vmax.f32 %v2402, 0.0
        %v2941 = vmax.f32 %v2404, 0.0
        %v2942 = vmax.f32 %v1735, 0.0
        %v2943 = vmax.f32 %v1737, 0.0
        %v2944 = vmax.f32 %v2408, 0.0
        %v2945 = vmax.f32 %v2410, 0.0
        %v2946 = vmax.f32 %v1739, 0.0
        %v2947 = vmax.f32 %v1741, 0.0
        %v2948 = vmax.f32 %v2412, 0.0
        %v2949 = vmax.f32 %v2414, 0.0
        %v2950 = vmax.f32 %v1745, 0.0
        %v2951 = vmax.f32 %v1747, 0.0
        %v2952 = vmax.f32 %v2418, 0.0
        %v2953 = vmax.f32 %v2420, 0.0
        %v2954 = vmax.f32 %v1749, 0.0
        %v2955 = vmax.f32 %v1751, 0.0
        %v2956 = vmax.f32 %v2422, 0.0
        %v2957 = vmax.f32 %v2424, 0.0
        %v2958 = vmax.f32 %v1755, 0.0
        %v2959 = vmax.f32 %v1757, 0.0
        %v2960 = vmax.f32 %v2428, 0.0
        %v2961 = vmax.f32 %v2430, 0.0
        %v2962 = vmax.f32 %v1759, 0.0
        %v2963 = vmax.f32 %v1761, 0.0
        %v2964 = vmax.f32 %v2432, 0.0
        %v2965 = vmax.f32 %v2434, 0.0
        %v2966 = vmax.f32 %v1765, 0.0
        %v2967 = vmax.f32 %v1767, 0.0
        %v2968 = vmax.f32 %v2438, 0.0
        %v2969 = vmax.f32 %v2440, 0.0
        %v2970 = vmax.f32 %v1769, 0.0
        %v2971 = vmax.f32 %v1771, 0.0
        %v2972 = vmax.f32 %v2442, 0.0
        %v2973 = vmax.f32 %v2444, 0.0
        %v2974 = vmax.f32 %v1775, 0.0
        %v2975 = vmax.f32 %v1777, 0.0
        %v2976 = vmax.f32 %v2448, 0.0
        %v2977 = vmax.f32 %v2450, 0.0
        %v2978 = vmax.f32 %v1779, 0.0
        %v2979 = vmax.f32 %v1781, 0.0
        %v2980 = vmax.f32 %v2452, 0.0
        %v2981 = vmax.f32 %v2454, 0.0
        %v2982 = vmax.f32 %v1785, 0.0
        %v2983 = vmax.f32 %v1787, 0.0
        %v2984 = vmax.f32 %v2458, 0.0
        %v2985 = vmax.f32 %v2460, 0.0
        %v2986 = vmax.f32 %v1789, 0.0
        %v2987 = vmax.f32 %v1791, 0.0
        %v2988 = vmax.f32 %v2462, 0.0
        %v2989 = vmax.f32 %v2464, 0.0
        %v2990 = vmax.f32 %v1795, 0.0
        %v2991 = vmax.f32 %v1797, 0.0
        %v2992 = vmax.f32 %v2468, 0.0
        %v2993 = vmax.f32 %v2470, 0.0
        %v2994 = vmax.f32 %v1799, 0.0
        %v2995 = vmax.f32 %v1801, 0.0
        %v2996 = vmax.f32 %v2472, 0.0
        %v2997 = vmax.f32 %v2474, 0.0
        %v2998 = vmax.f32 %v1805, 0.0
        %v2999 = vmax.f32 %v1807, 0.0
        %v3000 = vmax.f32 %v2478, 0.0
        %v3001 = vmax.f32 %v2480, 0.0
        %v3002 = vmax.f32 %v1809, 0.0
        %v3003 = vmax.f32 %v1811, 0.0
        %v3004 = vmax.f32 %v2482, 0.0
        %v3005 = vmax.f32 %v2484, 0.0
        %v3006 = vmax.f32 %v1815, 0.0
        %v3007 = vmax.f32 %v1817, 0.0
        %v3008 = vmax.f32 %v2488, 0.0
        %v3009 = vmax.f32 %v2490, 0.0
        %v3010 = vmax.f32 %v1819, 0.0
        %v3011 = vmax.f32 %v1821, 0.0
        %v3012 = vmax.f32 %v2492, 0.0
        %v3013 = vmax.f32 %v2494, 0.0
        %v3014 = vmax.f32 %v1825, 0.0
        %v3015 = vmax.f32 %v1827, 0.0
        %v3016 = vmax.f32 %v2498, 0.0
        %v3017 = vmax.f32 %v2500, 0.0
        %v3018 = vmax.f32 %v1829, 0.0
        %v3019 = vmax.f32 %v1831, 0.0
        %v3020 = vmax.f32 %v2502, 0.0
        %v3021 = vmax.f32 %v2504, 0.0
        %v3022 = vmax.f32 %v1835, 0.0
        %v3023 = vmax.f32 %v1837, 0.0
        %v3024 = vmax.f32 %v2508, 0.0
        %v3025 = vmax.f32 %v2510, 0.0
        %v3026 = vmax.f32 %v1839, 0.0
        %v3027 = vmax.f32 %v1841, 0.0
        %v3028 = vmax.f32 %v2512, 0.0
        %v3029 = vmax.f32 %v2514, 0.0
        %v3030 = vmax.f32 %v1845, 0.0
        %v3031 = vmax.f32 %v1847, 0.0
        %v3032 = vmax.f32 %v2518, 0.0
        %v3033 = vmax.f32 %v2520, 0.0
        %v3034 = vmax.f32 %v1849, 0.0
        %v3035 = vmax.f32 %v1851, 0.0
        %v3036 = vmax.f32 %v2522, 0.0
        %v3037 = vmax.f32 %v2524, 0.0
        %v3038 = vadd.f32 %v2526, %v2530
        %v3039 = vadd.f32 %v3038, %v2534
        %v3040 = vadd.f32 %v3039, %v2538
        %v3041 = vadd.f32 %v3040, %v2542
        %v3042 = vadd.f32 %v3041, %v2546
        %v3043 = vadd.f32 %v3042, %v2550
        %v3044 = vadd.f32 %v3043, %v2554
        %v3045 = vrot.slane %v3044, 4
        %v3046 = vadd.f32 %v3044, %v3045
        %v3047 = vrot.slane %v3046, 2
        %v3048 = vadd.f32 %v3046, %v3047
        %v3049 = vrot.slane %v3048, 1
        %v3050 = vadd.f32 %v3048, %v3049
        %v3051 = vadd.f32 %v2527, %v2531
        %v3052 = vadd.f32 %v3051, %v2535
        %v3053 = vadd.f32 %v3052, %v2539
        %v3054 = vadd.f32 %v3053, %v2543
        %v3055 = vadd.f32 %v3054, %v2547
        %v3056 = vadd.f32 %v3055, %v2551
        %v3057 = vadd.f32 %v3056, %v2555
        %v3058 = vrot.slane %v3057, 4
        %v3059 = vadd.f32 %v3057, %v3058
        %v3060 = vrot.slane %v3059, 2
        %v3061 = vadd.f32 %v3059, %v3060
        %v3062 = vrot.slane %v3061, 1
        %v3063 = vadd.f32 %v3061, %v3062
        %v3064 = vadd.f32 %v2528, %v2532
        %v3065 = vadd.f32 %v3064, %v2536
        %v3066 = vadd.f32 %v3065, %v2540
        %v3067 = vadd.f32 %v3066, %v2544
        %v3068 = vadd.f32 %v3067, %v2548
        %v3069 = vadd.f32 %v3068, %v2552
        %v3070 = vadd.f32 %v3069, %v2556
        %v3071 = vrot.slane %v3070, 4
        %v3072 = vadd.f32 %v3070, %v3071
        %v3073 = vrot.slane %v3072, 2
        %v3074 = vadd.f32 %v3072, %v3073
        %v3075 = vrot.slane %v3074, 1
        %v3076 = vadd.f32 %v3074, %v3075
        %v3077 = vadd.f32 %v2529, %v2533
        %v3078 = vadd.f32 %v3077, %v2537
        %v3079 = vadd.f32 %v3078, %v2541
        %v3080 = vadd.f32 %v3079, %v2545
        %v3081 = vadd.f32 %v3080, %v2549
        %v3082 = vadd.f32 %v3081, %v2553
        %v3083 = vadd.f32 %v3082, %v2557
        %v3084 = vrot.slane %v3083, 4
        %v3085 = vadd.f32 %v3083, %v3084
        %v3086 = vrot.slane %v3085, 2
        %v3087 = vadd.f32 %v3085, %v3086
        %v3088 = vrot.slane %v3087, 1
        %v3089 = vadd.f32 %v3087, %v3088
        %v3090 = vadd.f32 %v2558, %v2562
        %v3091 = vadd.f32 %v3090, %v2566
        %v3092 = vadd.f32 %v3091, %v2570
        %v3093 = vadd.f32 %v3092, %v2574
        %v3094 = vadd.f32 %v3093, %v2578
        %v3095 = vadd.f32 %v3094, %v2582
        %v3096 = vadd.f32 %v3095, %v2586
        %v3097 = vrot.slane %v3096, 4
        %v3098 = vadd.f32 %v3096, %v3097
        %v3099 = vrot.slane %v3098, 2
        %v3100 = vadd.f32 %v3098, %v3099
        %v3101 = vrot.slane %v3100, 1
        %v3102 = vadd.f32 %v3100, %v3101
        %v3103 = vadd.f32 %v2559, %v2563
        %v3104 = vadd.f32 %v3103, %v2567
        %v3105 = vadd.f32 %v3104, %v2571
        %v3106 = vadd.f32 %v3105, %v2575
        %v3107 = vadd.f32 %v3106, %v2579
        %v3108 = vadd.f32 %v3107, %v2583
        %v3109 = vadd.f32 %v3108, %v2587
        %v3110 = vrot.slane %v3109, 4
        %v3111 = vadd.f32 %v3109, %v3110
        %v3112 = vrot.slane %v3111, 2
        %v3113 = vadd.f32 %v3111, %v3112
        %v3114 = vrot.slane %v3113, 1
        %v3115 = vadd.f32 %v3113, %v3114
        %v3116 = vadd.f32 %v2560, %v2564
        %v3117 = vadd.f32 %v3116, %v2568
        %v3118 = vadd.f32 %v3117, %v2572
        %v3119 = vadd.f32 %v3118, %v2576
        %v3120 = vadd.f32 %v3119, %v2580
        %v3121 = vadd.f32 %v3120, %v2584
        %v3122 = vadd.f32 %v3121, %v2588
        %v3123 = vrot.slane %v3122, 4
        %v3124 = vadd.f32 %v3122, %v3123
        %v3125 = vrot.slane %v3124, 2
        %v3126 = vadd.f32 %v3124, %v3125
        %v3127 = vrot.slane %v3126, 1
        %v3128 = vadd.f32 %v3126, %v3127
        %v3129 = vadd.f32 %v2561, %v2565
        %v3130 = vadd.f32 %v3129, %v2569
        %v3131 = vadd.f32 %v3130, %v2573
        %v3132 = vadd.f32 %v3131, %v2577
        %v3133 = vadd.f32 %v3132, %v2581
        %v3134 = vadd.f32 %v3133, %v2585
        %v3135 = vadd.f32 %v3134, %v2589
        %v3136 = vrot.slane %v3135, 4
        %v3137 = vadd.f32 %v3135, %v3136
        %v3138 = vrot.slane %v3137, 2
        %v3139 = vadd.f32 %v3137, %v3138
        %v3140 = vrot.slane %v3139, 1
        %v3141 = vadd.f32 %v3139, %v3140
        %v3142 = vadd.f32 %v2590, %v2594
        %v3143 = vadd.f32 %v3142, %v2598
        %v3144 = vadd.f32 %v3143, %v2602
        %v3145 = vadd.f32 %v3144, %v2606
        %v3146 = vadd.f32 %v3145, %v2610
        %v3147 = vadd.f32 %v3146, %v2614
        %v3148 = vadd.f32 %v3147, %v2618
        %v3149 = vrot.slane %v3148, 4
        %v3150 = vadd.f32 %v3148, %v3149
        %v3151 = vrot.slane %v3150, 2
        %v3152 = vadd.f32 %v3150, %v3151
        %v3153 = vrot.slane %v3152, 1
        %v3154 = vadd.f32 %v3152, %v3153
        %v3155 = vadd.f32 %v2591, %v2595
        %v3156 = vadd.f32 %v3155, %v2599
        %v3157 = vadd.f32 %v3156, %v2603
        %v3158 = vadd.f32 %v3157, %v2607
        %v3159 = vadd.f32 %v3158, %v2611
        %v3160 = vadd.f32 %v3159, %v2615
        %v3161 = vadd.f32 %v3160, %v2619
        %v3162 = vrot.slane %v3161, 4
        %v3163 = vadd.f32 %v3161, %v3162
        %v3164 = vrot.slane %v3163, 2
        %v3165 = vadd.f32 %v3163, %v3164
        %v3166 = vrot.slane %v3165, 1
        %v3167 = vadd.f32 %v3165, %v3166
        %v3168 = vadd.f32 %v2592, %v2596
        %v3169 = vadd.f32 %v3168, %v2600
        %v3170 = vadd.f32 %v3169, %v2604
        %v3171 = vadd.f32 %v3170, %v2608
        %v3172 = vadd.f32 %v3171, %v2612
        %v3173 = vadd.f32 %v3172, %v2616
        %v3174 = vadd.f32 %v3173, %v2620
        %v3175 = vrot.slane %v3174, 4
        %v3176 = vadd.f32 %v3174, %v3175
        %v3177 = vrot.slane %v3176, 2
        %v3178 = vadd.f32 %v3176, %v3177
        %v3179 = vrot.slane %v3178, 1
        %v3180 = vadd.f32 %v3178, %v3179
        %v3181 = vadd.f32 %v2593, %v2597
        %v3182 = vadd.f32 %v3181, %v2601
        %v3183 = vadd.f32 %v3182, %v2605
        %v3184 = vadd.f32 %v3183, %v2609
        %v3185 = vadd.f32 %v3184, %v2613
        %v3186 = vadd.f32 %v3185, %v2617
        %v3187 = vadd.f32 %v3186, %v2621
        %v3188 = vrot.slane %v3187, 4
        %v3189 = vadd.f32 %v3187, %v3188
        %v3190 = vrot.slane %v3189, 2
        %v3191 = vadd.f32 %v3189, %v3190
        %v3192 = vrot.slane %v3191, 1
        %v3193 = vadd.f32 %v3191, %v3192
        %v3194 = vadd.f32 %v2622, %v2626
        %v3195 = vadd.f32 %v3194, %v2630
        %v3196 = vadd.f32 %v3195, %v2634
        %v3197 = vadd.f32 %v3196, %v2638
        %v3198 = vadd.f32 %v3197, %v2642
        %v3199 = vadd.f32 %v3198, %v2646
        %v3200 = vadd.f32 %v3199, %v2650
        %v3201 = vrot.slane %v3200, 4
        %v3202 = vadd.f32 %v3200, %v3201
        %v3203 = vrot.slane %v3202, 2
        %v3204 = vadd.f32 %v3202, %v3203
        %v3205 = vrot.slane %v3204, 1
        %v3206 = vadd.f32 %v3204, %v3205
        %v3207 = vadd.f32 %v2623, %v2627
        %v3208 = vadd.f32 %v3207, %v2631
        %v3209 = vadd.f32 %v3208, %v2635
        %v3210 = vadd.f32 %v3209, %v2639
        %v3211 = vadd.f32 %v3210, %v2643
        %v3212 = vadd.f32 %v3211, %v2647
        %v3213 = vadd.f32 %v3212, %v2651
        %v3214 = vrot.slane %v3213, 4
        %v3215 = vadd.f32 %v3213, %v3214
        %v3216 = vrot.slane %v3215, 2
        %v3217 = vadd.f32 %v3215, %v3216
        %v3218 = vrot.slane %v3217, 1
        %v3219 = vadd.f32 %v3217, %v3218
        %v3220 = vadd.f32 %v2624, %v2628
        %v3221 = vadd.f32 %v3220, %v2632
        %v3222 = vadd.f32 %v3221, %v2636
        %v3223 = vadd.f32 %v3222, %v2640
        %v3224 = vadd.f32 %v3223, %v2644
        %v3225 = vadd.f32 %v3224, %v2648
        %v3226 = vadd.f32 %v3225, %v2652
        %v3227 = vrot.slane %v3226, 4
        %v3228 = vadd.f32 %v3226, %v3227
        %v3229 = vrot.slane %v3228, 2
        %v3230 = vadd.f32 %v3228, %v3229
        %v3231 = vrot.slane %v3230, 1
        %v3232 = vadd.f32 %v3230, %v3231
        %v3233 = vadd.f32 %v2625, %v2629
        %v3234 = vadd.f32 %v3233, %v2633
        %v3235 = vadd.f32 %v3234, %v2637
        %v3236 = vadd.f32 %v3235, %v2641
        %v3237 = vadd.f32 %v3236, %v2645
        %v3238 = vadd.f32 %v3237, %v2649
        %v3239 = vadd.f32 %v3238, %v2653
        %v3240 = vrot.slane %v3239, 4
        %v3241 = vadd.f32 %v3239, %v3240
        %v3242 = vrot.slane %v3241, 2
        %v3243 = vadd.f32 %v3241, %v3242
        %v3244 = vrot.slane %v3243, 1
        %v3245 = vadd.f32 %v3243, %v3244
        %v3246 = vadd.f32 %v2654, %v2658
        %v3247 = vadd.f32 %v3246, %v2662
        %v3248 = vadd.f32 %v3247, %v2666
        %v3249 = vadd.f32 %v3248, %v2670
        %v3250 = vadd.f32 %v3249, %v2674
        %v3251 = vadd.f32 %v3250, %v2678
        %v3252 = vadd.f32 %v3251, %v2682
        %v3253 = vrot.slane %v3252, 4
        %v3254 = vadd.f32 %v3252, %v3253
        %v3255 = vrot.slane %v3254, 2
        %v3256 = vadd.f32 %v3254, %v3255
        %v3257 = vrot.slane %v3256, 1
        %v3258 = vadd.f32 %v3256, %v3257
        %v3259 = vadd.f32 %v2655, %v2659
        %v3260 = vadd.f32 %v3259, %v2663
        %v3261 = vadd.f32 %v3260, %v2667
        %v3262 = vadd.f32 %v3261, %v2671
        %v3263 = vadd.f32 %v3262, %v2675
        %v3264 = vadd.f32 %v3263, %v2679
        %v3265 = vadd.f32 %v3264, %v2683
        %v3266 = vrot.slane %v3265, 4
        %v3267 = vadd.f32 %v3265, %v3266
        %v3268 = vrot.slane %v3267, 2
        %v3269 = vadd.f32 %v3267, %v3268
        %v3270 = vrot.slane %v3269, 1
        %v3271 = vadd.f32 %v3269, %v3270
        %v3272 = vadd.f32 %v2656, %v2660
        %v3273 = vadd.f32 %v3272, %v2664
        %v3274 = vadd.f32 %v3273, %v2668
        %v3275 = vadd.f32 %v3274, %v2672
        %v3276 = vadd.f32 %v3275, %v2676
        %v3277 = vadd.f32 %v3276, %v2680
        %v3278 = vadd.f32 %v3277, %v2684
        %v3279 = vrot.slane %v3278, 4
        %v3280 = vadd.f32 %v3278, %v3279
        %v3281 = vrot.slane %v3280, 2
        %v3282 = vadd.f32 %v3280, %v3281
        %v3283 = vrot.slane %v3282, 1
        %v3284 = vadd.f32 %v3282, %v3283
        %v3285 = vadd.f32 %v2657, %v2661
        %v3286 = vadd.f32 %v3285, %v2665
        %v3287 = vadd.f32 %v3286, %v2669
        %v3288 = vadd.f32 %v3287, %v2673
        %v3289 = vadd.f32 %v3288, %v2677
        %v3290 = vadd.f32 %v3289, %v2681
        %v3291 = vadd.f32 %v3290, %v2685
        %v3292 = vrot.slane %v3291, 4
        %v3293 = vadd.f32 %v3291, %v3292
        %v3294 = vrot.slane %v3293, 2
        %v3295 = vadd.f32 %v3293, %v3294
        %v3296 = vrot.slane %v3295, 1
        %v3297 = vadd.f32 %v3295, %v3296
        %v3298 = vadd.f32 %v2686, %v2690
        %v3299 = vadd.f32 %v3298, %v2694
        %v3300 = vadd.f32 %v3299, %v2698
        %v3301 = vadd.f32 %v3300, %v2702
        %v3302 = vadd.f32 %v3301, %v2706
        %v3303 = vadd.f32 %v3302, %v2710
        %v3304 = vadd.f32 %v3303, %v2714
        %v3305 = vrot.slane %v3304, 4
        %v3306 = vadd.f32 %v3304, %v3305
        %v3307 = vrot.slane %v3306, 2
        %v3308 = vadd.f32 %v3306, %v3307
        %v3309 = vrot.slane %v3308, 1
        %v3310 = vadd.f32 %v3308, %v3309
        %v3311 = vadd.f32 %v2687, %v2691
        %v3312 = vadd.f32 %v3311, %v2695
        %v3313 = vadd.f32 %v3312, %v2699
        %v3314 = vadd.f32 %v3313, %v2703
        %v3315 = vadd.f32 %v3314, %v2707
        %v3316 = vadd.f32 %v3315, %v2711
        %v3317 = vadd.f32 %v3316, %v2715
        %v3318 = vrot.slane %v3317, 4
        %v3319 = vadd.f32 %v3317, %v3318
        %v3320 = vrot.slane %v3319, 2
        %v3321 = vadd.f32 %v3319, %v3320
        %v3322 = vrot.slane %v3321, 1
        %v3323 = vadd.f32 %v3321, %v3322
        %v3324 = vadd.f32 %v2688, %v2692
        %v3325 = vadd.f32 %v3324, %v2696
        %v3326 = vadd.f32 %v3325, %v2700
        %v3327 = vadd.f32 %v3326, %v2704
        %v3328 = vadd.f32 %v3327, %v2708
        %v3329 = vadd.f32 %v3328, %v2712
        %v3330 = vadd.f32 %v3329, %v2716
        %v3331 = vrot.slane %v3330, 4
        %v3332 = vadd.f32 %v3330, %v3331
        %v3333 = vrot.slane %v3332, 2
        %v3334 = vadd.f32 %v3332, %v3333
        %v3335 = vrot.slane %v3334, 1
        %v3336 = vadd.f32 %v3334, %v3335
        %v3337 = vadd.f32 %v2689, %v2693
        %v3338 = vadd.f32 %v3337, %v2697
        %v3339 = vadd.f32 %v3338, %v2701
        %v3340 = vadd.f32 %v3339, %v2705
        %v3341 = vadd.f32 %v3340, %v2709
        %v3342 = vadd.f32 %v3341, %v2713
        %v3343 = vadd.f32 %v3342, %v2717
        %v3344 = vrot.slane %v3343, 4
        %v3345 = vadd.f32 %v3343, %v3344
        %v3346 = vrot.slane %v3345, 2
        %v3347 = vadd.f32 %v3345, %v3346
        %v3348 = vrot.slane %v3347, 1
        %v3349 = vadd.f32 %v3347, %v3348
        %v3350 = vadd.f32 %v2718, %v2722
        %v3351 = vadd.f32 %v3350, %v2726
        %v3352 = vadd.f32 %v3351, %v2730
        %v3353 = vadd.f32 %v3352, %v2734
        %v3354 = vadd.f32 %v3353, %v2738
        %v3355 = vadd.f32 %v3354, %v2742
        %v3356 = vadd.f32 %v3355, %v2746
        %v3357 = vrot.slane %v3356, 4
        %v3358 = vadd.f32 %v3356, %v3357
        %v3359 = vrot.slane %v3358, 2
        %v3360 = vadd.f32 %v3358, %v3359
        %v3361 = vrot.slane %v3360, 1
        %v3362 = vadd.f32 %v3360, %v3361
        %v3363 = vadd.f32 %v2719, %v2723
        %v3364 = vadd.f32 %v3363, %v2727
        %v3365 = vadd.f32 %v3364, %v2731
        %v3366 = vadd.f32 %v3365, %v2735
        %v3367 = vadd.f32 %v3366, %v2739
        %v3368 = vadd.f32 %v3367, %v2743
        %v3369 = vadd.f32 %v3368, %v2747
        %v3370 = vrot.slane %v3369, 4
        %v3371 = vadd.f32 %v3369, %v3370
        %v3372 = vrot.slane %v3371, 2
        %v3373 = vadd.f32 %v3371, %v3372
        %v3374 = vrot.slane %v3373, 1
        %v3375 = vadd.f32 %v3373, %v3374
        %v3376 = vadd.f32 %v2720, %v2724
        %v3377 = vadd.f32 %v3376, %v2728
        %v3378 = vadd.f32 %v3377, %v2732
        %v3379 = vadd.f32 %v3378, %v2736
        %v3380 = vadd.f32 %v3379, %v2740
        %v3381 = vadd.f32 %v3380, %v2744
        %v3382 = vadd.f32 %v3381, %v2748
        %v3383 = vrot.slane %v3382, 4
        %v3384 = vadd.f32 %v3382, %v3383
        %v3385 = vrot.slane %v3384, 2
        %v3386 = vadd.f32 %v3384, %v3385
        %v3387 = vrot.slane %v3386, 1
        %v3388 = vadd.f32 %v3386, %v3387
        %v3389 = vadd.f32 %v2721, %v2725
        %v3390 = vadd.f32 %v3389, %v2729
        %v3391 = vadd.f32 %v3390, %v2733
        %v3392 = vadd.f32 %v3391, %v2737
        %v3393 = vadd.f32 %v3392, %v2741
        %v3394 = vadd.f32 %v3393, %v2745
        %v3395 = vadd.f32 %v3394, %v2749
        %v3396 = vrot.slane %v3395, 4
        %v3397 = vadd.f32 %v3395, %v3396
        %v3398 = vrot.slane %v3397, 2
        %v3399 = vadd.f32 %v3397, %v3398
        %v3400 = vrot.slane %v3399, 1
        %v3401 = vadd.f32 %v3399, %v3400
        %v3402 = vadd.f32 %v2750, %v2754
        %v3403 = vadd.f32 %v3402, %v2758
        %v3404 = vadd.f32 %v3403, %v2762
        %v3405 = vadd.f32 %v3404, %v2766
        %v3406 = vadd.f32 %v3405, %v2770
        %v3407 = vadd.f32 %v3406, %v2774
        %v3408 = vadd.f32 %v3407, %v2778
        %v3409 = vrot.slane %v3408, 4
        %v3410 = vadd.f32 %v3408, %v3409
        %v3411 = vrot.slane %v3410, 2
        %v3412 = vadd.f32 %v3410, %v3411
        %v3413 = vrot.slane %v3412, 1
        %v3414 = vadd.f32 %v3412, %v3413
        %v3415 = vadd.f32 %v2751, %v2755
        %v3416 = vadd.f32 %v3415, %v2759
        %v3417 = vadd.f32 %v3416, %v2763
        %v3418 = vadd.f32 %v3417, %v2767
        %v3419 = vadd.f32 %v3418, %v2771
        %v3420 = vadd.f32 %v3419, %v2775
        %v3421 = vadd.f32 %v3420, %v2779
        %v3422 = vrot.slane %v3421, 4
        %v3423 = vadd.f32 %v3421, %v3422
        %v3424 = vrot.slane %v3423, 2
        %v3425 = vadd.f32 %v3423, %v3424
        %v3426 = vrot.slane %v3425, 1
        %v3427 = vadd.f32 %v3425, %v3426
        %v3428 = vadd.f32 %v2752, %v2756
        %v3429 = vadd.f32 %v3428, %v2760
        %v3430 = vadd.f32 %v3429, %v2764
        %v3431 = vadd.f32 %v3430, %v2768
        %v3432 = vadd.f32 %v3431, %v2772
        %v3433 = vadd.f32 %v3432, %v2776
        %v3434 = vadd.f32 %v3433, %v2780
        %v3435 = vrot.slane %v3434, 4
        %v3436 = vadd.f32 %v3434, %v3435
        %v3437 = vrot.slane %v3436, 2
        %v3438 = vadd.f32 %v3436, %v3437
        %v3439 = vrot.slane %v3438, 1
        %v3440 = vadd.f32 %v3438, %v3439
        %v3441 = vadd.f32 %v2753, %v2757
        %v3442 = vadd.f32 %v3441, %v2761
        %v3443 = vadd.f32 %v3442, %v2765
        %v3444 = vadd.f32 %v3443, %v2769
        %v3445 = vadd.f32 %v3444, %v2773
        %v3446 = vadd.f32 %v3445, %v2777
        %v3447 = vadd.f32 %v3446, %v2781
        %v3448 = vrot.slane %v3447, 4
        %v3449 = vadd.f32 %v3447, %v3448
        %v3450 = vrot.slane %v3449, 2
        %v3451 = vadd.f32 %v3449, %v3450
        %v3452 = vrot.slane %v3451, 1
        %v3453 = vadd.f32 %v3451, %v3452
        %v3454 = vadd.f32 %v2782, %v2786
        %v3455 = vadd.f32 %v3454, %v2790
        %v3456 = vadd.f32 %v3455, %v2794
        %v3457 = vadd.f32 %v3456, %v2798
        %v3458 = vadd.f32 %v3457, %v2802
        %v3459 = vadd.f32 %v3458, %v2806
        %v3460 = vadd.f32 %v3459, %v2810
        %v3461 = vrot.slane %v3460, 4
        %v3462 = vadd.f32 %v3460, %v3461
        %v3463 = vrot.slane %v3462, 2
        %v3464 = vadd.f32 %v3462, %v3463
        %v3465 = vrot.slane %v3464, 1
        %v3466 = vadd.f32 %v3464, %v3465
        %v3467 = vadd.f32 %v2783, %v2787
        %v3468 = vadd.f32 %v3467, %v2791
        %v3469 = vadd.f32 %v3468, %v2795
        %v3470 = vadd.f32 %v3469, %v2799
        %v3471 = vadd.f32 %v3470, %v2803
        %v3472 = vadd.f32 %v3471, %v2807
        %v3473 = vadd.f32 %v3472, %v2811
        %v3474 = vrot.slane %v3473, 4
        %v3475 = vadd.f32 %v3473, %v3474
        %v3476 = vrot.slane %v3475, 2
        %v3477 = vadd.f32 %v3475, %v3476
        %v3478 = vrot.slane %v3477, 1
        %v3479 = vadd.f32 %v3477, %v3478
        %v3480 = vadd.f32 %v2784, %v2788
        %v3481 = vadd.f32 %v3480, %v2792
        %v3482 = vadd.f32 %v3481, %v2796
        %v3483 = vadd.f32 %v3482, %v2800
        %v3484 = vadd.f32 %v3483, %v2804
        %v3485 = vadd.f32 %v3484, %v2808
        %v3486 = vadd.f32 %v3485, %v2812
        %v3487 = vrot.slane %v3486, 4
        %v3488 = vadd.f32 %v3486, %v3487
        %v3489 = vrot.slane %v3488, 2
        %v3490 = vadd.f32 %v3488, %v3489
        %v3491 = vrot.slane %v3490, 1
        %v3492 = vadd.f32 %v3490, %v3491
        %v3493 = vadd.f32 %v2785, %v2789
        %v3494 = vadd.f32 %v3493, %v2793
        %v3495 = vadd.f32 %v3494, %v2797
        %v3496 = vadd.f32 %v3495, %v2801
        %v3497 = vadd.f32 %v3496, %v2805
        %v3498 = vadd.f32 %v3497, %v2809
        %v3499 = vadd.f32 %v3498, %v2813
        %v3500 = vrot.slane %v3499, 4
        %v3501 = vadd.f32 %v3499, %v3500
        %v3502 = vrot.slane %v3501, 2
        %v3503 = vadd.f32 %v3501, %v3502
        %v3504 = vrot.slane %v3503, 1
        %v3505 = vadd.f32 %v3503, %v3504
        %v3506 = vadd.f32 %v2814, %v2818
        %v3507 = vadd.f32 %v3506, %v2822
        %v3508 = vadd.f32 %v3507, %v2826
        %v3509 = vadd.f32 %v3508, %v2830
        %v3510 = vadd.f32 %v3509, %v2834
        %v3511 = vadd.f32 %v3510, %v2838
        %v3512 = vadd.f32 %v3511, %v2842
        %v3513 = vrot.slane %v3512, 4
        %v3514 = vadd.f32 %v3512, %v3513
        %v3515 = vrot.slane %v3514, 2
        %v3516 = vadd.f32 %v3514, %v3515
        %v3517 = vrot.slane %v3516, 1
        %v3518 = vadd.f32 %v3516, %v3517
        %v3519 = vadd.f32 %v2815, %v2819
        %v3520 = vadd.f32 %v3519, %v2823
        %v3521 = vadd.f32 %v3520, %v2827
        %v3522 = vadd.f32 %v3521, %v2831
        %v3523 = vadd.f32 %v3522, %v2835
        %v3524 = vadd.f32 %v3523, %v2839
        %v3525 = vadd.f32 %v3524, %v2843
        %v3526 = vrot.slane %v3525, 4
        %v3527 = vadd.f32 %v3525, %v3526
        %v3528 = vrot.slane %v3527, 2
        %v3529 = vadd.f32 %v3527, %v3528
        %v3530 = vrot.slane %v3529, 1
        %v3531 = vadd.f32 %v3529, %v3530
        %v3532 = vadd.f32 %v2816, %v2820
        %v3533 = vadd.f32 %v3532, %v2824
        %v3534 = vadd.f32 %v3533, %v2828
        %v3535 = vadd.f32 %v3534, %v2832
        %v3536 = vadd.f32 %v3535, %v2836
        %v3537 = vadd.f32 %v3536, %v2840
        %v3538 = vadd.f32 %v3537, %v2844
        %v3539 = vrot.slane %v3538, 4
        %v3540 = vadd.f32 %v3538, %v3539
        %v3541 = vrot.slane %v3540, 2
        %v3542 = vadd.f32 %v3540, %v3541
        %v3543 = vrot.slane %v3542, 1
        %v3544 = vadd.f32 %v3542, %v3543
        %v3545 = vadd.f32 %v2817, %v2821
        %v3546 = vadd.f32 %v3545, %v2825
        %v3547 = vadd.f32 %v3546, %v2829
        %v3548 = vadd.f32 %v3547, %v2833
        %v3549 = vadd.f32 %v3548, %v2837
        %v3550 = vadd.f32 %v3549, %v2841
        %v3551 = vadd.f32 %v3550, %v2845
        %v3552 = vrot.slane %v3551, 4
        %v3553 = vadd.f32 %v3551, %v3552
        %v3554 = vrot.slane %v3553, 2
        %v3555 = vadd.f32 %v3553, %v3554
        %v3556 = vrot.slane %v3555, 1
        %v3557 = vadd.f32 %v3555, %v3556
        %v3558 = vadd.f32 %v2846, %v2850
        %v3559 = vadd.f32 %v3558, %v2854
        %v3560 = vadd.f32 %v3559, %v2858
        %v3561 = vadd.f32 %v3560, %v2862
        %v3562 = vadd.f32 %v3561, %v2866
        %v3563 = vadd.f32 %v3562, %v2870
        %v3564 = vadd.f32 %v3563, %v2874
        %v3565 = vrot.slane %v3564, 4
        %v3566 = vadd.f32 %v3564, %v3565
        %v3567 = vrot.slane %v3566, 2
        %v3568 = vadd.f32 %v3566, %v3567
        %v3569 = vrot.slane %v3568, 1
        %v3570 = vadd.f32 %v3568, %v3569
        %v3571 = vadd.f32 %v2847, %v2851
        %v3572 = vadd.f32 %v3571, %v2855
        %v3573 = vadd.f32 %v3572, %v2859
        %v3574 = vadd.f32 %v3573, %v2863
        %v3575 = vadd.f32 %v3574, %v2867
        %v3576 = vadd.f32 %v3575, %v2871
        %v3577 = vadd.f32 %v3576, %v2875
        %v3578 = vrot.slane %v3577, 4
        %v3579 = vadd.f32 %v3577, %v3578
        %v3580 = vrot.slane %v3579, 2
        %v3581 = vadd.f32 %v3579, %v3580
        %v3582 = vrot.slane %v3581, 1
        %v3583 = vadd.f32 %v3581, %v3582
        %v3584 = vadd.f32 %v2848, %v2852
        %v3585 = vadd.f32 %v3584, %v2856
        %v3586 = vadd.f32 %v3585, %v2860
        %v3587 = vadd.f32 %v3586, %v2864
        %v3588 = vadd.f32 %v3587, %v2868
        %v3589 = vadd.f32 %v3588, %v2872
        %v3590 = vadd.f32 %v3589, %v2876
        %v3591 = vrot.slane %v3590, 4
        %v3592 = vadd.f32 %v3590, %v3591
        %v3593 = vrot.slane %v3592, 2
        %v3594 = vadd.f32 %v3592, %v3593
        %v3595 = vrot.slane %v3594, 1
        %v3596 = vadd.f32 %v3594, %v3595
        %v3597 = vadd.f32 %v2849, %v2853
        %v3598 = vadd.f32 %v3597, %v2857
        %v3599 = vadd.f32 %v3598, %v2861
        %v3600 = vadd.f32 %v3599, %v2865
        %v3601 = vadd.f32 %v3600, %v2869
        %v3602 = vadd.f32 %v3601, %v2873
        %v3603 = vadd.f32 %v3602, %v2877
        %v3604 = vrot.slane %v3603, 4
        %v3605 = vadd.f32 %v3603, %v3604
        %v3606 = vrot.slane %v3605, 2
        %v3607 = vadd.f32 %v3605, %v3606
        %v3608 = vrot.slane %v3607, 1
        %v3609 = vadd.f32 %v3607, %v3608
        %v3610 = vadd.f32 %v2878, %v2882
        %v3611 = vadd.f32 %v3610, %v2886
        %v3612 = vadd.f32 %v3611, %v2890
        %v3613 = vadd.f32 %v3612, %v2894
        %v3614 = vadd.f32 %v3613, %v2898
        %v3615 = vadd.f32 %v3614, %v2902
        %v3616 = vadd.f32 %v3615, %v2906
        %v3617 = vrot.slane %v3616, 4
        %v3618 = vadd.f32 %v3616, %v3617
        %v3619 = vrot.slane %v3618, 2
        %v3620 = vadd.f32 %v3618, %v3619
        %v3621 = vrot.slane %v3620, 1
        %v3622 = vadd.f32 %v3620, %v3621
        %v3623 = vadd.f32 %v2879, %v2883
        %v3624 = vadd.f32 %v3623, %v2887
        %v3625 = vadd.f32 %v3624, %v2891
        %v3626 = vadd.f32 %v3625, %v2895
        %v3627 = vadd.f32 %v3626, %v2899
        %v3628 = vadd.f32 %v3627, %v2903
        %v3629 = vadd.f32 %v3628, %v2907
        %v3630 = vrot.slane %v3629, 4
        %v3631 = vadd.f32 %v3629, %v3630
        %v3632 = vrot.slane %v3631, 2
        %v3633 = vadd.f32 %v3631, %v3632
        %v3634 = vrot.slane %v3633, 1
        %v3635 = vadd.f32 %v3633, %v3634
        %v3636 = vadd.f32 %v2880, %v2884
        %v3637 = vadd.f32 %v3636, %v2888
        %v3638 = vadd.f32 %v3637, %v2892
        %v3639 = vadd.f32 %v3638, %v2896
        %v3640 = vadd.f32 %v3639, %v2900
        %v3641 = vadd.f32 %v3640, %v2904
        %v3642 = vadd.f32 %v3641, %v2908
        %v3643 = vrot.slane %v3642, 4
        %v3644 = vadd.f32 %v3642, %v3643
        %v3645 = vrot.slane %v3644, 2
        %v3646 = vadd.f32 %v3644, %v3645
        %v3647 = vrot.slane %v3646, 1
        %v3648 = vadd.f32 %v3646, %v3647
        %v3649 = vadd.f32 %v2881, %v2885
        %v3650 = vadd.f32 %v3649, %v2889
        %v3651 = vadd.f32 %v3650, %v2893
        %v3652 = vadd.f32 %v3651, %v2897
        %v3653 = vadd.f32 %v3652, %v2901
        %v3654 = vadd.f32 %v3653, %v2905
        %v3655 = vadd.f32 %v3654, %v2909
        %v3656 = vrot.slane %v3655, 4
        %v3657 = vadd.f32 %v3655, %v3656
        %v3658 = vrot.slane %v3657, 2
        %v3659 = vadd.f32 %v3657, %v3658
        %v3660 = vrot.slane %v3659, 1
        %v3661 = vadd.f32 %v3659, %v3660
        %v3662 = vadd.f32 %v2910, %v2914
        %v3663 = vadd.f32 %v3662, %v2918
        %v3664 = vadd.f32 %v3663, %v2922
        %v3665 = vadd.f32 %v3664, %v2926
        %v3666 = vadd.f32 %v3665, %v2930
        %v3667 = vadd.f32 %v3666, %v2934
        %v3668 = vadd.f32 %v3667, %v2938
        %v3669 = vrot.slane %v3668, 4
        %v3670 = vadd.f32 %v3668, %v3669
        %v3671 = vrot.slane %v3670, 2
        %v3672 = vadd.f32 %v3670, %v3671
        %v3673 = vrot.slane %v3672, 1
        %v3674 = vadd.f32 %v3672, %v3673
        %v3675 = vadd.f32 %v2911, %v2915
        %v3676 = vadd.f32 %v3675, %v2919
        %v3677 = vadd.f32 %v3676, %v2923
        %v3678 = vadd.f32 %v3677, %v2927
        %v3679 = vadd.f32 %v3678, %v2931
        %v3680 = vadd.f32 %v3679, %v2935
        %v3681 = vadd.f32 %v3680, %v2939
        %v3682 = vrot.slane %v3681, 4
        %v3683 = vadd.f32 %v3681, %v3682
        %v3684 = vrot.slane %v3683, 2
        %v3685 = vadd.f32 %v3683, %v3684
        %v3686 = vrot.slane %v3685, 1
        %v3687 = vadd.f32 %v3685, %v3686
        %v3688 = vadd.f32 %v2912, %v2916
        %v3689 = vadd.f32 %v3688, %v2920
        %v3690 = vadd.f32 %v3689, %v2924
        %v3691 = vadd.f32 %v3690, %v2928
        %v3692 = vadd.f32 %v3691, %v2932
        %v3693 = vadd.f32 %v3692, %v2936
        %v3694 = vadd.f32 %v3693, %v2940
        %v3695 = vrot.slane %v3694, 4
        %v3696 = vadd.f32 %v3694, %v3695
        %v3697 = vrot.slane %v3696, 2
        %v3698 = vadd.f32 %v3696, %v3697
        %v3699 = vrot.slane %v3698, 1
        %v3700 = vadd.f32 %v3698, %v3699
        %v3701 = vadd.f32 %v2913, %v2917
        %v3702 = vadd.f32 %v3701, %v2921
        %v3703 = vadd.f32 %v3702, %v2925
        %v3704 = vadd.f32 %v3703, %v2929
        %v3705 = vadd.f32 %v3704, %v2933
        %v3706 = vadd.f32 %v3705, %v2937
        %v3707 = vadd.f32 %v3706, %v2941
        %v3708 = vrot.slane %v3707, 4
        %v3709 = vadd.f32 %v3707, %v3708
        %v3710 = vrot.slane %v3709, 2
        %v3711 = vadd.f32 %v3709, %v3710
        %v3712 = vrot.slane %v3711, 1
        %v3713 = vadd.f32 %v3711, %v3712
        %v3714 = vadd.f32 %v2942, %v2946
        %v3715 = vadd.f32 %v3714, %v2950
        %v3716 = vadd.f32 %v3715, %v2954
        %v3717 = vadd.f32 %v3716, %v2958
        %v3718 = vadd.f32 %v3717, %v2962
        %v3719 = vadd.f32 %v3718, %v2966
        %v3720 = vadd.f32 %v3719, %v2970
        %v3721 = vrot.slane %v3720, 4
        %v3722 = vadd.f32 %v3720, %v3721
        %v3723 = vrot.slane %v3722, 2
        %v3724 = vadd.f32 %v3722, %v3723
        %v3725 = vrot.slane %v3724, 1
        %v3726 = vadd.f32 %v3724, %v3725
        %v3727 = vadd.f32 %v2943, %v2947
        %v3728 = vadd.f32 %v3727, %v2951
        %v3729 = vadd.f32 %v3728, %v2955
        %v3730 = vadd.f32 %v3729, %v2959
        %v3731 = vadd.f32 %v3730, %v2963
        %v3732 = vadd.f32 %v3731, %v2967
        %v3733 = vadd.f32 %v3732, %v2971
        %v3734 = vrot.slane %v3733, 4
        %v3735 = vadd.f32 %v3733, %v3734
        %v3736 = vrot.slane %v3735, 2
        %v3737 = vadd.f32 %v3735, %v3736
        %v3738 = vrot.slane %v3737, 1
        %v3739 = vadd.f32 %v3737, %v3738
        %v3740 = vadd.f32 %v2944, %v2948
        %v3741 = vadd.f32 %v3740, %v2952
        %v3742 = vadd.f32 %v3741, %v2956
        %v3743 = vadd.f32 %v3742, %v2960
        %v3744 = vadd.f32 %v3743, %v2964
        %v3745 = vadd.f32 %v3744, %v2968
        %v3746 = vadd.f32 %v3745, %v2972
        %v3747 = vrot.slane %v3746, 4
        %v3748 = vadd.f32 %v3746, %v3747
        %v3749 = vrot.slane %v3748, 2
        %v3750 = vadd.f32 %v3748, %v3749
        %v3751 = vrot.slane %v3750, 1
        %v3752 = vadd.f32 %v3750, %v3751
        %v3753 = vadd.f32 %v2945, %v2949
        %v3754 = vadd.f32 %v3753, %v2953
        %v3755 = vadd.f32 %v3754, %v2957
        %v3756 = vadd.f32 %v3755, %v2961
        %v3757 = vadd.f32 %v3756, %v2965
        %v3758 = vadd.f32 %v3757, %v2969
        %v3759 = vadd.f32 %v3758, %v2973
        %v3760 = vrot.slane %v3759, 4
        %v3761 = vadd.f32 %v3759, %v3760
        %v3762 = vrot.slane %v3761, 2
        %v3763 = vadd.f32 %v3761, %v3762
        %v3764 = vrot.slane %v3763, 1
        %v3765 = vadd.f32 %v3763, %v3764
        %v3766 = vadd.f32 %v2974, %v2978
        %v3767 = vadd.f32 %v3766, %v2982
        %v3768 = vadd.f32 %v3767, %v2986
        %v3769 = vadd.f32 %v3768, %v2990
        %v3770 = vadd.f32 %v3769, %v2994
        %v3771 = vadd.f32 %v3770, %v2998
        %v3772 = vadd.f32 %v3771, %v3002
        %v3773 = vrot.slane %v3772, 4
        %v3774 = vadd.f32 %v3772, %v3773
        %v3775 = vrot.slane %v3774, 2
        %v3776 = vadd.f32 %v3774, %v3775
        %v3777 = vrot.slane %v3776, 1
        %v3778 = vadd.f32 %v3776, %v3777
        %v3779 = vadd.f32 %v2975, %v2979
        %v3780 = vadd.f32 %v3779, %v2983
        %v3781 = vadd.f32 %v3780, %v2987
        %v3782 = vadd.f32 %v3781, %v2991
        %v3783 = vadd.f32 %v3782, %v2995
        %v3784 = vadd.f32 %v3783, %v2999
        %v3785 = vadd.f32 %v3784, %v3003
        %v3786 = vrot.slane %v3785, 4
        %v3787 = vadd.f32 %v3785, %v3786
        %v3788 = vrot.slane %v3787, 2
        %v3789 = vadd.f32 %v3787, %v3788
        %v3790 = vrot.slane %v3789, 1
        %v3791 = vadd.f32 %v3789, %v3790
        %v3792 = vadd.f32 %v2976, %v2980
        %v3793 = vadd.f32 %v3792, %v2984
        %v3794 = vadd.f32 %v3793, %v2988
        %v3795 = vadd.f32 %v3794, %v2992
        %v3796 = vadd.f32 %v3795, %v2996
        %v3797 = vadd.f32 %v3796, %v3000
        %v3798 = vadd.f32 %v3797, %v3004
        %v3799 = vrot.slane %v3798, 4
        %v3800 = vadd.f32 %v3798, %v3799
        %v3801 = vrot.slane %v3800, 2
        %v3802 = vadd.f32 %v3800, %v3801
        %v3803 = vrot.slane %v3802, 1
        %v3804 = vadd.f32 %v3802, %v3803
        %v3805 = vadd.f32 %v2977, %v2981
        %v3806 = vadd.f32 %v3805, %v2985
        %v3807 = vadd.f32 %v3806, %v2989
        %v3808 = vadd.f32 %v3807, %v2993
        %v3809 = vadd.f32 %v3808, %v2997
        %v3810 = vadd.f32 %v3809, %v3001
        %v3811 = vadd.f32 %v3810, %v3005
        %v3812 = vrot.slane %v3811, 4
        %v3813 = vadd.f32 %v3811, %v3812
        %v3814 = vrot.slane %v3813, 2
        %v3815 = vadd.f32 %v3813, %v3814
        %v3816 = vrot.slane %v3815, 1
        %v3817 = vadd.f32 %v3815, %v3816
        %v3818 = vadd.f32 %v3006, %v3010
        %v3819 = vadd.f32 %v3818, %v3014
        %v3820 = vadd.f32 %v3819, %v3018
        %v3821 = vadd.f32 %v3820, %v3022
        %v3822 = vadd.f32 %v3821, %v3026
        %v3823 = vadd.f32 %v3822, %v3030
        %v3824 = vadd.f32 %v3823, %v3034
        %v3825 = vrot.slane %v3824, 4
        %v3826 = vadd.f32 %v3824, %v3825
        %v3827 = vrot.slane %v3826, 2
        %v3828 = vadd.f32 %v3826, %v3827
        %v3829 = vrot.slane %v3828, 1
        %v3830 = vadd.f32 %v3828, %v3829
        %v3831 = vadd.f32 %v3007, %v3011
        %v3832 = vadd.f32 %v3831, %v3015
        %v3833 = vadd.f32 %v3832, %v3019
        %v3834 = vadd.f32 %v3833, %v3023
        %v3835 = vadd.f32 %v3834, %v3027
        %v3836 = vadd.f32 %v3835, %v3031
        %v3837 = vadd.f32 %v3836, %v3035
        %v3838 = vrot.slane %v3837, 4
        %v3839 = vadd.f32 %v3837, %v3838
        %v3840 = vrot.slane %v3839, 2
        %v3841 = vadd.f32 %v3839, %v3840
        %v3842 = vrot.slane %v3841, 1
        %v3843 = vadd.f32 %v3841, %v3842
        %v3844 = vadd.f32 %v3008, %v3012
        %v3845 = vadd.f32 %v3844, %v3016
        %v3846 = vadd.f32 %v3845, %v3020
        %v3847 = vadd.f32 %v3846, %v3024
        %v3848 = vadd.f32 %v3847, %v3028
        %v3849 = vadd.f32 %v3848, %v3032
        %v3850 = vadd.f32 %v3849, %v3036
        %v3851 = vrot.slane %v3850, 4
        %v3852 = vadd.f32 %v3850, %v3851
        %v3853 = vrot.slane %v3852, 2
        %v3854 = vadd.f32 %v3852, %v3853
        %v3855 = vrot.slane %v3854, 1
        %v3856 = vadd.f32 %v3854, %v3855
        %v3857 = vadd.f32 %v3009, %v3013
        %v3858 = vadd.f32 %v3857, %v3017
        %v3859 = vadd.f32 %v3858, %v3021
        %v3860 = vadd.f32 %v3859, %v3025
        %v3861 = vadd.f32 %v3860, %v3029
        %v3862 = vadd.f32 %v3861, %v3033
        %v3863 = vadd.f32 %v3862, %v3037
        %v3864 = vrot.slane %v3863, 4
        %v3865 = vadd.f32 %v3863, %v3864
        %v3866 = vrot.slane %v3865, 2
        %v3867 = vadd.f32 %v3865, %v3866
        %v3868 = vrot.slane %v3867, 1
        %v3869 = vadd.f32 %v3867, %v3868
        %v3870 = vadd.f32 %v3050, %v3063
        %v3871 = vadd.f32 %v3102, %v3115
        %v3872 = vadd.f32 %v3154, %v3167
        %v3873 = vadd.f32 %v3206, %v3219
        %v3874 = vadd.f32 %v3258, %v3271
        %v3875 = vadd.f32 %v3310, %v3323
        %v3876 = vadd.f32 %v3362, %v3375
        %v3877 = vadd.f32 %v3414, %v3427
        %v3878 = vadd.f32 %v3466, %v3479
        %v3879 = vadd.f32 %v3518, %v3531
        %v3880 = vadd.f32 %v3570, %v3583
        %v3881 = vadd.f32 %v3622, %v3635
        %v3882 = vadd.f32 %v3674, %v3687
        %v3883 = vadd.f32 %v3726, %v3739
        %v3884 = vadd.f32 %v3778, %v3791
        %v3885 = vadd.f32 %v3830, %v3843
        %v3886 = vadd.f32 %v3870, %v3076
        %v3887 = vadd.f32 %v3871, %v3128
        %v3888 = vadd.f32 %v3872, %v3180
        %v3889 = vadd.f32 %v3873, %v3232
        %v3890 = vadd.f32 %v3874, %v3284
        %v3891 = vadd.f32 %v3875, %v3336
        %v3892 = vadd.f32 %v3876, %v3388
        %v3893 = vadd.f32 %v3877, %v3440
        %v3894 = vadd.f32 %v3878, %v3492
        %v3895 = vadd.f32 %v3879, %v3544
        %v3896 = vadd.f32 %v3880, %v3596
        %v3897 = vadd.f32 %v3881, %v3648
        %v3898 = vadd.f32 %v3882, %v3700
        %v3899 = vadd.f32 %v3883, %v3752
        %v3900 = vadd.f32 %v3884, %v3804
        %v3901 = vadd.f32 %v3885, %v3856
        %v3902 = vadd.f32 %v3886, %v3089
        %v3903 = vadd.f32 %v3887, %v3141
        %v3904 = vadd.f32 %v3888, %v3193
        %v3905 = vadd.f32 %v3889, %v3245
        %v3906 = vadd.f32 %v3890, %v3297
        %v3907 = vadd.f32 %v3891, %v3349
        %v3908 = vadd.f32 %v3892, %v3401
        %v3909 = vadd.f32 %v3893, %v3453
        %v3910 = vadd.f32 %v3894, %v3505
        %v3911 = vadd.f32 %v3895, %v3557
        %v3912 = vadd.f32 %v3896, %v3609
        %v3913 = vadd.f32 %v3897, %v3661
        %v3914 = vadd.f32 %v3898, %v3713
        %v3915 = vadd.f32 %v3899, %v3765
        %v3916 = vadd.f32 %v3900, %v3817
        %v3917 = vadd.f32 %v3901, %v3869
        %v3918 = vmul.f32 %v3902, 0.00390625
        %v3919 = vmul.f32 %v3903, 0.00390625
        %v3920 = vmul.f32 %v3904, 0.00390625
        %v3921 = vmul.f32 %v3905, 0.00390625
        %v3922 = vmul.f32 %v3906, 0.00390625
        %v3923 = vmul.f32 %v3907, 0.00390625
        %v3924 = vmul.f32 %v3908, 0.00390625
        %v3925 = vmul.f32 %v3909, 0.00390625
        %v3926 = vmul.f32 %v3910, 0.00390625
        %v3927 = vmul.f32 %v3911, 0.00390625
        %v3928 = vmul.f32 %v3912, 0.00390625
        %v3929 = vmul.f32 %v3913, 0.00390625
        %v3930 = vmul.f32 %v3914, 0.00390625
        %v3931 = vmul.f32 %v3915, 0.00390625
        %v3932 = vmul.f32 %v3916, 0.00390625
        %v3933 = vmul.f32 %v3917, 0.00390625
        %v3934 = vpack.c.bf16 %v3918, %v3918
        %v3935 = vpack.c.bf16 %v3919, %v3919
        %v3936 = vpack.c.bf16 %v3920, %v3920
        %v3937 = vpack.c.bf16 %v3921, %v3921
        %v3938 = vpack.c.bf16 %v3922, %v3922
        %v3939 = vpack.c.bf16 %v3923, %v3923
        %v3940 = vpack.c.bf16 %v3924, %v3924
        %v3941 = vpack.c.bf16 %v3925, %v3925
        %v3942 = vpack.c.bf16 %v3926, %v3926
        %v3943 = vpack.c.bf16 %v3927, %v3927
        %v3944 = vpack.c.bf16 %v3928, %v3928
        %v3945 = vpack.c.bf16 %v3929, %v3929
        %v3946 = vpack.c.bf16 %v3930, %v3930
        %v3947 = vpack.c.bf16 %v3931, %v3931
        %v3948 = vpack.c.bf16 %v3932, %v3932
        %v3949 = vpack.c.bf16 %v3933, %v3933
        %v3950 = vld [vmem:[%s2] sm:$0xf]
        %v3951 = vld [vmem:[%s2 + $0x4] sm:$0xf]
        %v3952 = vld [vmem:[%s2 + $0x8] sm:$0xf]
        %v3953 = vld [vmem:[%s2 + $0xc] sm:$0xf]
        %v3954 = vld [vmem:[%s2 + $0x10] sm:$0xf]
        %v3955 = vld [vmem:[%s2 + $0x14] sm:$0xf]
        %v3956 = vld [vmem:[%s2 + $0x18] sm:$0xf]
        %v3957 = vld [vmem:[%s2 + $0x1c] sm:$0xf]
        %v3958 = vld [vmem:[%s2 + $0x20] sm:$0xf]
        %v3959 = vld [vmem:[%s2 + $0x24] sm:$0xf]
        %v3960 = vld [vmem:[%s2 + $0x28] sm:$0xf]
        %v3961 = vld [vmem:[%s2 + $0x2c] sm:$0xf]
        %v3962 = vld [vmem:[%s2 + $0x30] sm:$0xf]
        %v3963 = vld [vmem:[%s2 + $0x34] sm:$0xf]
        %v3964 = vld [vmem:[%s2 + $0x38] sm:$0xf]
        %v3965 = vld [vmem:[%s2 + $0x3c] sm:$0xf]
        %v3982 = vunpack.c.l.b16 %v3934
        %v3983 = vunpack.c.l.b16 %v3935
        %v3984 = vunpack.c.l.b16 %v3936
        %v3985 = vunpack.c.l.b16 %v3937
        %v3986 = vunpack.c.l.b16 %v3938
        %v3987 = vunpack.c.l.b16 %v3939
        %v3988 = vunpack.c.l.b16 %v3940
        %v3989 = vunpack.c.l.b16 %v3941
        %v3990 = vunpack.c.l.b16 %v3942
        %v3991 = vunpack.c.l.b16 %v3943
        %v3992 = vunpack.c.l.b16 %v3944
        %v3993 = vunpack.c.l.b16 %v3945
        %v3994 = vunpack.c.l.b16 %v3946
        %v3995 = vunpack.c.l.b16 %v3947
        %v3996 = vunpack.c.l.b16 %v3948
        %v3997 = vunpack.c.l.b16 %v3949
        %vm3998 = vcmask 1041409
        %v3999 = vsel %vm3998, %v3983, %v3982
        %vm4000 = vcmask 1042434
        %v4001 = vsel %vm4000, %v3984, %v3999
        %vm4002 = vcmask 1043459
        %v4003 = vsel %vm4002, %v3985, %v4001
        %vm4004 = vcmask 1044484
        %v4005 = vsel %vm4004, %v3986, %v4003
        %vm4006 = vcmask 1045509
        %v4007 = vsel %vm4006, %v3987, %v4005
        %vm4008 = vcmask 1046534
        %v4009 = vsel %vm4008, %v3988, %v4007
        %vm4010 = vcmask 1047559
        %v4011 = vsel %vm4010, %v3989, %v4009
        %v4012 = vsel %vm3998, %v3991, %v3990
        %v4013 = vsel %vm4000, %v3992, %v4012
        %v4014 = vsel %vm4002, %v3993, %v4013
        %v4015 = vsel %vm4004, %v3994, %v4014
        %v4016 = vsel %vm4006, %v3995, %v4015
        %v4017 = vsel %vm4008, %v3996, %v4016
        %v4018 = vsel %vm4010, %v3997, %v4017
        %v4019 = vpack.c.b16 %v4018, %v4011
        %v4037 = vunpack.c.l.b16 %v3950
        %v4038 = vunpack.c.l.b16 %v3951
        %v4039 = vunpack.c.l.b16 %v3952
        %v4040 = vunpack.c.l.b16 %v3953
        %v4041 = vunpack.c.l.b16 %v3954
        %v4042 = vunpack.c.l.b16 %v3955
        %v4043 = vunpack.c.l.b16 %v3956
        %v4044 = vunpack.c.l.b16 %v3957
        %v4045 = vunpack.c.l.b16 %v3958
        %v4046 = vunpack.c.l.b16 %v3959
        %v4047 = vunpack.c.l.b16 %v3960
        %v4048 = vunpack.c.l.b16 %v3961
        %v4049 = vunpack.c.l.b16 %v3962
        %v4050 = vunpack.c.l.b16 %v3963
        %v4051 = vunpack.c.l.b16 %v3964
        %v4052 = vunpack.c.l.b16 %v3965
        %v4053 = vpack.c.b16 %v4038, %v4037
        %v4054 = vpack.c.b16 %v4040, %v4039
        %v4055 = vpack.c.b16 %v4042, %v4041
        %v4056 = vpack.c.b16 %v4044, %v4043
        %v4057 = vpack.c.b16 %v4046, %v4045
        %v4058 = vpack.c.b16 %v4048, %v4047
        %v4059 = vpack.c.b16 %v4050, %v4049
        %v4060 = vpack.c.b16 %v4052, %v4051
        %4069 = vmatprep.subr.bf16.mxu0 0
        %4070 = vmatpush1.bf16.msra.mxu0 %v4053
        %4071 = vmatprep.subr.bf16.mxu0 0
        %4072 = vmatpush1.bf16.msra.mxu0 %v4054
        %4073 = vmatprep.subr.bf16.mxu0 0
        %4074 = vmatpush1.bf16.msra.mxu0 %v4055
        %4075 = vmatprep.subr.bf16.mxu0 0
        %4076 = vmatpush1.bf16.msra.mxu0 %v4056
        %4077 = vmatprep.subr.bf16.mxu0 0
        %4078 = vmatpush1.bf16.msra.mxu0 %v4057
        %4079 = vmatprep.subr.bf16.mxu0 0
        %4080 = vmatpush1.bf16.msra.mxu0 %v4058
        %4081 = vmatprep.subr.bf16.mxu0 0
        %4082 = vmatpush1.bf16.msra.mxu0 %v4059
        %4083 = vmatprep.subr.bf16.mxu0 0
        %4084 = vmatpush1.bf16.msra.mxu0 %v4060
        %4085 = vmatprep.subr.bf16.mxu0 0
        %4086 = vmatpush1.bf16.msra.mxu0 0
        %4087 = vmatprep.subr.bf16.mxu0 0
        %4088 = vmatpush1.bf16.msra.mxu0 0
        %4089 = vmatprep.subr.bf16.mxu0 0
        %4090 = vmatpush1.bf16.msra.mxu0 0
        %4091 = vmatprep.subr.bf16.mxu0 0
        %4092 = vmatpush1.bf16.msra.mxu0 0
        %4093 = vmatprep.subr.bf16.mxu0 0
        %4094 = vmatpush1.bf16.msra.mxu0 0
        %4095 = vmatprep.subr.bf16.mxu0 0
        %4096 = vmatpush1.bf16.msra.mxu0 0
        %4097 = vmatprep.subr.bf16.mxu0 0
        %4098 = vmatpush1.bf16.msra.mxu0 0
        %4099 = vmatprep.subr.bf16.mxu0 0
        %4100 = vmatpush1.bf16.msra.mxu0 0
        %4101 = vmatprep.mubr.bf16.mxu0 0
        %4102 = vmatmul.mubr.bf16.gmra.mrb[0].mxu0 %v4019
        %v4103 = vpop.f32.mrb[0].mxu0
        %v4104 = vadd.f32 0.0, %v4103
        %v4105 = vpop.f32.mrb[0].mxu0
        %v4106 = vpop.f32.mrb[0].mxu0
        %v4107 = vadd.f32 0.0, %v4106
        %v4108 = vpop.f32.mrb[0].mxu0
        %4109 = vdwg.mxu0
        %v4110 = vmax.f32 %v4104, 0.0
        %v4111 = vmax.f32 %v4107, 0.0
        %v4112 = vpack.c.bf16 %v4111, %v4110
        %v4113 = vld [vmem:[%s3] sm:$0xf]
        %v4114 = vld [vmem:[%s3 + $0x4] sm:$0xf]
        %v4115 = vld [vmem:[%s3 + $0x8] sm:$0xf]
        %v4116 = vld [vmem:[%s3 + $0xc] sm:$0xf]
        %v4117 = vld [vmem:[%s3 + $0x10] sm:$0xf]
        %v4118 = vld [vmem:[%s3 + $0x14] sm:$0xf]
        %v4119 = vld [vmem:[%s3 + $0x18] sm:$0xf]
        %v4120 = vld [vmem:[%s3 + $0x1c] sm:$0xf]
        %v4121 = vld [vmem:[%s3 + $0x20] sm:$0xf]
        %v4122 = vld [vmem:[%s3 + $0x24] sm:$0xf]
        %v4123 = vld [vmem:[%s3 + $0x28] sm:$0xf]
        %v4124 = vld [vmem:[%s3 + $0x2c] sm:$0xf]
        %v4125 = vld [vmem:[%s3 + $0x30] sm:$0xf]
        %v4126 = vld [vmem:[%s3 + $0x34] sm:$0xf]
        %v4127 = vld [vmem:[%s3 + $0x38] sm:$0xf]
        %v4128 = vld [vmem:[%s3 + $0x3c] sm:$0xf]
        %v4145 = vunpack.c.l.b16 %v4113
        %v4146 = vunpack.c.l.b16 %v4114
        %v4147 = vunpack.c.l.b16 %v4115
        %v4148 = vunpack.c.l.b16 %v4116
        %v4149 = vunpack.c.l.b16 %v4117
        %v4150 = vunpack.c.l.b16 %v4118
        %v4151 = vunpack.c.l.b16 %v4119
        %v4152 = vunpack.c.l.b16 %v4120
        %v4153 = vunpack.c.l.b16 %v4121
        %v4154 = vunpack.c.l.b16 %v4122
        %v4155 = vunpack.c.l.b16 %v4123
        %v4156 = vunpack.c.l.b16 %v4124
        %v4157 = vunpack.c.l.b16 %v4125
        %v4158 = vunpack.c.l.b16 %v4126
        %v4159 = vunpack.c.l.b16 %v4127
        %v4160 = vunpack.c.l.b16 %v4128
        %v4161 = vpack.c.b16 %v4146, %v4145
        %v4162 = vpack.c.b16 %v4148, %v4147
        %v4163 = vpack.c.b16 %v4150, %v4149
        %v4164 = vpack.c.b16 %v4152, %v4151
        %v4165 = vpack.c.b16 %v4154, %v4153
        %v4166 = vpack.c.b16 %v4156, %v4155
        %v4167 = vpack.c.b16 %v4158, %v4157
        %v4168 = vpack.c.b16 %v4160, %v4159
        %4177 = vmatprep.subr.bf16.mxu0 0
        %4178 = vmatpush1.bf16.msra.mxu0 %v4161
        %4179 = vmatprep.subr.bf16.mxu0 0
        %4180 = vmatpush1.bf16.msra.mxu0 %v4162
        %4181 = vmatprep.subr.bf16.mxu0 0
        %4182 = vmatpush1.bf16.msra.mxu0 %v4163
        %4183 = vmatprep.subr.bf16.mxu0 0
        %4184 = vmatpush1.bf16.msra.mxu0 %v4164
        %4185 = vmatprep.subr.bf16.mxu0 0
        %4186 = vmatpush1.bf16.msra.mxu0 %v4165
        %4187 = vmatprep.subr.bf16.mxu0 0
        %4188 = vmatpush1.bf16.msra.mxu0 %v4166
        %4189 = vmatprep.subr.bf16.mxu0 0
        %4190 = vmatpush1.bf16.msra.mxu0 %v4167
        %4191 = vmatprep.subr.bf16.mxu0 0
        %4192 = vmatpush1.bf16.msra.mxu0 %v4168
        %4193 = vmatprep.subr.bf16.mxu0 0
        %4194 = vmatpush1.bf16.msra.mxu0 0
        %4195 = vmatprep.subr.bf16.mxu0 0
        %4196 = vmatpush1.bf16.msra.mxu0 0
        %4197 = vmatprep.subr.bf16.mxu0 0
        %4198 = vmatpush1.bf16.msra.mxu0 0
        %4199 = vmatprep.subr.bf16.mxu0 0
        %4200 = vmatpush1.bf16.msra.mxu0 0
        %4201 = vmatprep.subr.bf16.mxu0 0
        %4202 = vmatpush1.bf16.msra.mxu0 0
        %4203 = vmatprep.subr.bf16.mxu0 0
        %4204 = vmatpush1.bf16.msra.mxu0 0
        %4205 = vmatprep.subr.bf16.mxu0 0
        %4206 = vmatpush1.bf16.msra.mxu0 0
        %4207 = vmatprep.subr.bf16.mxu0 0
        %4208 = vmatpush1.bf16.msra.mxu0 0
        %4209 = vmatprep.mubr.bf16.mxu0 0
        %4210 = vmatmul.mubr.bf16.gmra.mrb[0].mxu0 %v4112
        %v4211 = vpop.f32.mrb[0].mxu0
        %v4212 = vadd.f32 0.0, %v4211
        %v4213 = vpop.f32.mrb[0].mxu0
        %v4214 = vpop.f32.mrb[0].mxu0
        %v4215 = vadd.f32 0.0, %v4214
        %v4216 = vpop.f32.mrb[0].mxu0
        %4217 = vdwg.mxu0
        %v4218 = vxor.u32 %v4212, 2147483648
        %v4219 = vxor.u32 %v4215, 2147483648
        %v4220 = vmul.f32 %v4218, 1.442695
        %v4221 = vpow.pop %v4220
        %v4222 = vmul.f32 %v4219, 1.442695
        %v4223 = vpow.pop %v4222
        %v4224 = vadd.f32 %v4221, 1.0
        %v4225 = vadd.f32 %v4223, 1.0
        %v4226 = vrcp.pop %v4224
        %v4227 = vmul.f32 1.0, %v4226
        %v4228 = vrcp.pop %v4225
        %v4229 = vmul.f32 1.0, %v4228
        %v4232 = vrot.slane %v4227, 1
        %v4233 = vrot.slane %v4227, 2
        %v4234 = vrot.slane %v4227, 3
        %v4235 = vrot.slane %v4227, 4
        %v4236 = vrot.slane %v4227, 5
        %v4237 = vrot.slane %v4227, 6
        %v4238 = vrot.slane %v4227, 7
        %v4239 = vrot.slane %v4229, 1
        %v4240 = vrot.slane %v4229, 2
        %v4241 = vrot.slane %v4229, 3
        %v4242 = vrot.slane %v4229, 4
        %v4243 = vrot.slane %v4229, 5
        %v4244 = vrot.slane %v4229, 6
        %v4245 = vrot.slane %v4229, 7
        %v4262 = vmul.f32 %v3918, %v4227
        %v4263 = vmul.f32 %v3919, %v4232
        %v4264 = vmul.f32 %v3920, %v4233
        %v4265 = vmul.f32 %v3921, %v4234
        %v4266 = vmul.f32 %v3922, %v4235
        %v4267 = vmul.f32 %v3923, %v4236
        %v4268 = vmul.f32 %v3924, %v4237
        %v4269 = vmul.f32 %v3925, %v4238
        %v4270 = vmul.f32 %v3926, %v4229
        %v4271 = vmul.f32 %v3927, %v4239
        %v4272 = vmul.f32 %v3928, %v4240
        %v4273 = vmul.f32 %v3929, %v4241
        %v4274 = vmul.f32 %v3930, %v4242
        %v4275 = vmul.f32 %v3931, %v4243
        %v4276 = vmul.f32 %v3932, %v4244
        %v4277 = vmul.f32 %v3933, %v4245
        %v4278 = vpack.c.bf16 %v4262, %v4262
        %v4279 = vpack.c.bf16 %v4263, %v4263
        %v4280 = vpack.c.bf16 %v4264, %v4264
        %v4281 = vpack.c.bf16 %v4265, %v4265
        %v4282 = vpack.c.bf16 %v4266, %v4266
        %v4283 = vpack.c.bf16 %v4267, %v4267
        %v4284 = vpack.c.bf16 %v4268, %v4268
        %v4285 = vpack.c.bf16 %v4269, %v4269
        %v4286 = vpack.c.bf16 %v4270, %v4270
        %v4287 = vpack.c.bf16 %v4271, %v4271
        %v4288 = vpack.c.bf16 %v4272, %v4272
        %v4289 = vpack.c.bf16 %v4273, %v4273
        %v4290 = vpack.c.bf16 %v4274, %v4274
        %v4291 = vpack.c.bf16 %v4275, %v4275
        %v4292 = vpack.c.bf16 %v4276, %v4276
        %v4293 = vpack.c.bf16 %v4277, %v4277
        %v4294 = vld [vmem:[%s4] sm:$0xff]
        %v4295 = vld [vmem:[%s4 + $0x8] sm:$0xff]
        %v4296 = vld [vmem:[%s4 + $0x10] sm:$0xff]
        %v4297 = vld [vmem:[%s4 + $0x18] sm:$0xff]
        %v4298 = vld [vmem:[%s4 + $0x20] sm:$0xff]
        %v4299 = vld [vmem:[%s4 + $0x28] sm:$0xff]
        %v4300 = vld [vmem:[%s4 + $0x30] sm:$0xff]
        %v4301 = vld [vmem:[%s4 + $0x38] sm:$0xff]
        %v4302 = vld [vmem:[%s4 + $0x40] sm:$0xff]
        %v4303 = vld [vmem:[%s4 + $0x48] sm:$0xff]
        %v4304 = vld [vmem:[%s4 + $0x50] sm:$0xff]
        %v4305 = vld [vmem:[%s4 + $0x58] sm:$0xff]
        %v4306 = vld [vmem:[%s4 + $0x60] sm:$0xff]
        %v4307 = vld [vmem:[%s4 + $0x68] sm:$0xff]
        %v4308 = vld [vmem:[%s4 + $0x70] sm:$0xff]
        %v4309 = vld [vmem:[%s4 + $0x78] sm:$0xff]
        %v4310 = vld [vmem:[%s4 + $0x80] sm:$0xff]
        %v4311 = vld [vmem:[%s4 + $0x88] sm:$0xff]
        %v4312 = vld [vmem:[%s4 + $0x90] sm:$0xff]
        %v4313 = vld [vmem:[%s4 + $0x98] sm:$0xff]
        %v4314 = vld [vmem:[%s4 + $0xa0] sm:$0xff]
        %v4315 = vld [vmem:[%s4 + $0xa8] sm:$0xff]
        %v4316 = vld [vmem:[%s4 + $0xb0] sm:$0xff]
        %v4317 = vld [vmem:[%s4 + $0xb8] sm:$0xff]
        %v4318 = vld [vmem:[%s4 + $0xc0] sm:$0xff]
        %v4319 = vld [vmem:[%s4 + $0xc8] sm:$0xff]
        %v4320 = vld [vmem:[%s4 + $0xd0] sm:$0xff]
        %v4321 = vld [vmem:[%s4 + $0xd8] sm:$0xff]
        %v4322 = vld [vmem:[%s4 + $0xe0] sm:$0xff]
        %v4323 = vld [vmem:[%s4 + $0xe8] sm:$0xff]
        %v4324 = vld [vmem:[%s4 + $0xf0] sm:$0xff]
        %v4325 = vld [vmem:[%s4 + $0xf8] sm:$0xff]
        %v4326 = vld [vmem:[%s4 + $0x100] sm:$0xff]
        %v4327 = vld [vmem:[%s4 + $0x108] sm:$0xff]
        %v4328 = vld [vmem:[%s4 + $0x110] sm:$0xff]
        %v4329 = vld [vmem:[%s4 + $0x118] sm:$0xff]
        %v4330 = vld [vmem:[%s4 + $0x120] sm:$0xff]
        %v4331 = vld [vmem:[%s4 + $0x128] sm:$0xff]
        %v4332 = vld [vmem:[%s4 + $0x130] sm:$0xff]
        %v4333 = vld [vmem:[%s4 + $0x138] sm:$0xff]
        %v4334 = vld [vmem:[%s4 + $0x140] sm:$0xff]
        %v4335 = vld [vmem:[%s4 + $0x148] sm:$0xff]
        %v4336 = vld [vmem:[%s4 + $0x150] sm:$0xff]
        %v4337 = vld [vmem:[%s4 + $0x158] sm:$0xff]
        %v4338 = vld [vmem:[%s4 + $0x160] sm:$0xff]
        %v4339 = vld [vmem:[%s4 + $0x168] sm:$0xff]
        %v4340 = vld [vmem:[%s4 + $0x170] sm:$0xff]
        %v4341 = vld [vmem:[%s4 + $0x178] sm:$0xff]
        %v4342 = vld [vmem:[%s4 + $0x180] sm:$0xff]
        %v4343 = vld [vmem:[%s4 + $0x188] sm:$0xff]
        %v4344 = vld [vmem:[%s4 + $0x190] sm:$0xff]
        %v4345 = vld [vmem:[%s4 + $0x198] sm:$0xff]
        %v4346 = vld [vmem:[%s4 + $0x1a0] sm:$0xff]
        %v4347 = vld [vmem:[%s4 + $0x1a8] sm:$0xff]
        %v4348 = vld [vmem:[%s4 + $0x1b0] sm:$0xff]
        %v4349 = vld [vmem:[%s4 + $0x1b8] sm:$0xff]
        %v4350 = vld [vmem:[%s4 + $0x1c0] sm:$0xff]
        %v4351 = vld [vmem:[%s4 + $0x1c8] sm:$0xff]
        %v4352 = vld [vmem:[%s4 + $0x1d0] sm:$0xff]
        %v4353 = vld [vmem:[%s4 + $0x1d8] sm:$0xff]
        %v4354 = vld [vmem:[%s4 + $0x1e0] sm:$0xff]
        %v4355 = vld [vmem:[%s4 + $0x1e8] sm:$0xff]
        %v4356 = vld [vmem:[%s4 + $0x1f0] sm:$0xff]
        %v4357 = vld [vmem:[%s4 + $0x1f8] sm:$0xff]
        %v4358 = vld [vmem:[%s5] sm:$0xff]
        %v4360 = vlaneseq
        %v4361 = vshrl.u32 %v4360, 7
        %v4362 = vsub.s32 0, %v4361
        %v4363 = vrot.slane %v4358, %v4362
        %v4364 = vlaneseq
        %v4365 = vshrl.u32 %v4364, 7
        %v4366 = vsub.s32 1, %v4365
        %v4367 = vrot.slane %v4358, %v4366
        %v4368 = vlaneseq
        %v4369 = vshrl.u32 %v4368, 7
        %v4370 = vsub.s32 2, %v4369
        %v4371 = vrot.slane %v4358, %v4370
        %v4372 = vlaneseq
        %v4373 = vshrl.u32 %v4372, 7
        %v4374 = vsub.s32 3, %v4373
        %v4375 = vrot.slane %v4358, %v4374
        %v4376 = vlaneseq
        %v4377 = vshrl.u32 %v4376, 7
        %v4378 = vsub.s32 4, %v4377
        %v4379 = vrot.slane %v4358, %v4378
        %v4380 = vlaneseq
        %v4381 = vshrl.u32 %v4380, 7
        %v4382 = vsub.s32 5, %v4381
        %v4383 = vrot.slane %v4358, %v4382
        %v4384 = vlaneseq
        %v4385 = vshrl.u32 %v4384, 7
        %v4386 = vsub.s32 6, %v4385
        %v4387 = vrot.slane %v4358, %v4386
        %v4388 = vlaneseq
        %v4389 = vshrl.u32 %v4388, 7
        %v4390 = vsub.s32 7, %v4389
        %v4391 = vrot.slane %v4358, %v4390
        %v4416 = vunpack.c.l.b16 %v4278
        %v4417 = vunpack.c.l.b16 %v4279
        %v4418 = vunpack.c.l.b16 %v4280
        %v4419 = vunpack.c.l.b16 %v4281
        %v4420 = vunpack.c.l.b16 %v4282
        %v4421 = vunpack.c.l.b16 %v4283
        %v4422 = vunpack.c.l.b16 %v4284
        %v4423 = vunpack.c.l.b16 %v4285
        %v4424 = vunpack.c.l.b16 %v4286
        %v4425 = vunpack.c.l.b16 %v4287
        %v4426 = vunpack.c.l.b16 %v4288
        %v4427 = vunpack.c.l.b16 %v4289
        %v4428 = vunpack.c.l.b16 %v4290
        %v4429 = vunpack.c.l.b16 %v4291
        %v4430 = vunpack.c.l.b16 %v4292
        %v4431 = vunpack.c.l.b16 %v4293
        %v4432 = vrot.slane %v4417, 7
        %v4433 = vsel %vm3998, %v4432, %v4416
        %v4434 = vrot.slane %v4418, 6
        %v4435 = vsel %vm4000, %v4434, %v4433
        %v4436 = vrot.slane %v4419, 5
        %v4437 = vsel %vm4002, %v4436, %v4435
        %v4438 = vrot.slane %v4420, 4
        %v4439 = vsel %vm4004, %v4438, %v4437
        %v4440 = vrot.slane %v4421, 3
        %v4441 = vsel %vm4006, %v4440, %v4439
        %v4442 = vrot.slane %v4422, 2
        %v4443 = vsel %vm4008, %v4442, %v4441
        %v4444 = vrot.slane %v4423, 1
        %v4445 = vsel %vm4010, %v4444, %v4443
        %v4446 = vrot.slane %v4425, 7
        %v4447 = vsel %vm3998, %v4446, %v4424
        %v4448 = vrot.slane %v4426, 6
        %v4449 = vsel %vm4000, %v4448, %v4447
        %v4450 = vrot.slane %v4427, 5
        %v4451 = vsel %vm4002, %v4450, %v4449
        %v4452 = vrot.slane %v4428, 4
        %v4453 = vsel %vm4004, %v4452, %v4451
        %v4454 = vrot.slane %v4429, 3
        %v4455 = vsel %vm4006, %v4454, %v4453
        %v4456 = vrot.slane %v4430, 2
        %v4457 = vsel %vm4008, %v4456, %v4455
        %v4458 = vrot.slane %v4431, 1
        %v4459 = vsel %vm4010, %v4458, %v4457
        %v4460 = vpack.c.b16 %v4459, %v4445
        %v4526 = vunpack.c.l.b16 %v4294
        %v4527 = vunpack.c.h.b16 %v4294
        %v4528 = vunpack.c.l.b16 %v4295
        %v4529 = vunpack.c.h.b16 %v4295
        %v4530 = vunpack.c.l.b16 %v4296
        %v4531 = vunpack.c.h.b16 %v4296
        %v4532 = vunpack.c.l.b16 %v4297
        %v4533 = vunpack.c.h.b16 %v4297
        %v4534 = vunpack.c.l.b16 %v4298
        %v4535 = vunpack.c.h.b16 %v4298
        %v4536 = vunpack.c.l.b16 %v4299
        %v4537 = vunpack.c.h.b16 %v4299
        %v4538 = vunpack.c.l.b16 %v4300
        %v4539 = vunpack.c.h.b16 %v4300
        %v4540 = vunpack.c.l.b16 %v4301
        %v4541 = vunpack.c.h.b16 %v4301
        %v4542 = vunpack.c.l.b16 %v4302
        %v4543 = vunpack.c.h.b16 %v4302
        %v4544 = vunpack.c.l.b16 %v4303
        %v4545 = vunpack.c.h.b16 %v4303
        %v4546 = vunpack.c.l.b16 %v4304
        %v4547 = vunpack.c.h.b16 %v4304
        %v4548 = vunpack.c.l.b16 %v4305
        %v4549 = vunpack.c.h.b16 %v4305
        %v4550 = vunpack.c.l.b16 %v4306
        %v4551 = vunpack.c.h.b16 %v4306
        %v4552 = vunpack.c.l.b16 %v4307
        %v4553 = vunpack.c.h.b16 %v4307
        %v4554 = vunpack.c.l.b16 %v4308
        %v4555 = vunpack.c.h.b16 %v4308
        %v4556 = vunpack.c.l.b16 %v4309
        %v4557 = vunpack.c.h.b16 %v4309
        %v4558 = vunpack.c.l.b16 %v4310
        %v4559 = vunpack.c.h.b16 %v4310
        %v4560 = vunpack.c.l.b16 %v4311
        %v4561 = vunpack.c.h.b16 %v4311
        %v4562 = vunpack.c.l.b16 %v4312
        %v4563 = vunpack.c.h.b16 %v4312
        %v4564 = vunpack.c.l.b16 %v4313
        %v4565 = vunpack.c.h.b16 %v4313
        %v4566 = vunpack.c.l.b16 %v4314
        %v4567 = vunpack.c.h.b16 %v4314
        %v4568 = vunpack.c.l.b16 %v4315
        %v4569 = vunpack.c.h.b16 %v4315
        %v4570 = vunpack.c.l.b16 %v4316
        %v4571 = vunpack.c.h.b16 %v4316
        %v4572 = vunpack.c.l.b16 %v4317
        %v4573 = vunpack.c.h.b16 %v4317
        %v4574 = vunpack.c.l.b16 %v4318
        %v4575 = vunpack.c.h.b16 %v4318
        %v4576 = vunpack.c.l.b16 %v4319
        %v4577 = vunpack.c.h.b16 %v4319
        %v4578 = vunpack.c.l.b16 %v4320
        %v4579 = vunpack.c.h.b16 %v4320
        %v4580 = vunpack.c.l.b16 %v4321
        %v4581 = vunpack.c.h.b16 %v4321
        %v4582 = vunpack.c.l.b16 %v4322
        %v4583 = vunpack.c.h.b16 %v4322
        %v4584 = vunpack.c.l.b16 %v4323
        %v4585 = vunpack.c.h.b16 %v4323
        %v4586 = vunpack.c.l.b16 %v4324
        %v4587 = vunpack.c.h.b16 %v4324
        %v4588 = vunpack.c.l.b16 %v4325
        %v4589 = vunpack.c.h.b16 %v4325
        %v4590 = vunpack.c.l.b16 %v4326
        %v4591 = vunpack.c.h.b16 %v4326
        %v4592 = vunpack.c.l.b16 %v4327
        %v4593 = vunpack.c.h.b16 %v4327
        %v4594 = vunpack.c.l.b16 %v4328
        %v4595 = vunpack.c.h.b16 %v4328
        %v4596 = vunpack.c.l.b16 %v4329
        %v4597 = vunpack.c.h.b16 %v4329
        %v4598 = vunpack.c.l.b16 %v4330
        %v4599 = vunpack.c.h.b16 %v4330
        %v4600 = vunpack.c.l.b16 %v4331
        %v4601 = vunpack.c.h.b16 %v4331
        %v4602 = vunpack.c.l.b16 %v4332
        %v4603 = vunpack.c.h.b16 %v4332
        %v4604 = vunpack.c.l.b16 %v4333
        %v4605 = vunpack.c.h.b16 %v4333
        %v4606 = vunpack.c.l.b16 %v4334
        %v4607 = vunpack.c.h.b16 %v4334
        %v4608 = vunpack.c.l.b16 %v4335
        %v4609 = vunpack.c.h.b16 %v4335
        %v4610 = vunpack.c.l.b16 %v4336
        %v4611 = vunpack.c.h.b16 %v4336
        %v4612 = vunpack.c.l.b16 %v4337
        %v4613 = vunpack.c.h.b16 %v4337
        %v4614 = vunpack.c.l.b16 %v4338
        %v4615 = vunpack.c.h.b16 %v4338
        %v4616 = vunpack.c.l.b16 %v4339
        %v4617 = vunpack.c.h.b16 %v4339
        %v4618 = vunpack.c.l.b16 %v4340
        %v4619 = vunpack.c.h.b16 %v4340
        %v4620 = vunpack.c.l.b16 %v4341
        %v4621 = vunpack.c.h.b16 %v4341
        %v4622 = vunpack.c.l.b16 %v4342
        %v4623 = vunpack.c.h.b16 %v4342
        %v4624 = vunpack.c.l.b16 %v4343
        %v4625 = vunpack.c.h.b16 %v4343
        %v4626 = vunpack.c.l.b16 %v4344
        %v4627 = vunpack.c.h.b16 %v4344
        %v4628 = vunpack.c.l.b16 %v4345
        %v4629 = vunpack.c.h.b16 %v4345
        %v4630 = vunpack.c.l.b16 %v4346
        %v4631 = vunpack.c.h.b16 %v4346
        %v4632 = vunpack.c.l.b16 %v4347
        %v4633 = vunpack.c.h.b16 %v4347
        %v4634 = vunpack.c.l.b16 %v4348
        %v4635 = vunpack.c.h.b16 %v4348
        %v4636 = vunpack.c.l.b16 %v4349
        %v4637 = vunpack.c.h.b16 %v4349
        %v4638 = vunpack.c.l.b16 %v4350
        %v4639 = vunpack.c.h.b16 %v4350
        %v4640 = vunpack.c.l.b16 %v4351
        %v4641 = vunpack.c.h.b16 %v4351
        %v4642 = vunpack.c.l.b16 %v4352
        %v4643 = vunpack.c.h.b16 %v4352
        %v4644 = vunpack.c.l.b16 %v4353
        %v4645 = vunpack.c.h.b16 %v4353
        %v4646 = vunpack.c.l.b16 %v4354
        %v4647 = vunpack.c.h.b16 %v4354
        %v4648 = vunpack.c.l.b16 %v4355
        %v4649 = vunpack.c.h.b16 %v4355
        %v4650 = vunpack.c.l.b16 %v4356
        %v4651 = vunpack.c.h.b16 %v4356
        %v4652 = vunpack.c.l.b16 %v4357
        %v4653 = vunpack.c.h.b16 %v4357
        %v4654 = vpack.c.b16 %v4534, %v4526
        %v4655 = vpack.c.b16 %v4535, %v4527
        %v4656 = vpack.c.b16 %v4536, %v4528
        %v4657 = vpack.c.b16 %v4537, %v4529
        %v4658 = vpack.c.b16 %v4538, %v4530
        %v4659 = vpack.c.b16 %v4539, %v4531
        %v4660 = vpack.c.b16 %v4540, %v4532
        %v4661 = vpack.c.b16 %v4541, %v4533
        %v4662 = vpack.c.b16 %v4550, %v4542
        %v4663 = vpack.c.b16 %v4551, %v4543
        %v4664 = vpack.c.b16 %v4552, %v4544
        %v4665 = vpack.c.b16 %v4553, %v4545
        %v4666 = vpack.c.b16 %v4554, %v4546
        %v4667 = vpack.c.b16 %v4555, %v4547
        %v4668 = vpack.c.b16 %v4556, %v4548
        %v4669 = vpack.c.b16 %v4557, %v4549
        %v4670 = vpack.c.b16 %v4566, %v4558
        %v4671 = vpack.c.b16 %v4567, %v4559
        %v4672 = vpack.c.b16 %v4568, %v4560
        %v4673 = vpack.c.b16 %v4569, %v4561
        %v4674 = vpack.c.b16 %v4570, %v4562
        %v4675 = vpack.c.b16 %v4571, %v4563
        %v4676 = vpack.c.b16 %v4572, %v4564
        %v4677 = vpack.c.b16 %v4573, %v4565
        %v4678 = vpack.c.b16 %v4582, %v4574
        %v4679 = vpack.c.b16 %v4583, %v4575
        %v4680 = vpack.c.b16 %v4584, %v4576
        %v4681 = vpack.c.b16 %v4585, %v4577
        %v4682 = vpack.c.b16 %v4586, %v4578
        %v4683 = vpack.c.b16 %v4587, %v4579
        %v4684 = vpack.c.b16 %v4588, %v4580
        %v4685 = vpack.c.b16 %v4589, %v4581
        %v4686 = vpack.c.b16 %v4598, %v4590
        %v4687 = vpack.c.b16 %v4599, %v4591
        %v4688 = vpack.c.b16 %v4600, %v4592
        %v4689 = vpack.c.b16 %v4601, %v4593
        %v4690 = vpack.c.b16 %v4602, %v4594
        %v4691 = vpack.c.b16 %v4603, %v4595
        %v4692 = vpack.c.b16 %v4604, %v4596
        %v4693 = vpack.c.b16 %v4605, %v4597
        %v4694 = vpack.c.b16 %v4614, %v4606
        %v4695 = vpack.c.b16 %v4615, %v4607
        %v4696 = vpack.c.b16 %v4616, %v4608
        %v4697 = vpack.c.b16 %v4617, %v4609
        %v4698 = vpack.c.b16 %v4618, %v4610
        %v4699 = vpack.c.b16 %v4619, %v4611
        %v4700 = vpack.c.b16 %v4620, %v4612
        %v4701 = vpack.c.b16 %v4621, %v4613
        %v4702 = vpack.c.b16 %v4630, %v4622
        %v4703 = vpack.c.b16 %v4631, %v4623
        %v4704 = vpack.c.b16 %v4632, %v4624
        %v4705 = vpack.c.b16 %v4633, %v4625
        %v4706 = vpack.c.b16 %v4634, %v4626
        %v4707 = vpack.c.b16 %v4635, %v4627
        %v4708 = vpack.c.b16 %v4636, %v4628
        %v4709 = vpack.c.b16 %v4637, %v4629
        %v4710 = vpack.c.b16 %v4646, %v4638
        %v4711 = vpack.c.b16 %v4647, %v4639
        %v4712 = vpack.c.b16 %v4648, %v4640
        %v4713 = vpack.c.b16 %v4649, %v4641
        %v4714 = vpack.c.b16 %v4650, %v4642
        %v4715 = vpack.c.b16 %v4651, %v4643
        %v4716 = vpack.c.b16 %v4652, %v4644
        %v4717 = vpack.c.b16 %v4653, %v4645
        %4782 = vmatprep.subr.bf16.mxu0 %v4655
        %4783 = vmatpush1.bf16.msra.mxu0 %v4654
        %4784 = vmatprep.subr.bf16.mxu0 %v4663
        %4785 = vmatpush1.bf16.msra.mxu0 %v4662
        %4786 = vmatprep.subr.bf16.mxu0 %v4671
        %4787 = vmatpush1.bf16.msra.mxu0 %v4670
        %4788 = vmatprep.subr.bf16.mxu0 %v4679
        %4789 = vmatpush1.bf16.msra.mxu0 %v4678
        %4790 = vmatprep.subr.bf16.mxu0 %v4687
        %4791 = vmatpush1.bf16.msra.mxu0 %v4686
        %4792 = vmatprep.subr.bf16.mxu0 %v4695
        %4793 = vmatpush1.bf16.msra.mxu0 %v4694
        %4794 = vmatprep.subr.bf16.mxu0 %v4703
        %4795 = vmatpush1.bf16.msra.mxu0 %v4702
        %4796 = vmatprep.subr.bf16.mxu0 %v4711
        %4797 = vmatpush1.bf16.msra.mxu0 %v4710
        %4798 = vmatprep.subr.bf16.mxu0 0
        %4799 = vmatpush1.bf16.msra.mxu0 0
        %4800 = vmatprep.subr.bf16.mxu0 0
        %4801 = vmatpush1.bf16.msra.mxu0 0
        %4802 = vmatprep.subr.bf16.mxu0 0
        %4803 = vmatpush1.bf16.msra.mxu0 0
        %4804 = vmatprep.subr.bf16.mxu0 0
        %4805 = vmatpush1.bf16.msra.mxu0 0
        %4806 = vmatprep.subr.bf16.mxu0 0
        %4807 = vmatpush1.bf16.msra.mxu0 0
        %4808 = vmatprep.subr.bf16.mxu0 0
        %4809 = vmatpush1.bf16.msra.mxu0 0
        %4810 = vmatprep.subr.bf16.mxu0 0
        %4811 = vmatpush1.bf16.msra.mxu0 0
        %4812 = vmatprep.subr.bf16.mxu0 0
        %4813 = vmatpush1.bf16.msra.mxu0 0
        %4814 = vmatprep.mubr.bf16.mxu0 0
        %4815 = vmatmul.mubr.bf16.gmra.mrb[0].mxu0 %v4460
        %v4816 = vpop.f32.mrb[0].mxu0
        %v4817 = vadd.f32 %v4363, %v4816
        %v4818 = vpop.f32.mrb[0].mxu0
        %v4819 = vadd.f32 %v4367, %v4818
        %v4820 = vpop.f32.mrb[0].mxu0
        %v4821 = vadd.f32 %v4363, %v4820
        %v4822 = vpop.f32.mrb[0].mxu0
        %v4823 = vadd.f32 %v4367, %v4822
        %4824 = vdwg.mxu0
        %4825 = vmatprep.subr.bf16.mxu0 %v4657
        %4826 = vmatpush1.bf16.msra.mxu0 %v4656
        %4827 = vmatprep.subr.bf16.mxu0 %v4665
        %4828 = vmatpush1.bf16.msra.mxu0 %v4664
        %4829 = vmatprep.subr.bf16.mxu0 %v4673
        %4830 = vmatpush1.bf16.msra.mxu0 %v4672
        %4831 = vmatprep.subr.bf16.mxu0 %v4681
        %4832 = vmatpush1.bf16.msra.mxu0 %v4680
        %4833 = vmatprep.subr.bf16.mxu0 %v4689
        %4834 = vmatpush1.bf16.msra.mxu0 %v4688
        %4835 = vmatprep.subr.bf16.mxu0 %v4697
        %4836 = vmatpush1.bf16.msra.mxu0 %v4696
        %4837 = vmatprep.subr.bf16.mxu0 %v4705
        %4838 = vmatpush1.bf16.msra.mxu0 %v4704
        %4839 = vmatprep.subr.bf16.mxu0 %v4713
        %4840 = vmatpush1.bf16.msra.mxu0 %v4712
        %4841 = vmatprep.subr.bf16.mxu0 0
        %4842 = vmatpush1.bf16.msra.mxu0 0
        %4843 = vmatprep.subr.bf16.mxu0 0
        %4844 = vmatpush1.bf16.msra.mxu0 0
        %4845 = vmatprep.subr.bf16.mxu0 0
        %4846 = vmatpush1.bf16.msra.mxu0 0
        %4847 = vmatprep.subr.bf16.mxu0 0
        %4848 = vmatpush1.bf16.msra.mxu0 0
        %4849 = vmatprep.subr.bf16.mxu0 0
        %4850 = vmatpush1.bf16.msra.mxu0 0
        %4851 = vmatprep.subr.bf16.mxu0 0
        %4852 = vmatpush1.bf16.msra.mxu0 0
        %4853 = vmatprep.subr.bf16.mxu0 0
        %4854 = vmatpush1.bf16.msra.mxu0 0
        %4855 = vmatprep.subr.bf16.mxu0 0
        %4856 = vmatpush1.bf16.msra.mxu0 0
        %4857 = vmatprep.mubr.bf16.mxu0 0
        %4858 = vmatmul.mubr.bf16.gmra.mrb[0].mxu0 %v4460
        %v4859 = vpop.f32.mrb[0].mxu0
        %v4860 = vadd.f32 %v4371, %v4859
        %v4861 = vpop.f32.mrb[0].mxu0
        %v4862 = vadd.f32 %v4375, %v4861
        %v4863 = vpop.f32.mrb[0].mxu0
        %v4864 = vadd.f32 %v4371, %v4863
        %v4865 = vpop.f32.mrb[0].mxu0
        %v4866 = vadd.f32 %v4375, %v4865
        %4867 = vdwg.mxu0
        %4868 = vmatprep.subr.bf16.mxu0 %v4659
        %4869 = vmatpush1.bf16.msra.mxu0 %v4658
        %4870 = vmatprep.subr.bf16.mxu0 %v4667
        %4871 = vmatpush1.bf16.msra.mxu0 %v4666
        %4872 = vmatprep.subr.bf16.mxu0 %v4675
        %4873 = vmatpush1.bf16.msra.mxu0 %v4674
        %4874 = vmatprep.subr.bf16.mxu0 %v4683
        %4875 = vmatpush1.bf16.msra.mxu0 %v4682
        %4876 = vmatprep.subr.bf16.mxu0 %v4691
        %4877 = vmatpush1.bf16.msra.mxu0 %v4690
        %4878 = vmatprep.subr.bf16.mxu0 %v4699
        %4879 = vmatpush1.bf16.msra.mxu0 %v4698
        %4880 = vmatprep.subr.bf16.mxu0 %v4707
        %4881 = vmatpush1.bf16.msra.mxu0 %v4706
        %4882 = vmatprep.subr.bf16.mxu0 %v4715
        %4883 = vmatpush1.bf16.msra.mxu0 %v4714
        %4884 = vmatprep.subr.bf16.mxu0 0
        %4885 = vmatpush1.bf16.msra.mxu0 0
        %4886 = vmatprep.subr.bf16.mxu0 0
        %4887 = vmatpush1.bf16.msra.mxu0 0
        %4888 = vmatprep.subr.bf16.mxu0 0
        %4889 = vmatpush1.bf16.msra.mxu0 0
        %4890 = vmatprep.subr.bf16.mxu0 0
        %4891 = vmatpush1.bf16.msra.mxu0 0
        %4892 = vmatprep.subr.bf16.mxu0 0
        %4893 = vmatpush1.bf16.msra.mxu0 0
        %4894 = vmatprep.subr.bf16.mxu0 0
        %4895 = vmatpush1.bf16.msra.mxu0 0
        %4896 = vmatprep.subr.bf16.mxu0 0
        %4897 = vmatpush1.bf16.msra.mxu0 0
        %4898 = vmatprep.subr.bf16.mxu0 0
        %4899 = vmatpush1.bf16.msra.mxu0 0
        %4900 = vmatprep.mubr.bf16.mxu0 0
        %4901 = vmatmul.mubr.bf16.gmra.mrb[0].mxu0 %v4460
        %v4902 = vpop.f32.mrb[0].mxu0
        %v4903 = vadd.f32 %v4379, %v4902
        %v4904 = vpop.f32.mrb[0].mxu0
        %v4905 = vadd.f32 %v4383, %v4904
        %v4906 = vpop.f32.mrb[0].mxu0
        %v4907 = vadd.f32 %v4379, %v4906
        %v4908 = vpop.f32.mrb[0].mxu0
        %v4909 = vadd.f32 %v4383, %v4908
        %4910 = vdwg.mxu0
        %4911 = vmatprep.subr.bf16.mxu0 %v4661
        %4912 = vmatpush1.bf16.msra.mxu0 %v4660
        %4913 = vmatprep.subr.bf16.mxu0 %v4669
        %4914 = vmatpush1.bf16.msra.mxu0 %v4668
        %4915 = vmatprep.subr.bf16.mxu0 %v4677
        %4916 = vmatpush1.bf16.msra.mxu0 %v4676
        %4917 = vmatprep.subr.bf16.mxu0 %v4685
        %4918 = vmatpush1.bf16.msra.mxu0 %v4684
        %4919 = vmatprep.subr.bf16.mxu0 %v4693
        %4920 = vmatpush1.bf16.msra.mxu0 %v4692
        %4921 = vmatprep.subr.bf16.mxu0 %v4701
        %4922 = vmatpush1.bf16.msra.mxu0 %v4700
        %4923 = vmatprep.subr.bf16.mxu0 %v4709
        %4924 = vmatpush1.bf16.msra.mxu0 %v4708
        %4925 = vmatprep.subr.bf16.mxu0 %v4717
        %4926 = vmatpush1.bf16.msra.mxu0 %v4716
        %4927 = vmatprep.subr.bf16.mxu0 0
        %4928 = vmatpush1.bf16.msra.mxu0 0
        %4929 = vmatprep.subr.bf16.mxu0 0
        %4930 = vmatpush1.bf16.msra.mxu0 0
        %4931 = vmatprep.subr.bf16.mxu0 0
        %4932 = vmatpush1.bf16.msra.mxu0 0
        %4933 = vmatprep.subr.bf16.mxu0 0
        %4934 = vmatpush1.bf16.msra.mxu0 0
        %4935 = vmatprep.subr.bf16.mxu0 0
        %4936 = vmatpush1.bf16.msra.mxu0 0
        %4937 = vmatprep.subr.bf16.mxu0 0
        %4938 = vmatpush1.bf16.msra.mxu0 0
        %4939 = vmatprep.subr.bf16.mxu0 0
        %4940 = vmatpush1.bf16.msra.mxu0 0
        %4941 = vmatprep.subr.bf16.mxu0 0
        %4942 = vmatpush1.bf16.msra.mxu0 0
        %4943 = vmatprep.mubr.bf16.mxu0 0
        %4944 = vmatmul.mubr.bf16.gmra.mrb[0].mxu0 %v4460
        %v4945 = vpop.f32.mrb[0].mxu0
        %v4946 = vadd.f32 %v4387, %v4945
        %v4947 = vpop.f32.mrb[0].mxu0
        %v4948 = vadd.f32 %v4391, %v4947
        %v4949 = vpop.f32.mrb[0].mxu0
        %v4950 = vadd.f32 %v4387, %v4949
        %v4951 = vpop.f32.mrb[0].mxu0
        %v4952 = vadd.f32 %v4391, %v4951
        %4953 = vdwg.mxu0
        %v4954 = vmax.f32 %v4817, 0.0
        %v4955 = vmax.f32 %v4819, 0.0
        %v4956 = vmax.f32 %v4860, 0.0
        %v4957 = vmax.f32 %v4862, 0.0
        %v4958 = vmax.f32 %v4903, 0.0
        %v4959 = vmax.f32 %v4905, 0.0
        %v4960 = vmax.f32 %v4946, 0.0
        %v4961 = vmax.f32 %v4948, 0.0
        %v4962 = vmax.f32 %v4821, 0.0
        %v4963 = vmax.f32 %v4823, 0.0
        %v4964 = vmax.f32 %v4864, 0.0
        %v4965 = vmax.f32 %v4866, 0.0
        %v4966 = vmax.f32 %v4907, 0.0
        %v4967 = vmax.f32 %v4909, 0.0
        %v4968 = vmax.f32 %v4950, 0.0
        %v4969 = vmax.f32 %v4952, 0.0
        %v4970 = vpack.c.bf16 %v4962, %v4954
        %v4971 = vpack.c.bf16 %v4963, %v4955
        %v4972 = vpack.c.bf16 %v4964, %v4956
        %v4973 = vpack.c.bf16 %v4965, %v4957
        %v4974 = vpack.c.bf16 %v4966, %v4958
        %v4975 = vpack.c.bf16 %v4967, %v4959
        %v4976 = vpack.c.bf16 %v4968, %v4960
        %v4977 = vpack.c.bf16 %v4969, %v4961
        %v4978 = vld [vmem:[%s6] sm:$0xf]
        %v4979 = vld [vmem:[%s6 + $0x4] sm:$0xf]
        %v4980 = vld [vmem:[%s6 + $0x8] sm:$0xf]
        %v4981 = vld [vmem:[%s6 + $0xc] sm:$0xf]
        %v4982 = vld [vmem:[%s6 + $0x10] sm:$0xf]
        %v4983 = vld [vmem:[%s6 + $0x14] sm:$0xf]
        %v4984 = vld [vmem:[%s6 + $0x18] sm:$0xf]
        %v4985 = vld [vmem:[%s6 + $0x1c] sm:$0xf]
        %v4986 = vld [vmem:[%s6 + $0x20] sm:$0xf]
        %v4987 = vld [vmem:[%s6 + $0x24] sm:$0xf]
        %v4988 = vld [vmem:[%s6 + $0x28] sm:$0xf]
        %v4989 = vld [vmem:[%s6 + $0x2c] sm:$0xf]
        %v4990 = vld [vmem:[%s6 + $0x30] sm:$0xf]
        %v4991 = vld [vmem:[%s6 + $0x34] sm:$0xf]
        %v4992 = vld [vmem:[%s6 + $0x38] sm:$0xf]
        %v4993 = vld [vmem:[%s6 + $0x3c] sm:$0xf]
        %v4994 = vld [vmem:[%s6 + $0x40] sm:$0xf]
        %v4995 = vld [vmem:[%s6 + $0x44] sm:$0xf]
        %v4996 = vld [vmem:[%s6 + $0x48] sm:$0xf]
        %v4997 = vld [vmem:[%s6 + $0x4c] sm:$0xf]
        %v4998 = vld [vmem:[%s6 + $0x50] sm:$0xf]
        %v4999 = vld [vmem:[%s6 + $0x54] sm:$0xf]
        %v5000 = vld [vmem:[%s6 + $0x58] sm:$0xf]
        %v5001 = vld [vmem:[%s6 + $0x5c] sm:$0xf]
        %v5002 = vld [vmem:[%s6 + $0x60] sm:$0xf]
        %v5003 = vld [vmem:[%s6 + $0x64] sm:$0xf]
        %v5004 = vld [vmem:[%s6 + $0x68] sm:$0xf]
        %v5005 = vld [vmem:[%s6 + $0x6c] sm:$0xf]
        %v5006 = vld [vmem:[%s6 + $0x70] sm:$0xf]
        %v5007 = vld [vmem:[%s6 + $0x74] sm:$0xf]
        %v5008 = vld [vmem:[%s6 + $0x78] sm:$0xf]
        %v5009 = vld [vmem:[%s6 + $0x7c] sm:$0xf]
        %v5010 = vld [vmem:[%s6 + $0x80] sm:$0xf]
        %v5011 = vld [vmem:[%s6 + $0x84] sm:$0xf]
        %v5012 = vld [vmem:[%s6 + $0x88] sm:$0xf]
        %v5013 = vld [vmem:[%s6 + $0x8c] sm:$0xf]
        %v5014 = vld [vmem:[%s6 + $0x90] sm:$0xf]
        %v5015 = vld [vmem:[%s6 + $0x94] sm:$0xf]
        %v5016 = vld [vmem:[%s6 + $0x98] sm:$0xf]
        %v5017 = vld [vmem:[%s6 + $0x9c] sm:$0xf]
        %v5018 = vld [vmem:[%s6 + $0xa0] sm:$0xf]
        %v5019 = vld [vmem:[%s6 + $0xa4] sm:$0xf]
        %v5020 = vld [vmem:[%s6 + $0xa8] sm:$0xf]
        %v5021 = vld [vmem:[%s6 + $0xac] sm:$0xf]
        %v5022 = vld [vmem:[%s6 + $0xb0] sm:$0xf]
        %v5023 = vld [vmem:[%s6 + $0xb4] sm:$0xf]
        %v5024 = vld [vmem:[%s6 + $0xb8] sm:$0xf]
        %v5025 = vld [vmem:[%s6 + $0xbc] sm:$0xf]
        %v5026 = vld [vmem:[%s6 + $0xc0] sm:$0xf]
        %v5027 = vld [vmem:[%s6 + $0xc4] sm:$0xf]
        %v5028 = vld [vmem:[%s6 + $0xc8] sm:$0xf]
        %v5029 = vld [vmem:[%s6 + $0xcc] sm:$0xf]
        %v5030 = vld [vmem:[%s6 + $0xd0] sm:$0xf]
        %v5031 = vld [vmem:[%s6 + $0xd4] sm:$0xf]
        %v5032 = vld [vmem:[%s6 + $0xd8] sm:$0xf]
        %v5033 = vld [vmem:[%s6 + $0xdc] sm:$0xf]
        %v5034 = vld [vmem:[%s6 + $0xe0] sm:$0xf]
        %v5035 = vld [vmem:[%s6 + $0xe4] sm:$0xf]
        %v5036 = vld [vmem:[%s6 + $0xe8] sm:$0xf]
        %v5037 = vld [vmem:[%s6 + $0xec] sm:$0xf]
        %v5038 = vld [vmem:[%s6 + $0xf0] sm:$0xf]
        %v5039 = vld [vmem:[%s6 + $0xf4] sm:$0xf]
        %v5040 = vld [vmem:[%s6 + $0xf8] sm:$0xf]
        %v5041 = vld [vmem:[%s6 + $0xfc] sm:$0xf]
        %v5042 = vld [vmem:[%s6 + $0x100] sm:$0xf]
        %v5043 = vld [vmem:[%s6 + $0x104] sm:$0xf]
        %v5044 = vld [vmem:[%s6 + $0x108] sm:$0xf]
        %v5045 = vld [vmem:[%s6 + $0x10c] sm:$0xf]
        %v5046 = vld [vmem:[%s6 + $0x110] sm:$0xf]
        %v5047 = vld [vmem:[%s6 + $0x114] sm:$0xf]
        %v5048 = vld [vmem:[%s6 + $0x118] sm:$0xf]
        %v5049 = vld [vmem:[%s6 + $0x11c] sm:$0xf]
        %v5050 = vld [vmem:[%s6 + $0x120] sm:$0xf]
        %v5051 = vld [vmem:[%s6 + $0x124] sm:$0xf]
        %v5052 = vld [vmem:[%s6 + $0x128] sm:$0xf]
        %v5053 = vld [vmem:[%s6 + $0x12c] sm:$0xf]
        %v5054 = vld [vmem:[%s6 + $0x130] sm:$0xf]
        %v5055 = vld [vmem:[%s6 + $0x134] sm:$0xf]
        %v5056 = vld [vmem:[%s6 + $0x138] sm:$0xf]
        %v5057 = vld [vmem:[%s6 + $0x13c] sm:$0xf]
        %v5058 = vld [vmem:[%s6 + $0x140] sm:$0xf]
        %v5059 = vld [vmem:[%s6 + $0x144] sm:$0xf]
        %v5060 = vld [vmem:[%s6 + $0x148] sm:$0xf]
        %v5061 = vld [vmem:[%s6 + $0x14c] sm:$0xf]
        %v5062 = vld [vmem:[%s6 + $0x150] sm:$0xf]
        %v5063 = vld [vmem:[%s6 + $0x154] sm:$0xf]
        %v5064 = vld [vmem:[%s6 + $0x158] sm:$0xf]
        %v5065 = vld [vmem:[%s6 + $0x15c] sm:$0xf]
        %v5066 = vld [vmem:[%s6 + $0x160] sm:$0xf]
        %v5067 = vld [vmem:[%s6 + $0x164] sm:$0xf]
        %v5068 = vld [vmem:[%s6 + $0x168] sm:$0xf]
        %v5069 = vld [vmem:[%s6 + $0x16c] sm:$0xf]
        %v5070 = vld [vmem:[%s6 + $0x170] sm:$0xf]
        %v5071 = vld [vmem:[%s6 + $0x174] sm:$0xf]
        %v5072 = vld [vmem:[%s6 + $0x178] sm:$0xf]
        %v5073 = vld [vmem:[%s6 + $0x17c] sm:$0xf]
        %v5074 = vld [vmem:[%s6 + $0x180] sm:$0xf]
        %v5075 = vld [vmem:[%s6 + $0x184] sm:$0xf]
        %v5076 = vld [vmem:[%s6 + $0x188] sm:$0xf]
        %v5077 = vld [vmem:[%s6 + $0x18c] sm:$0xf]
        %v5078 = vld [vmem:[%s6 + $0x190] sm:$0xf]
        %v5079 = vld [vmem:[%s6 + $0x194] sm:$0xf]
        %v5080 = vld [vmem:[%s6 + $0x198] sm:$0xf]
        %v5081 = vld [vmem:[%s6 + $0x19c] sm:$0xf]
        %v5082 = vld [vmem:[%s6 + $0x1a0] sm:$0xf]
        %v5083 = vld [vmem:[%s6 + $0x1a4] sm:$0xf]
        %v5084 = vld [vmem:[%s6 + $0x1a8] sm:$0xf]
        %v5085 = vld [vmem:[%s6 + $0x1ac] sm:$0xf]
        %v5086 = vld [vmem:[%s6 + $0x1b0] sm:$0xf]
        %v5087 = vld [vmem:[%s6 + $0x1b4] sm:$0xf]
        %v5088 = vld [vmem:[%s6 + $0x1b8] sm:$0xf]
        %v5089 = vld [vmem:[%s6 + $0x1bc] sm:$0xf]
        %v5090 = vld [vmem:[%s6 + $0x1c0] sm:$0xf]
        %v5091 = vld [vmem:[%s6 + $0x1c4] sm:$0xf]
        %v5092 = vld [vmem:[%s6 + $0x1c8] sm:$0xf]
        %v5093 = vld [vmem:[%s6 + $0x1cc] sm:$0xf]
        %v5094 = vld [vmem:[%s6 + $0x1d0] sm:$0xf]
        %v5095 = vld [vmem:[%s6 + $0x1d4] sm:$0xf]
        %v5096 = vld [vmem:[%s6 + $0x1d8] sm:$0xf]
        %v5097 = vld [vmem:[%s6 + $0x1dc] sm:$0xf]
        %v5098 = vld [vmem:[%s6 + $0x1e0] sm:$0xf]
        %v5099 = vld [vmem:[%s6 + $0x1e4] sm:$0xf]
        %v5100 = vld [vmem:[%s6 + $0x1e8] sm:$0xf]
        %v5101 = vld [vmem:[%s6 + $0x1ec] sm:$0xf]
        %v5102 = vld [vmem:[%s6 + $0x1f0] sm:$0xf]
        %v5103 = vld [vmem:[%s6 + $0x1f4] sm:$0xf]
        %v5104 = vld [vmem:[%s6 + $0x1f8] sm:$0xf]
        %v5105 = vld [vmem:[%s6 + $0x1fc] sm:$0xf]
        %v5106 = vld [vmem:[%s7] sm:$0x1]
        %v5108 = vlaneseq
        %v5109 = vshrl.u32 %v5108, 7
        %v5110 = vsub.s32 0, %v5109
        %v5111 = vrot.slane %v5106, %v5110
        %v5241 = vunpack.c.l.b16 %v4978
        %v5242 = vunpack.c.l.b16 %v4979
        %v5243 = vunpack.c.l.b16 %v4980
        %v5244 = vunpack.c.l.b16 %v4981
        %v5245 = vunpack.c.l.b16 %v4982
        %v5246 = vunpack.c.l.b16 %v4983
        %v5247 = vunpack.c.l.b16 %v4984
        %v5248 = vunpack.c.l.b16 %v4985
        %v5249 = vunpack.c.l.b16 %v4986
        %v5250 = vunpack.c.l.b16 %v4987
        %v5251 = vunpack.c.l.b16 %v4988
        %v5252 = vunpack.c.l.b16 %v4989
        %v5253 = vunpack.c.l.b16 %v4990
        %v5254 = vunpack.c.l.b16 %v4991
        %v5255 = vunpack.c.l.b16 %v4992
        %v5256 = vunpack.c.l.b16 %v4993
        %v5257 = vunpack.c.l.b16 %v4994
        %v5258 = vunpack.c.l.b16 %v4995
        %v5259 = vunpack.c.l.b16 %v4996
        %v5260 = vunpack.c.l.b16 %v4997
        %v5261 = vunpack.c.l.b16 %v4998
        %v5262 = vunpack.c.l.b16 %v4999
        %v5263 = vunpack.c.l.b16 %v5000
        %v5264 = vunpack.c.l.b16 %v5001
        %v5265 = vunpack.c.l.b16 %v5002
        %v5266 = vunpack.c.l.b16 %v5003
        %v5267 = vunpack.c.l.b16 %v5004
        %v5268 = vunpack.c.l.b16 %v5005
        %v5269 = vunpack.c.l.b16 %v5006
        %v5270 = vunpack.c.l.b16 %v5007
        %v5271 = vunpack.c.l.b16 %v5008
        %v5272 = vunpack.c.l.b16 %v5009
        %v5273 = vunpack.c.l.b16 %v5010
        %v5274 = vunpack.c.l.b16 %v5011
        %v5275 = vunpack.c.l.b16 %v5012
        %v5276 = vunpack.c.l.b16 %v5013
        %v5277 = vunpack.c.l.b16 %v5014
        %v5278 = vunpack.c.l.b16 %v5015
        %v5279 = vunpack.c.l.b16 %v5016
        %v5280 = vunpack.c.l.b16 %v5017
        %v5281 = vunpack.c.l.b16 %v5018
        %v5282 = vunpack.c.l.b16 %v5019
        %v5283 = vunpack.c.l.b16 %v5020
        %v5284 = vunpack.c.l.b16 %v5021
        %v5285 = vunpack.c.l.b16 %v5022
        %v5286 = vunpack.c.l.b16 %v5023
        %v5287 = vunpack.c.l.b16 %v5024
        %v5288 = vunpack.c.l.b16 %v5025
        %v5289 = vunpack.c.l.b16 %v5026
        %v5290 = vunpack.c.l.b16 %v5027
        %v5291 = vunpack.c.l.b16 %v5028
        %v5292 = vunpack.c.l.b16 %v5029
        %v5293 = vunpack.c.l.b16 %v5030
        %v5294 = vunpack.c.l.b16 %v5031
        %v5295 = vunpack.c.l.b16 %v5032
        %v5296 = vunpack.c.l.b16 %v5033
        %v5297 = vunpack.c.l.b16 %v5034
        %v5298 = vunpack.c.l.b16 %v5035
        %v5299 = vunpack.c.l.b16 %v5036
        %v5300 = vunpack.c.l.b16 %v5037
        %v5301 = vunpack.c.l.b16 %v5038
        %v5302 = vunpack.c.l.b16 %v5039
        %v5303 = vunpack.c.l.b16 %v5040
        %v5304 = vunpack.c.l.b16 %v5041
        %v5305 = vunpack.c.l.b16 %v5042
        %v5306 = vunpack.c.l.b16 %v5043
        %v5307 = vunpack.c.l.b16 %v5044
        %v5308 = vunpack.c.l.b16 %v5045
        %v5309 = vunpack.c.l.b16 %v5046
        %v5310 = vunpack.c.l.b16 %v5047
        %v5311 = vunpack.c.l.b16 %v5048
        %v5312 = vunpack.c.l.b16 %v5049
        %v5313 = vunpack.c.l.b16 %v5050
        %v5314 = vunpack.c.l.b16 %v5051
        %v5315 = vunpack.c.l.b16 %v5052
        %v5316 = vunpack.c.l.b16 %v5053
        %v5317 = vunpack.c.l.b16 %v5054
        %v5318 = vunpack.c.l.b16 %v5055
        %v5319 = vunpack.c.l.b16 %v5056
        %v5320 = vunpack.c.l.b16 %v5057
        %v5321 = vunpack.c.l.b16 %v5058
        %v5322 = vunpack.c.l.b16 %v5059
        %v5323 = vunpack.c.l.b16 %v5060
        %v5324 = vunpack.c.l.b16 %v5061
        %v5325 = vunpack.c.l.b16 %v5062
        %v5326 = vunpack.c.l.b16 %v5063
        %v5327 = vunpack.c.l.b16 %v5064
        %v5328 = vunpack.c.l.b16 %v5065
        %v5329 = vunpack.c.l.b16 %v5066
        %v5330 = vunpack.c.l.b16 %v5067
        %v5331 = vunpack.c.l.b16 %v5068
        %v5332 = vunpack.c.l.b16 %v5069
        %v5333 = vunpack.c.l.b16 %v5070
        %v5334 = vunpack.c.l.b16 %v5071
        %v5335 = vunpack.c.l.b16 %v5072
        %v5336 = vunpack.c.l.b16 %v5073
        %v5337 = vunpack.c.l.b16 %v5074
        %v5338 = vunpack.c.l.b16 %v5075
        %v5339 = vunpack.c.l.b16 %v5076
        %v5340 = vunpack.c.l.b16 %v5077
        %v5341 = vunpack.c.l.b16 %v5078
        %v5342 = vunpack.c.l.b16 %v5079
        %v5343 = vunpack.c.l.b16 %v5080
        %v5344 = vunpack.c.l.b16 %v5081
        %v5345 = vunpack.c.l.b16 %v5082
        %v5346 = vunpack.c.l.b16 %v5083
        %v5347 = vunpack.c.l.b16 %v5084
        %v5348 = vunpack.c.l.b16 %v5085
        %v5349 = vunpack.c.l.b16 %v5086
        %v5350 = vunpack.c.l.b16 %v5087
        %v5351 = vunpack.c.l.b16 %v5088
        %v5352 = vunpack.c.l.b16 %v5089
        %v5353 = vunpack.c.l.b16 %v5090
        %v5354 = vunpack.c.l.b16 %v5091
        %v5355 = vunpack.c.l.b16 %v5092
        %v5356 = vunpack.c.l.b16 %v5093
        %v5357 = vunpack.c.l.b16 %v5094
        %v5358 = vunpack.c.l.b16 %v5095
        %v5359 = vunpack.c.l.b16 %v5096
        %v5360 = vunpack.c.l.b16 %v5097
        %v5361 = vunpack.c.l.b16 %v5098
        %v5362 = vunpack.c.l.b16 %v5099
        %v5363 = vunpack.c.l.b16 %v5100
        %v5364 = vunpack.c.l.b16 %v5101
        %v5365 = vunpack.c.l.b16 %v5102
        %v5366 = vunpack.c.l.b16 %v5103
        %v5367 = vunpack.c.l.b16 %v5104
        %v5368 = vunpack.c.l.b16 %v5105
        %v5369 = vpack.c.b16 %v5242, %v5241
        %v5370 = vpack.c.b16 %v5244, %v5243
        %v5371 = vpack.c.b16 %v5246, %v5245
        %v5372 = vpack.c.b16 %v5248, %v5247
        %v5373 = vpack.c.b16 %v5250, %v5249
        %v5374 = vpack.c.b16 %v5252, %v5251
        %v5375 = vpack.c.b16 %v5254, %v5253
        %v5376 = vpack.c.b16 %v5256, %v5255
        %v5377 = vpack.c.b16 %v5258, %v5257
        %v5378 = vpack.c.b16 %v5260, %v5259
        %v5379 = vpack.c.b16 %v5262, %v5261
        %v5380 = vpack.c.b16 %v5264, %v5263
        %v5381 = vpack.c.b16 %v5266, %v5265
        %v5382 = vpack.c.b16 %v5268, %v5267
        %v5383 = vpack.c.b16 %v5270, %v5269
        %v5384 = vpack.c.b16 %v5272, %v5271
        %v5385 = vpack.c.b16 %v5274, %v5273
        %v5386 = vpack.c.b16 %v5276, %v5275
        %v5387 = vpack.c.b16 %v5278, %v5277
        %v5388 = vpack.c.b16 %v5280, %v5279
        %v5389 = vpack.c.b16 %v5282, %v5281
        %v5390 = vpack.c.b16 %v5284, %v5283
        %v5391 = vpack.c.b16 %v5286, %v5285
        %v5392 = vpack.c.b16 %v5288, %v5287
        %v5393 = vpack.c.b16 %v5290, %v5289
        %v5394 = vpack.c.b16 %v5292, %v5291
        %v5395 = vpack.c.b16 %v5294, %v5293
        %v5396 = vpack.c.b16 %v5296, %v5295
        %v5397 = vpack.c.b16 %v5298, %v5297
        %v5398 = vpack.c.b16 %v5300, %v5299
        %v5399 = vpack.c.b16 %v5302, %v5301
        %v5400 = vpack.c.b16 %v5304, %v5303
        %v5401 = vpack.c.b16 %v5306, %v5305
        %v5402 = vpack.c.b16 %v5308, %v5307
        %v5403 = vpack.c.b16 %v5310, %v5309
        %v5404 = vpack.c.b16 %v5312, %v5311
        %v5405 = vpack.c.b16 %v5314, %v5313
        %v5406 = vpack.c.b16 %v5316, %v5315
        %v5407 = vpack.c.b16 %v5318, %v5317
        %v5408 = vpack.c.b16 %v5320, %v5319
        %v5409 = vpack.c.b16 %v5322, %v5321
        %v5410 = vpack.c.b16 %v5324, %v5323
        %v5411 = vpack.c.b16 %v5326, %v5325
        %v5412 = vpack.c.b16 %v5328, %v5327
        %v5413 = vpack.c.b16 %v5330, %v5329
        %v5414 = vpack.c.b16 %v5332, %v5331
        %v5415 = vpack.c.b16 %v5334, %v5333
        %v5416 = vpack.c.b16 %v5336, %v5335
        %v5417 = vpack.c.b16 %v5338, %v5337
        %v5418 = vpack.c.b16 %v5340, %v5339
        %v5419 = vpack.c.b16 %v5342, %v5341
        %v5420 = vpack.c.b16 %v5344, %v5343
        %v5421 = vpack.c.b16 %v5346, %v5345
        %v5422 = vpack.c.b16 %v5348, %v5347
        %v5423 = vpack.c.b16 %v5350, %v5349
        %v5424 = vpack.c.b16 %v5352, %v5351
        %v5425 = vpack.c.b16 %v5354, %v5353
        %v5426 = vpack.c.b16 %v5356, %v5355
        %v5427 = vpack.c.b16 %v5358, %v5357
        %v5428 = vpack.c.b16 %v5360, %v5359
        %v5429 = vpack.c.b16 %v5362, %v5361
        %v5430 = vpack.c.b16 %v5364, %v5363
        %v5431 = vpack.c.b16 %v5366, %v5365
        %v5432 = vpack.c.b16 %v5368, %v5367
        %5497 = vmatprep.subr.bf16.mxu0 0
        %5498 = vmatpush1.bf16.msra.mxu0 %v5369
        %5499 = vmatprep.subr.bf16.mxu0 0
        %5500 = vmatpush1.bf16.msra.mxu0 %v5370
        %5501 = vmatprep.subr.bf16.mxu0 0
        %5502 = vmatpush1.bf16.msra.mxu0 %v5371
        %5503 = vmatprep.subr.bf16.mxu0 0
        %5504 = vmatpush1.bf16.msra.mxu0 %v5372
        %5505 = vmatprep.subr.bf16.mxu0 0
        %5506 = vmatpush1.bf16.msra.mxu0 %v5373
        %5507 = vmatprep.subr.bf16.mxu0 0
        %5508 = vmatpush1.bf16.msra.mxu0 %v5374
        %5509 = vmatprep.subr.bf16.mxu0 0
        %5510 = vmatpush1.bf16.msra.mxu0 %v5375
        %5511 = vmatprep.subr.bf16.mxu0 0
        %5512 = vmatpush1.bf16.msra.mxu0 %v5376
        %5513 = vmatprep.subr.bf16.mxu0 0
        %5514 = vmatpush1.bf16.msra.mxu0 %v5377
        %5515 = vmatprep.subr.bf16.mxu0 0
        %5516 = vmatpush1.bf16.msra.mxu0 %v5378
        %5517 = vmatprep.subr.bf16.mxu0 0
        %5518 = vmatpush1.bf16.msra.mxu0 %v5379
        %5519 = vmatprep.subr.bf16.mxu0 0
        %5520 = vmatpush1.bf16.msra.mxu0 %v5380
        %5521 = vmatprep.subr.bf16.mxu0 0
        %5522 = vmatpush1.bf16.msra.mxu0 %v5381
        %5523 = vmatprep.subr.bf16.mxu0 0
        %5524 = vmatpush1.bf16.msra.mxu0 %v5382
        %5525 = vmatprep.subr.bf16.mxu0 0
        %5526 = vmatpush1.bf16.msra.mxu0 %v5383
        %5527 = vmatprep.subr.bf16.mxu0 0
        %5528 = vmatpush1.bf16.msra.mxu0 %v5384
        %5529 = vmatprep.mubr.bf16.mxu0 %v4971
        %5530 = vmatmul.mubr.bf16.gmra.mrb[0].mxu0 %v4970
        %v5531 = vpop.f32.mrb[0].mxu0
        %v5532 = vadd.f32 %v5111, %v5531
        %v5533 = vpop.f32.mrb[0].mxu0
        %v5534 = vpop.f32.mrb[0].mxu0
        %v5535 = vadd.f32 %v5111, %v5534
        %v5536 = vpop.f32.mrb[0].mxu0
        %5537 = vdwg.mxu0
        %5538 = vmatprep.subr.bf16.mxu0 0
        %5539 = vmatpush1.bf16.msra.mxu0 %v5385
        %5540 = vmatprep.subr.bf16.mxu0 0
        %5541 = vmatpush1.bf16.msra.mxu0 %v5386
        %5542 = vmatprep.subr.bf16.mxu0 0
        %5543 = vmatpush1.bf16.msra.mxu0 %v5387
        %5544 = vmatprep.subr.bf16.mxu0 0
        %5545 = vmatpush1.bf16.msra.mxu0 %v5388
        %5546 = vmatprep.subr.bf16.mxu0 0
        %5547 = vmatpush1.bf16.msra.mxu0 %v5389
        %5548 = vmatprep.subr.bf16.mxu0 0
        %5549 = vmatpush1.bf16.msra.mxu0 %v5390
        %5550 = vmatprep.subr.bf16.mxu0 0
        %5551 = vmatpush1.bf16.msra.mxu0 %v5391
        %5552 = vmatprep.subr.bf16.mxu0 0
        %5553 = vmatpush1.bf16.msra.mxu0 %v5392
        %5554 = vmatprep.subr.bf16.mxu0 0
        %5555 = vmatpush1.bf16.msra.mxu0 %v5393
        %5556 = vmatprep.subr.bf16.mxu0 0
        %5557 = vmatpush1.bf16.msra.mxu0 %v5394
        %5558 = vmatprep.subr.bf16.mxu0 0
        %5559 = vmatpush1.bf16.msra.mxu0 %v5395
        %5560 = vmatprep.subr.bf16.mxu0 0
        %5561 = vmatpush1.bf16.msra.mxu0 %v5396
        %5562 = vmatprep.subr.bf16.mxu0 0
        %5563 = vmatpush1.bf16.msra.mxu0 %v5397
        %5564 = vmatprep.subr.bf16.mxu0 0
        %5565 = vmatpush1.bf16.msra.mxu0 %v5398
        %5566 = vmatprep.subr.bf16.mxu0 0
        %5567 = vmatpush1.bf16.msra.mxu0 %v5399
        %5568 = vmatprep.subr.bf16.mxu0 0
        %5569 = vmatpush1.bf16.msra.mxu0 %v5400
        %5570 = vmatprep.mubr.bf16.mxu0 %v4973
        %5571 = vmatmul.mubr.bf16.gmra.mrb[0].mxu0 %v4972
        %v5572 = vpop.f32.mrb[0].mxu0
        %v5573 = vadd.f32 %v5532, %v5572
        %v5574 = vpop.f32.mrb[0].mxu0
        %v5575 = vpop.f32.mrb[0].mxu0
        %v5576 = vadd.f32 %v5535, %v5575
        %v5577 = vpop.f32.mrb[0].mxu0
        %5578 = vdwg.mxu0
        %5579 = vmatprep.subr.bf16.mxu0 0
        %5580 = vmatpush1.bf16.msra.mxu0 %v5401
        %5581 = vmatprep.subr.bf16.mxu0 0
        %5582 = vmatpush1.bf16.msra.mxu0 %v5402
        %5583 = vmatprep.subr.bf16.mxu0 0
        %5584 = vmatpush1.bf16.msra.mxu0 %v5403
        %5585 = vmatprep.subr.bf16.mxu0 0
        %5586 = vmatpush1.bf16.msra.mxu0 %v5404
        %5587 = vmatprep.subr.bf16.mxu0 0
        %5588 = vmatpush1.bf16.msra.mxu0 %v5405
        %5589 = vmatprep.subr.bf16.mxu0 0
        %5590 = vmatpush1.bf16.msra.mxu0 %v5406
        %5591 = vmatprep.subr.bf16.mxu0 0
        %5592 = vmatpush1.bf16.msra.mxu0 %v5407
        %5593 = vmatprep.subr.bf16.mxu0 0
        %5594 = vmatpush1.bf16.msra.mxu0 %v5408
        %5595 = vmatprep.subr.bf16.mxu0 0
        %5596 = vmatpush1.bf16.msra.mxu0 %v5409
        %5597 = vmatprep.subr.bf16.mxu0 0
        %5598 = vmatpush1.bf16.msra.mxu0 %v5410
        %5599 = vmatprep.subr.bf16.mxu0 0
        %5600 = vmatpush1.bf16.msra.mxu0 %v5411
        %5601 = vmatprep.subr.bf16.mxu0 0
        %5602 = vmatpush1.bf16.msra.mxu0 %v5412
        %5603 = vmatprep.subr.bf16.mxu0 0
        %5604 = vmatpush1.bf16.msra.mxu0 %v5413
        %5605 = vmatprep.subr.bf16.mxu0 0
        %5606 = vmatpush1.bf16.msra.mxu0 %v5414
        %5607 = vmatprep.subr.bf16.mxu0 0
        %5608 = vmatpush1.bf16.msra.mxu0 %v5415
        %5609 = vmatprep.subr.bf16.mxu0 0
        %5610 = vmatpush1.bf16.msra.mxu0 %v5416
        %5611 = vmatprep.mubr.bf16.mxu0 %v4975
        %5612 = vmatmul.mubr.bf16.gmra.mrb[0].mxu0 %v4974
        %v5613 = vpop.f32.mrb[0].mxu0
        %v5614 = vadd.f32 %v5573, %v5613
        %v5615 = vpop.f32.mrb[0].mxu0
        %v5616 = vpop.f32.mrb[0].mxu0
        %v5617 = vadd.f32 %v5576, %v5616
        %v5618 = vpop.f32.mrb[0].mxu0
        %5619 = vdwg.mxu0
        %5620 = vmatprep.subr.bf16.mxu0 0
        %5621 = vmatpush1.bf16.msra.mxu0 %v5417
        %5622 = vmatprep.subr.bf16.mxu0 0
        %5623 = vmatpush1.bf16.msra.mxu0 %v5418
        %5624 = vmatprep.subr.bf16.mxu0 0
        %5625 = vmatpush1.bf16.msra.mxu0 %v5419
        %5626 = vmatprep.subr.bf16.mxu0 0
        %5627 = vmatpush1.bf16.msra.mxu0 %v5420
        %5628 = vmatprep.subr.bf16.mxu0 0
        %5629 = vmatpush1.bf16.msra.mxu0 %v5421
        %5630 = vmatprep.subr.bf16.mxu0 0
        %5631 = vmatpush1.bf16.msra.mxu0 %v5422
        %5632 = vmatprep.subr.bf16.mxu0 0
        %5633 = vmatpush1.bf16.msra.mxu0 %v5423
        %5634 = vmatprep.subr.bf16.mxu0 0
        %5635 = vmatpush1.bf16.msra.mxu0 %v5424
        %5636 = vmatprep.subr.bf16.mxu0 0
        %5637 = vmatpush1.bf16.msra.mxu0 %v5425
        %5638 = vmatprep.subr.bf16.mxu0 0
        %5639 = vmatpush1.bf16.msra.mxu0 %v5426
        %5640 = vmatprep.subr.bf16.mxu0 0
        %5641 = vmatpush1.bf16.msra.mxu0 %v5427
        %5642 = vmatprep.subr.bf16.mxu0 0
        %5643 = vmatpush1.bf16.msra.mxu0 %v5428
        %5644 = vmatprep.subr.bf16.mxu0 0
        %5645 = vmatpush1.bf16.msra.mxu0 %v5429
        %5646 = vmatprep.subr.bf16.mxu0 0
        %5647 = vmatpush1.bf16.msra.mxu0 %v5430
        %5648 = vmatprep.subr.bf16.mxu0 0
        %5649 = vmatpush1.bf16.msra.mxu0 %v5431
        %5650 = vmatprep.subr.bf16.mxu0 0
        %5651 = vmatpush1.bf16.msra.mxu0 %v5432
        %5652 = vmatprep.mubr.bf16.mxu0 %v4977
        %5653 = vmatmul.mubr.bf16.gmra.mrb[0].mxu0 %v4976
        %v5654 = vpop.f32.mrb[0].mxu0
        %v5655 = vadd.f32 %v5614, %v5654
        %v5656 = vpop.f32.mrb[0].mxu0
        %v5657 = vpop.f32.mrb[0].mxu0
        %v5658 = vadd.f32 %v5617, %v5657
        %v5659 = vpop.f32.mrb[0].mxu0
        %5660 = vdwg.mxu0
        %v5661 = vmax.f32 %v5655, 0.0
        %v5662 = vmax.f32 %v5658, 0.0
        %v5663 = vpack.c.bf16 %v5662, %v5661
        %v5664 = vld [vmem:[%s8] sm:$0xf]
        %v5665 = vld [vmem:[%s8 + $0x4] sm:$0xf]
        %v5666 = vld [vmem:[%s8 + $0x8] sm:$0xf]
        %v5667 = vld [vmem:[%s8 + $0xc] sm:$0xf]
        %v5668 = vld [vmem:[%s8 + $0x10] sm:$0xf]
        %v5669 = vld [vmem:[%s8 + $0x14] sm:$0xf]
        %v5670 = vld [vmem:[%s8 + $0x18] sm:$0xf]
        %v5671 = vld [vmem:[%s8 + $0x1c] sm:$0xf]
        %v5672 = vld [vmem:[%s8 + $0x20] sm:$0xf]
        %v5673 = vld [vmem:[%s8 + $0x24] sm:$0xf]
        %v5674 = vld [vmem:[%s8 + $0x28] sm:$0xf]
        %v5675 = vld [vmem:[%s8 + $0x2c] sm:$0xf]
        %v5676 = vld [vmem:[%s8 + $0x30] sm:$0xf]
        %v5677 = vld [vmem:[%s8 + $0x34] sm:$0xf]
        %v5678 = vld [vmem:[%s8 + $0x38] sm:$0xf]
        %v5679 = vld [vmem:[%s8 + $0x3c] sm:$0xf]
        %v5680 = vld [vmem:[%s9] sm:$0x1]
        %v5682 = vlaneseq
        %v5683 = vshrl.u32 %v5682, 7
        %v5684 = vsub.s32 0, %v5683
        %v5685 = vrot.slane %v5680, %v5684
        %v5703 = vunpack.c.l.b16 %v5664
        %v5704 = vunpack.c.l.b16 %v5665
        %v5705 = vunpack.c.l.b16 %v5666
        %v5706 = vunpack.c.l.b16 %v5667
        %v5707 = vunpack.c.l.b16 %v5668
        %v5708 = vunpack.c.l.b16 %v5669
        %v5709 = vunpack.c.l.b16 %v5670
        %v5710 = vunpack.c.l.b16 %v5671
        %v5711 = vunpack.c.l.b16 %v5672
        %v5712 = vunpack.c.l.b16 %v5673
        %v5713 = vunpack.c.l.b16 %v5674
        %v5714 = vunpack.c.l.b16 %v5675
        %v5715 = vunpack.c.l.b16 %v5676
        %v5716 = vunpack.c.l.b16 %v5677
        %v5717 = vunpack.c.l.b16 %v5678
        %v5718 = vunpack.c.l.b16 %v5679
        %v5719 = vpack.c.b16 %v5704, %v5703
        %v5720 = vpack.c.b16 %v5706, %v5705
        %v5721 = vpack.c.b16 %v5708, %v5707
        %v5722 = vpack.c.b16 %v5710, %v5709
        %v5723 = vpack.c.b16 %v5712, %v5711
        %v5724 = vpack.c.b16 %v5714, %v5713
        %v5725 = vpack.c.b16 %v5716, %v5715
        %v5726 = vpack.c.b16 %v5718, %v5717
        %5735 = vmatprep.subr.bf16.mxu0 0
        %5736 = vmatpush1.bf16.msra.mxu0 %v5719
        %5737 = vmatprep.subr.bf16.mxu0 0
        %5738 = vmatpush1.bf16.msra.mxu0 %v5720
        %5739 = vmatprep.subr.bf16.mxu0 0
        %5740 = vmatpush1.bf16.msra.mxu0 %v5721
        %5741 = vmatprep.subr.bf16.mxu0 0
        %5742 = vmatpush1.bf16.msra.mxu0 %v5722
        %5743 = vmatprep.subr.bf16.mxu0 0
        %5744 = vmatpush1.bf16.msra.mxu0 %v5723
        %5745 = vmatprep.subr.bf16.mxu0 0
        %5746 = vmatpush1.bf16.msra.mxu0 %v5724
        %5747 = vmatprep.subr.bf16.mxu0 0
        %5748 = vmatpush1.bf16.msra.mxu0 %v5725
        %5749 = vmatprep.subr.bf16.mxu0 0
        %5750 = vmatpush1.bf16.msra.mxu0 %v5726
        %5751 = vmatprep.subr.bf16.mxu0 0
        %5752 = vmatpush1.bf16.msra.mxu0 0
        %5753 = vmatprep.subr.bf16.mxu0 0
        %5754 = vmatpush1.bf16.msra.mxu0 0
        %5755 = vmatprep.subr.bf16.mxu0 0
        %5756 = vmatpush1.bf16.msra.mxu0 0
        %5757 = vmatprep.subr.bf16.mxu0 0
        %5758 = vmatpush1.bf16.msra.mxu0 0
        %5759 = vmatprep.subr.bf16.mxu0 0
        %5760 = vmatpush1.bf16.msra.mxu0 0
        %5761 = vmatprep.subr.bf16.mxu0 0
        %5762 = vmatpush1.bf16.msra.mxu0 0
        %5763 = vmatprep.subr.bf16.mxu0 0
        %5764 = vmatpush1.bf16.msra.mxu0 0
        %5765 = vmatprep.subr.bf16.mxu0 0
        %5766 = vmatpush1.bf16.msra.mxu0 0
        %5767 = vmatprep.mubr.bf16.mxu0 0
        %5768 = vmatmul.mubr.bf16.gmra.mrb[0].mxu0 %v5663
        %v5769 = vpop.f32.mrb[0].mxu0
        %v5770 = vadd.f32 %v5685, %v5769
        %v5771 = vpop.f32.mrb[0].mxu0
        %v5772 = vpop.f32.mrb[0].mxu0
        %v5773 = vadd.f32 %v5685, %v5772
        %v5774 = vpop.f32.mrb[0].mxu0
        %5775 = vdwg.mxu0
        %5776 = vst [vmem:[%s353] sm:$0xff] %v5770
        %5777 = vst [vmem:[%s353 + $0x8] sm:$0xff] %v5773
        %s5778 = sand.u32 %s247, 1
        %s5779 = scalar_lea.sflag [#allocation3], %s5778
        %s5780 = sand.u32 %s247, 1
        %s5781 = smul.addr %s5780, 16
        %s5782 = scalar_lea.vmem [#allocation2], %s5781
        // Predicated region
        $region61: #{tpu_custom_call.1} parent=59 // pred_check
          %p5783 = pneg %p257
        $region62: #{tpu_custom_call.1} parent=59 // pred_check_branch
          %5785 = sbr.rel (%p5783) target = $region64
        $region63: #{tpu_custom_call.1} parent=59 // pred_region
          %s5786 = smul.u32 2, %s24
          %s5788 = ssub.s32 256, 256
          %5789 = vsyncadd %s5779, %s5788
          %s5790 = smul.addr %s5786, 128
          %s5791 = scalar_lea.hbm %s10, %s5790
          %s5792 = sshll.u32 %s5782, 4
          %s5793 = int_to_ptr.vmem [resolvable:$true] %s5792
          %5798 = dma.vmem_to_hbm [thread:$0]  %s5793, 256, %s5791, %s5779, 128, 128, 8
        $region64: #{tpu_custom_call.1} parent=59 // pred_fallthru
          _
      $region60: #{tpu_custom_call.1} parent=5 // pred_fallthru
        _
      %p5799 = scmp.le.s32.totalorder 2, %s19
      // Predicated region
      $region65: #{tpu_custom_call.1} parent=5 // pred_check
        %p5800 = pneg %p5799
      $region66: #{tpu_custom_call.1} parent=5 // pred_check_branch
        %5802 = sbr.rel (%p5800) target = $region68
      $region67: #{tpu_custom_call.1} parent=5 // pred_region
        %s5803 = ssub.s32 %s19, 2
        // Predicated region
        $region69: #{tpu_custom_call.1} parent=67 // pred_check
          %p5804 = pneg %p263
        $region70: #{tpu_custom_call.1} parent=67 // pred_check_branch
          %5806 = sbr.rel (%p5804) target = $region72
        $region71: #{tpu_custom_call.1} parent=67 // pred_region
          %s5807 = sand.u32 %s248, 1
          %s5808 = scalar_lea.sflag [#allocation3], %s5807
          %s5809 = sand.u32 %s248, 1
          %s5810 = smul.addr %s5809, 16
          %s5811 = scalar_lea.vmem [#allocation2], %s5810
          %5812 = dma.done %s5808, 256
        $region72: #{tpu_custom_call.1} parent=67 // pred_fallthru
          _
      $region68: #{tpu_custom_call.1} parent=5 // pred_fallthru
        _
    $region6: #{tpu_custom_call.1} parent=1 // loop_footer
      %s23 = sadd.s32 1, %s19
    $region7: #{tpu_custom_call.1} parent=1 // loop_footer_branch
      %18 = sbr.rel target = $region3
    $region8: #{tpu_custom_call.1} parent=1 // loop_exit
      _
    %5813 = vsyncpa [#allocation3], 1
    %s5814 = scalar_lea.sflag [#allocation3], 1
    %5815 = vsyncpa %s5814, 1

</llo_original>
